<compile_context>
chip_gen: v6e
topology: v6e:2x2x1
jax: 0.10.0
libtpu: 0.0.40
codegen_flags: <defaults>
</compile_context>

<pallas_src>
import jax
import jax.numpy as jnp
from jax.experimental import pallas as pl
from jax.experimental.pallas import tpu as pltpu

LANES = 128     # lane width: all channel axes are padded to this
K_STEM = 32     # stem im2col contraction 3*3*3=27, padded to 32


# ----------------------------- Pallas kernels ------------------------------

def _stem_c1_kernel(a_ref, ws_ref, ts_ref, w1_ref, t1_ref, y_ref, h_ref):
    """Fused: stem 3x3 conv (as matmul) + BN + ReLU, then 1x1 conv + BN + ReLU
    on the same (tm,128) tile.  BN scales are pre-folded into the weights;
    only the shift is added here.  Two bf16 outputs: y (identity path) and
    h (feeds the grouped conv)."""
    y = jnp.dot(a_ref[...], ws_ref[...], preferred_element_type=jnp.float32)
    y = jnp.maximum(y + ts_ref[...], 0.0)                    # f32 epilogue
    y_ref[...] = y.astype(y_ref.dtype)
    h = jnp.dot(y.astype(jnp.bfloat16), w1_ref[...],
                preferred_element_type=jnp.float32)
    h_ref[...] = jnp.maximum(h + t1_ref[...], 0.0).astype(h_ref.dtype)


def _gconv3x3_kernel(x_ref, w_ref, t_ref, o_ref):
    """Grouped 3x3 conv (block-diagonal packed weight, scale pre-folded) +
    BN shift + ReLU for ONE image.

    x_ref: (Hp, Wp, C) spatially padded bf16 input (batch is a squeezed grid
    axis).  The width (dj) windows are sliced once per dj (3 relayouts total,
    down from 9); the height (di) slices are free major-dim slices and the
    (H,W,C)->(H*W,C) reshape is layout-compatible (W multiple of 8)."""
    Hp, Wp, C = x_ref.shape
    H, W = Hp - 2, Wp - 2
    Cout = o_ref.shape[-1]
    x = x_ref[...]                                           # bf16, loaded once
    acc = jnp.zeros((H * W, Cout), jnp.float32)
    for dj in range(3):                                      # static unroll
        xd = x[:, dj:dj + W, :]                              # (Hp, W, C)
        for di in range(3):
            patch = xd[di:di + H].reshape(H * W, C)          # free slice+reshape
            acc = acc + jnp.dot(patch, w_ref[di * 3 + dj],
                                preferred_element_type=jnp.float32)
    o_ref[...] = jnp.maximum(acc + t_ref[...], 0.0).astype(o_ref.dtype)


def _res_head_kernel(h2_ref, y_ref, w3_ref, t3_ref, wd_ref, td_ref,
                     wh_ref, bh_ref, o_ref):
    """Fused bottleneck tail + head for ONE image:
    BN(h2@W3) + BN(y@Wd) -> add -> ReLU -> global avg pool ->
    (pool @ W_head + b_head), where W_head = fc_w @ out_w folded at init.
    The (HW,128) residual output z never leaves VMEM."""
    z = jnp.dot(h2_ref[...], w3_ref[...], preferred_element_type=jnp.float32)
    z = z + jnp.dot(y_ref[...], wd_ref[...], preferred_element_type=jnp.float32)
    z = jnp.maximum(z + t3_ref[...] + td_ref[...], 0.0)      # (HW,128) f32
    feat = jnp.mean(z, axis=0, keepdims=True)                # (1,128) f32 pool
    # TODO(synk): nn.Dropout(0.3) is identity in inference mode; training-mode
    # random masking (and the un-folded fc/out pair it would require) is omitted.
    logits = jnp.dot(feat.astype(jnp.bfloat16), wh_ref[...],
                     preferred_element_type=jnp.float32) + bh_ref[...]
    o_ref[...] = logits.reshape(1, 1, LANES)


# ------------------------------- wrappers -----------------------------------

def _row_tile(m):
    for t in (256, 128, 64, 32, 16, 8):
        if m % t == 0:
            return t
    return m  # fallback: single full-extent block


def stem_c1(a, ws, ts, w1, t1):
    M, K = a.shape
    C = ws.shape[1]
    tm = _row_tile(M)
    assert M % tm == 0
    return pl.pallas_call(
        _stem_c1_kernel,
        out_shape=(jax.ShapeDtypeStruct((M, C), jnp.bfloat16),
                   jax.ShapeDtypeStruct((M, C), jnp.bfloat16)),
        grid=(M // tm,),
        in_specs=[pl.BlockSpec((tm, K), lambda i: (i, 0)),
                  pl.BlockSpec((K, C), lambda i: (0, 0)),
                  pl.BlockSpec((1, C), lambda i: (0, 0)),
                  pl.BlockSpec((C, C), lambda i: (0, 0)),
                  pl.BlockSpec((1, C), lambda i: (0, 0))],
        out_specs=(pl.BlockSpec((tm, C), lambda i: (i, 0)),
                   pl.BlockSpec((tm, C), lambda i: (i, 0))),
        compiler_params=pltpu.CompilerParams(
            dimension_semantics=("parallel",)),
    )(a, ws, ts, w1, t1)


def gconv3x3(xp, w9, shift, out_dtype=jnp.bfloat16):
    """xp: (N, Hp, Wp, 128) spatially padded bf16; w9: (9,128,128) block-diag."""
    N, Hp, Wp, C = xp.shape
    H, W = Hp - 2, Wp - 2
    Cout = w9.shape[-1]
    return pl.pallas_call(
        _gconv3x3_kernel,
        out_shape=jax.ShapeDtypeStruct((N * H * W, Cout), out_dtype),
        grid=(N,),
        in_specs=[pl.BlockSpec((None, Hp, Wp, C), lambda n: (n, 0, 0, 0)),
                  pl.BlockSpec((9, C, Cout), lambda n: (0, 0, 0)),
                  pl.BlockSpec((1, Cout), lambda n: (0, 0))],
        out_specs=pl.BlockSpec((H * W, Cout), lambda n: (n, 0)),
        compiler_params=pltpu.CompilerParams(
            dimension_semantics=("parallel",)),
    )(xp, w9, shift)


def res_head(h2, y, w3, t3, wd, td, wh, bh, *, n, hw):
    return pl.pallas_call(
        _res_head_kernel,
        out_shape=jax.ShapeDtypeStruct((n, 1, LANES), jnp.float32),
        grid=(n,),
        in_specs=[pl.BlockSpec((hw, LANES), lambda i: (i, 0)),
                  pl.BlockSpec((hw, LANES), lambda i: (i, 0)),
                  pl.BlockSpec((LANES, LANES), lambda i: (0, 0)),
                  pl.BlockSpec((1, LANES), lambda i: (0, 0)),
                  pl.BlockSpec((LANES, LANES), lambda i: (0, 0)),
                  pl.BlockSpec((1, LANES), lambda i: (0, 0)),
                  pl.BlockSpec((LANES, LANES), lambda i: (0, 0)),
                  pl.BlockSpec((1, LANES), lambda i: (0, 0))],
        out_specs=pl.BlockSpec((1, 1, LANES), lambda i: (i, 0, 0)),
        compiler_params=pltpu.CompilerParams(
            dimension_semantics=("parallel",)),
    )(h2, y, w3, t3, wd, td, wh, bh)


# ------------------------------ conv plumbing -------------------------------

def im2col(x, kh, kw, stride=1, pad=0, k_pad=None):
    """Only used for the 3-channel stem (patch matrix is a few KB); K is
    padded to `k_pad` so the producing XLA op stores are not 27-lane masked."""
    N, H, W, C = x.shape
    if pad:
        x = jnp.pad(x, ((0, 0), (pad, pad), (pad, pad), (0, 0)))
    Ho = (H + 2 * pad - kh) // stride + 1
    Wo = (W + 2 * pad - kw) // stride + 1
    cols = []
    for i in range(kh):
        for j in range(kw):
            cols.append(x[:, i:i + stride * Ho:stride,
                          j:j + stride * Wo:stride, :])
    patches = jnp.stack(cols, axis=3)                 # (N, Ho, Wo, kh*kw, C)
    out = patches.reshape(N * Ho * Wo, kh * kw * C)
    if k_pad is not None and k_pad > kh * kw * C:
        out = jnp.pad(out, ((0, 0), (0, k_pad - kh * kw * C)))
    return out


# ------------------------------- parameters ---------------------------------

def _fold_bn(key, c, eps=1e-5):
    gamma = 1.0 + 0.1 * jax.random.normal(key, (c,), jnp.float32)
    beta = jnp.zeros((c,), jnp.float32)
    mean = jnp.zeros((c,), jnp.float32)
    var = jnp.ones((c,), jnp.float32)
    scale = gamma / jnp.sqrt(var + eps)
    shift = beta - mean * scale                        # conv bias=False folded
    return scale, shift


def _pad_lane_vec(v):
    out = jnp.zeros((1, LANES), jnp.float32)
    return out.at[0, :v.shape[0]].set(v)


def _pad_mat(w, rows=LANES, cols=LANES):
    out = jnp.zeros((rows, cols), jnp.float32)
    return out.at[:w.shape[0], :w.shape[1]].set(w)


def init_packed_params(key, in_ch=3, width=32, out_ch=64, num_classes=10,
                       groups=4):
    ks = jax.random.split(key, 12)

    def w(k, shape, s=0.1):
        return jax.random.normal(k, shape, jnp.float32) * s

    stem_w = w(ks[0], (3, 3, in_ch, width))
    c1_w = w(ks[2], (1, 1, width, width))
    c2_w = w(ks[4], (groups, 3, 3, width // groups, width // groups))
    c3_w = w(ks[6], (1, 1, width, out_ch))
    dw_w = w(ks[8], (1, 1, width, out_ch))
    fc_w = w(ks[10], (out_ch, 128))                    # model.fc -> 128
    fc_b = jnp.zeros((128,), jnp.float32)
    out_w = w(ks[11], (128, num_classes))              # self.out
    out_b = jnp.zeros((num_classes,), jnp.float32)

    p = {}
    # stem 3x3: fold BN scale into weight columns (f32), pad K 27->32, Cout->128
    s, t = _fold_bn(ks[1], width)
    p['stem_w'] = _pad_mat(stem_w.reshape(9 * in_ch, width) * s[None, :],
                           rows=K_STEM).astype(jnp.bfloat16)
    p['stem_t'] = _pad_lane_vec(t)

    # 1x1 conv, scale folded, padded to (128, 128)
    s, t = _fold_bn(ks[3], width)
    p['c1_w'] = _pad_mat(c1_w.reshape(width, width) * s[None, :]
                         ).astype(jnp.bfloat16)
    p['c1_t'] = _pad_lane_vec(t)

    # grouped 3x3: scale folded per group, packed block-diagonally (9,128,128)
    s, t = _fold_bn(ks[5], width)
    cg = width // groups
    wd = jnp.zeros((3, 3, LANES, LANES), jnp.float32)
    for g in range(groups):
        blk = c2_w[g] * s[g * cg:(g + 1) * cg][None, None, None, :]
        wd = wd.at[:, :, g * cg:(g + 1) * cg, g * cg:(g + 1) * cg].set(blk)
    p['c2_w'] = wd.reshape(9, LANES, LANES).astype(jnp.bfloat16)
    p['c2_t'] = _pad_lane_vec(t)

    s, t = _fold_bn(ks[7], out_ch)
    p['c3_w'] = _pad_mat(c3_w.reshape(width, out_ch) * s[None, :]
                         ).astype(jnp.bfloat16)
    p['c3_t'] = _pad_lane_vec(t)

    s, t = _fold_bn(ks[9], out_ch)
    p['dw_w'] = _pad_mat(dw_w.reshape(width, out_ch) * s[None, :]
                         ).astype(jnp.bfloat16)
    p['dw_t'] = _pad_lane_vec(t)

    # head fold (inference): Dropout(0.3) is identity and there is no
    # nonlinearity between fc and out, so fold them in f32 at init.
    w_head = fc_w @ out_w                              # (out_ch, num_classes)
    b_head = fc_b @ out_w + out_b                      # (num_classes,)
    p['head_w'] = _pad_mat(w_head).astype(jnp.bfloat16)
    p['head_b'] = _pad_lane_vec(b_head)
    return p


# --------------------------------- forward ----------------------------------

def resnext_forward(params, image_nchw, num_classes):
    # PyTorch NCHW -> NHWC channels-last for the kernels
    x = jnp.transpose(image_nchw, (0, 2, 3, 1))
    N, H, W, _ = x.shape

    # 1) stem 3x3 conv+BN+ReLU fused with bottleneck 1x1 conv+BN+ReLU
    a = im2col(x.astype(jnp.bfloat16), 3, 3, stride=1, pad=1, k_pad=K_STEM)
    y, h = stem_c1(a, params['stem_w'], params['stem_t'],
                   params['c1_w'], params['c1_t'])            # bf16, bf16

    # 2) grouped (cardinality=4) 3x3 conv + BN + ReLU, bf16 padded input
    hp = jnp.pad(h.reshape(N, H, W, LANES),
                 ((0, 0), (1, 1), (1, 1), (0, 0)))
    h2 = gconv3x3(hp, params['c2_w'], params['c2_t'])         # (M,128) bf16

    # 3) 1x1 conv+BN (+) downsample 1x1 conv+BN -> add -> ReLU ->
    #    global avg pool -> folded fc/out head (one kernel, grid over batch)
    logits_p = res_head(h2, y, params['c3_w'], params['c3_t'],
                        params['dw_w'], params['dw_t'],
                        params['head_w'], params['head_b'],
                        n=N, hw=H * W)                        # (N,1,128) f32
    return logits_p.reshape(N, LANES)[:, :num_classes]


if __name__ == "__main__":
    NUM_CLASSES = 10
    key = jax.random.PRNGKey(0)
    pkey, xkey = jax.random.split(key)
    params = init_packed_params(pkey, in_ch=3, width=32, out_ch=64,
                                num_classes=NUM_CLASSES, groups=4)
    image = jax.random.normal(xkey, (2, 3, 16, 16), jnp.float32)  # NCHW input

    logits = jax.jit(lambda im: resnext_forward(params, im, NUM_CLASSES))(image)
    jax.block_until_ready(logits)
    assert logits.shape == (2, NUM_CLASSES)
    assert logits.dtype == jnp.float32
    print("KERNEL_OK")
</pallas_src>

<mosaic_0001>
module attributes {stable_mosaic.version = 11 : i64} {
  func.func @_stem_c1_kernel(%arg0: i32, %arg1: memref<256x32xbf16, #tpu.memory_space<vmem>>, %arg2: memref<32x128xbf16, #tpu.memory_space<vmem>>, %arg3: memref<1x128xf32, #tpu.memory_space<vmem>>, %arg4: memref<128x128xbf16, #tpu.memory_space<vmem>>, %arg5: memref<1x128xf32, #tpu.memory_space<vmem>>, %arg6: memref<256x128xbf16, #tpu.memory_space<vmem>>, %arg7: memref<256x128xbf16, #tpu.memory_space<vmem>>) attributes {dimension_semantics = [#tpu.dimension_semantics<parallel>], iteration_bounds = array<i64: 2>, scalar_prefetch = 0 : i64, scratch_operands = 0 : i64, tpu.core_type = #tpu.core_type<tc>, window_params = [{transform_indices = @transform_0, window_bounds = array<i64: 256, 32>}, {pipeline_mode = #tpu.pipeline_mode<synchronous>, transform_indices = @transform_1, window_bounds = array<i64: 32, 128>}, {pipeline_mode = #tpu.pipeline_mode<synchronous>, transform_indices = @transform_2, window_bounds = array<i64: 1, 128>}, {pipeline_mode = #tpu.pipeline_mode<synchronous>, transform_indices = @transform_3, window_bounds = array<i64: 128, 128>}, {pipeline_mode = #tpu.pipeline_mode<synchronous>, transform_indices = @transform_4, window_bounds = array<i64: 1, 128>}, {transform_indices = @transform_5, window_bounds = array<i64: 256, 128>}, {transform_indices = @transform_6, window_bounds = array<i64: 256, 128>}]} {
    %c0 = arith.constant 0 : index
    %c0_0 = arith.constant 0 : index
    %0 = vector.load %arg1[%c0, %c0_0] : memref<256x32xbf16, #tpu.memory_space<vmem>>, vector<256x32xbf16>
    %c0_1 = arith.constant 0 : index
    %c0_2 = arith.constant 0 : index
    %1 = vector.load %arg2[%c0_1, %c0_2] : memref<32x128xbf16, #tpu.memory_space<vmem>>, vector<32x128xbf16>
    %cst = arith.constant dense<0.000000e+00> : vector<256x128xf32>
    %2 = tpu.matmul %0, %1, %cst {dimension_numbers = #tpu.dot_dimension_numbers<[1], [0], [0], [1], [0, 0, 1, 1], [], []>} : vector<256x32xbf16>, vector<32x128xbf16>, vector<256x128xf32> -> vector<256x128xf32>
    %c0_3 = arith.constant 0 : index
    %c0_4 = arith.constant 0 : index
    %3 = vector.load %arg3[%c0_3, %c0_4] : memref<1x128xf32, #tpu.memory_space<vmem>>, vector<1x128xf32>
    %4 = vector.broadcast %3 : vector<1x128xf32> to vector<256x128xf32>
    %5 = arith.addf %2, %4 : vector<256x128xf32>
    %cst_5 = arith.constant 0.000000e+00 : f32
    %6 = vector.broadcast %cst_5 : f32 to vector<256x128xf32>
    %7 = arith.maximumf %5, %6 : vector<256x128xf32>
    %8 = arith.truncf %7 : vector<256x128xf32> to vector<256x128xbf16>
    %c0_6 = arith.constant 0 : index
    %c0_7 = arith.constant 0 : index
    %9 = vector.load %arg6[%c0_6, %c0_7] : memref<256x128xbf16, #tpu.memory_space<vmem>>, vector<256x128xbf16>
    tpu.vector_store %arg6[%c0_6, %c0_7], %8 {strides = array<i32>} : memref<256x128xbf16, #tpu.memory_space<vmem>>, vector<256x128xbf16>,
    %10 = arith.truncf %7 : vector<256x128xf32> to vector<256x128xbf16>
    %c0_8 = arith.constant 0 : index
    %c0_9 = arith.constant 0 : index
    %11 = vector.load %arg4[%c0_8, %c0_9] : memref<128x128xbf16, #tpu.memory_space<vmem>>, vector<128x128xbf16>
    %cst_10 = arith.constant dense<0.000000e+00> : vector<256x128xf32>
    %12 = tpu.matmul %10, %11, %cst_10 {dimension_numbers = #tpu.dot_dimension_numbers<[1], [0], [0], [1], [0, 0, 1, 1], [], []>} : vector<256x128xbf16>, vector<128x128xbf16>, vector<256x128xf32> -> vector<256x128xf32>
    %c0_11 = arith.constant 0 : index
    %c0_12 = arith.constant 0 : index
    %13 = vector.load %arg5[%c0_11, %c0_12] : memref<1x128xf32, #tpu.memory_space<vmem>>, vector<1x128xf32>
    %14 = vector.broadcast %13 : vector<1x128xf32> to vector<256x128xf32>
    %15 = arith.addf %12, %14 : vector<256x128xf32>
    %cst_13 = arith.constant 0.000000e+00 : f32
    %16 = vector.broadcast %cst_13 : f32 to vector<256x128xf32>
    %17 = arith.maximumf %15, %16 : vector<256x128xf32>
    %18 = arith.truncf %17 : vector<256x128xf32> to vector<256x128xbf16>
    %c0_14 = arith.constant 0 : index
    %c0_15 = arith.constant 0 : index
    %19 = vector.load %arg7[%c0_14, %c0_15] : memref<256x128xbf16, #tpu.memory_space<vmem>>, vector<256x128xbf16>
    tpu.vector_store %arg7[%c0_14, %c0_15], %18 {strides = array<i32>} : memref<256x128xbf16, #tpu.memory_space<vmem>>, vector<256x128xbf16>,
    return
  }
  func.func @transform_0(%arg0: i32) -> (i32, i32) {
    %c0_i32 = arith.constant 0 : i32
    %c0_i32_0 = arith.constant 0 : i32
    return %arg0, %c0_i32 : i32, i32
  }
  func.func @transform_1(%arg0: i32) -> (i32, i32) {
    %c0_i32 = arith.constant 0 : i32
    %c0_i32_0 = arith.constant 0 : i32
    %c0_i32_1 = arith.constant 0 : i32
    return %c0_i32, %c0_i32_0 : i32, i32
  }
  func.func @transform_2(%arg0: i32) -> (i32, i32) {
    %c0_i32 = arith.constant 0 : i32
    %c0_i32_0 = arith.constant 0 : i32
    %c0_i32_1 = arith.constant 0 : i32
    return %c0_i32, %c0_i32_0 : i32, i32
  }
  func.func @transform_3(%arg0: i32) -> (i32, i32) {
    %c0_i32 = arith.constant 0 : i32
    %c0_i32_0 = arith.constant 0 : i32
    %c0_i32_1 = arith.constant 0 : i32
    return %c0_i32, %c0_i32_0 : i32, i32
  }
  func.func @transform_4(%arg0: i32) -> (i32, i32) {
    %c0_i32 = arith.constant 0 : i32
    %c0_i32_0 = arith.constant 0 : i32
    %c0_i32_1 = arith.constant 0 : i32
    return %c0_i32, %c0_i32_0 : i32, i32
  }
  func.func @transform_5(%arg0: i32) -> (i32, i32) {
    %c0_i32 = arith.constant 0 : i32
    %c0_i32_0 = arith.constant 0 : i32
    return %arg0, %c0_i32 : i32, i32
  }
  func.func @transform_6(%arg0: i32) -> (i32, i32) {
    %c0_i32 = arith.constant 0 : i32
    %c0_i32_0 = arith.constant 0 : i32
    return %arg0, %c0_i32 : i32, i32
  }
}

module attributes {stable_mosaic.version = 11 : i64} {
  func.func @_gconv3x3_kernel(%arg0: i32, %arg1: memref<1x18x18x128xbf16, #tpu.memory_space<vmem>>, %arg2: memref<9x128x128xbf16, #tpu.memory_space<vmem>>, %arg3: memref<1x128xf32, #tpu.memory_space<vmem>>, %arg4: memref<256x128xbf16, #tpu.memory_space<vmem>>) attributes {dimension_semantics = [#tpu.dimension_semantics<parallel>], iteration_bounds = array<i64: 2>, scalar_prefetch = 0 : i64, scratch_operands = 0 : i64, tpu.core_type = #tpu.core_type<tc>, window_params = [{transform_indices = @transform_0, window_bounds = array<i64: 1, 18, 18, 128>}, {pipeline_mode = #tpu.pipeline_mode<synchronous>, transform_indices = @transform_1, window_bounds = array<i64: 9, 128, 128>}, {pipeline_mode = #tpu.pipeline_mode<synchronous>, transform_indices = @transform_2, window_bounds = array<i64: 1, 128>}, {transform_indices = @transform_3, window_bounds = array<i64: 256, 128>}]} {
    %c0 = arith.constant 0 : index
    %c0_0 = arith.constant 0 : index
    %c0_1 = arith.constant 0 : index
    %c0_2 = arith.constant 0 : index
    %0 = vector.load %arg1[%c0, %c0_0, %c0_1, %c0_2] : memref<1x18x18x128xbf16, #tpu.memory_space<vmem>>, vector<1x18x18x128xbf16>
    %1 = vector.shape_cast %0 : vector<1x18x18x128xbf16> to vector<18x18x128xbf16>
    %cst = arith.constant 0.000000e+00 : f32
    %2 = vector.broadcast %cst : f32 to vector<256x128xf32>
    %3 = vector.extract_strided_slice %1 {offsets = [0, 0, 0], sizes = [18, 16, 128], strides = [1, 1, 1]} : vector<18x18x128xbf16> to vector<18x16x128xbf16>
    %4 = vector.extract_strided_slice %3 {offsets = [0, 0, 0], sizes = [16, 16, 128], strides = [1, 1, 1]} : vector<18x16x128xbf16> to vector<16x16x128xbf16>
    %5 = vector.shape_cast %4 : vector<16x16x128xbf16> to vector<256x128xbf16>
    %c0_3 = arith.constant 0 : index
    %c0_4 = arith.constant 0 : index
    %c0_5 = arith.constant 0 : index
    %6 = vector.load %arg2[%c0_3, %c0_4, %c0_5] : memref<9x128x128xbf16, #tpu.memory_space<vmem>>, vector<1x128x128xbf16>
    %7 = vector.shape_cast %6 : vector<1x128x128xbf16> to vector<128x128xbf16>
    %cst_6 = arith.constant dense<0.000000e+00> : vector<256x128xf32>
    %8 = tpu.matmul %5, %7, %cst_6 {dimension_numbers = #tpu.dot_dimension_numbers<[1], [0], [0], [1], [0, 0, 1, 1], [], []>} : vector<256x128xbf16>, vector<128x128xbf16>, vector<256x128xf32> -> vector<256x128xf32>
    %9 = arith.addf %2, %8 : vector<256x128xf32>
    %10 = vector.extract_strided_slice %3 {offsets = [1, 0, 0], sizes = [16, 16, 128], strides = [1, 1, 1]} : vector<18x16x128xbf16> to vector<16x16x128xbf16>
    %11 = vector.shape_cast %10 : vector<16x16x128xbf16> to vector<256x128xbf16>
    %c3 = arith.constant 3 : index
    %c0_7 = arith.constant 0 : index
    %c0_8 = arith.constant 0 : index
    %12 = vector.load %arg2[%c3, %c0_7, %c0_8] : memref<9x128x128xbf16, #tpu.memory_space<vmem>>, vector<1x128x128xbf16>
    %13 = vector.shape_cast %12 : vector<1x128x128xbf16> to vector<128x128xbf16>
    %cst_9 = arith.constant dense<0.000000e+00> : vector<256x128xf32>
    %14 = tpu.matmul %11, %13, %cst_9 {dimension_numbers = #tpu.dot_dimension_numbers<[1], [0], [0], [1], [0, 0, 1, 1], [], []>} : vector<256x128xbf16>, vector<128x128xbf16>, vector<256x128xf32> -> vector<256x128xf32>
    %15 = arith.addf %9, %14 : vector<256x128xf32>
    %16 = vector.extract_strided_slice %3 {offsets = [2, 0, 0], sizes = [16, 16, 128], strides = [1, 1, 1]} : vector<18x16x128xbf16> to vector<16x16x128xbf16>
    %17 = vector.shape_cast %16 : vector<16x16x128xbf16> to vector<256x128xbf16>
    %c6 = arith.constant 6 : index
    %c0_10 = arith.constant 0 : index
    %c0_11 = arith.constant 0 : index
    %18 = vector.load %arg2[%c6, %c0_10, %c0_11] : memref<9x128x128xbf16, #tpu.memory_space<vmem>>, vector<1x128x128xbf16>
    %19 = vector.shape_cast %18 : vector<1x128x128xbf16> to vector<128x128xbf16>
    %cst_12 = arith.constant dense<0.000000e+00> : vector<256x128xf32>
    %20 = tpu.matmul %17, %19, %cst_12 {dimension_numbers = #tpu.dot_dimension_numbers<[1], [0], [0], [1], [0, 0, 1, 1], [], []>} : vector<256x128xbf16>, vector<128x128xbf16>, vector<256x128xf32> -> vector<256x128xf32>
    %21 = arith.addf %15, %20 : vector<256x128xf32>
    %22 = vector.extract_strided_slice %1 {offsets = [0, 1, 0], sizes = [18, 16, 128], strides = [1, 1, 1]} : vector<18x18x128xbf16> to vector<18x16x128xbf16>
    %23 = vector.extract_strided_slice %22 {offsets = [0, 0, 0], sizes = [16, 16, 128], strides = [1, 1, 1]} : vector<18x16x128xbf16> to vector<16x16x128xbf16>
    %24 = vector.shape_cast %23 : vector<16x16x128xbf16> to vector<256x128xbf16>
    %c1 = arith.constant 1 : index
    %c0_13 = arith.constant 0 : index
    %c0_14 = arith.constant 0 : index
    %25 = vector.load %arg2[%c1, %c0_13, %c0_14] : memref<9x128x128xbf16, #tpu.memory_space<vmem>>, vector<1x128x128xbf16>
    %26 = vector.shape_cast %25 : vector<1x128x128xbf16> to vector<128x128xbf16>
    %cst_15 = arith.constant dense<0.000000e+00> : vector<256x128xf32>
    %27 = tpu.matmul %24, %26, %cst_15 {dimension_numbers = #tpu.dot_dimension_numbers<[1], [0], [0], [1], [0, 0, 1, 1], [], []>} : vector<256x128xbf16>, vector<128x128xbf16>, vector<256x128xf32> -> vector<256x128xf32>
    %28 = arith.addf %21, %27 : vector<256x128xf32>
    %29 = vector.extract_strided_slice %22 {offsets = [1, 0, 0], sizes = [16, 16, 128], strides = [1, 1, 1]} : vector<18x16x128xbf16> to vector<16x16x128xbf16>
    %30 = vector.shape_cast %29 : vector<16x16x128xbf16> to vector<256x128xbf16>
    %c4 = arith.constant 4 : index
    %c0_16 = arith.constant 0 : index
    %c0_17 = arith.constant 0 : index
    %31 = vector.load %arg2[%c4, %c0_16, %c0_17] : memref<9x128x128xbf16, #tpu.memory_space<vmem>>, vector<1x128x128xbf16>
    %32 = vector.shape_cast %31 : vector<1x128x128xbf16> to vector<128x128xbf16>
    %cst_18 = arith.constant dense<0.000000e+00> : vector<256x128xf32>
    %33 = tpu.matmul %30, %32, %cst_18 {dimension_numbers = #tpu.dot_dimension_numbers<[1], [0], [0], [1], [0, 0, 1, 1], [], []>} : vector<256x128xbf16>, vector<128x128xbf16>, vector<256x128xf32> -> vector<256x128xf32>
    %34 = arith.addf %28, %33 : vector<256x128xf32>
    %35 = vector.extract_strided_slice %22 {offsets = [2, 0, 0], sizes = [16, 16, 128], strides = [1, 1, 1]} : vector<18x16x128xbf16> to vector<16x16x128xbf16>
    %36 = vector.shape_cast %35 : vector<16x16x128xbf16> to vector<256x128xbf16>
    %c7 = arith.constant 7 : index
    %c0_19 = arith.constant 0 : index
    %c0_20 = arith.constant 0 : index
    %37 = vector.load %arg2[%c7, %c0_19, %c0_20] : memref<9x128x128xbf16, #tpu.memory_space<vmem>>, vector<1x128x128xbf16>
    %38 = vector.shape_cast %37 : vector<1x128x128xbf16> to vector<128x128xbf16>
    %cst_21 = arith.constant dense<0.000000e+00> : vector<256x128xf32>
    %39 = tpu.matmul %36, %38, %cst_21 {dimension_numbers = #tpu.dot_dimension_numbers<[1], [0], [0], [1], [0, 0, 1, 1], [], []>} : vector<256x128xbf16>, vector<128x128xbf16>, vector<256x128xf32> -> vector<256x128xf32>
    %40 = arith.addf %34, %39 : vector<256x128xf32>
    %41 = vector.extract_strided_slice %1 {offsets = [0, 2, 0], sizes = [18, 16, 128], strides = [1, 1, 1]} : vector<18x18x128xbf16> to vector<18x16x128xbf16>
    %42 = vector.extract_strided_slice %41 {offsets = [0, 0, 0], sizes = [16, 16, 128], strides = [1, 1, 1]} : vector<18x16x128xbf16> to vector<16x16x128xbf16>
    %43 = vector.shape_cast %42 : vector<16x16x128xbf16> to vector<256x128xbf16>
    %c2 = arith.constant 2 : index
    %c0_22 = arith.constant 0 : index
    %c0_23 = arith.constant 0 : index
    %44 = vector.load %arg2[%c2, %c0_22, %c0_23] : memref<9x128x128xbf16, #tpu.memory_space<vmem>>, vector<1x128x128xbf16>
    %45 = vector.shape_cast %44 : vector<1x128x128xbf16> to vector<128x128xbf16>
    %cst_24 = arith.constant dense<0.000000e+00> : vector<256x128xf32>
    %46 = tpu.matmul %43, %45, %cst_24 {dimension_numbers = #tpu.dot_dimension_numbers<[1], [0], [0], [1], [0, 0, 1, 1], [], []>} : vector<256x128xbf16>, vector<128x128xbf16>, vector<256x128xf32> -> vector<256x128xf32>
    %47 = arith.addf %40, %46 : vector<256x128xf32>
    %48 = vector.extract_strided_slice %41 {offsets = [1, 0, 0], sizes = [16, 16, 128], strides = [1, 1, 1]} : vector<18x16x128xbf16> to vector<16x16x128xbf16>
    %49 = vector.shape_cast %48 : vector<16x16x128xbf16> to vector<256x128xbf16>
    %c5 = arith.constant 5 : index
    %c0_25 = arith.constant 0 : index
    %c0_26 = arith.constant 0 : index
    %50 = vector.load %arg2[%c5, %c0_25, %c0_26] : memref<9x128x128xbf16, #tpu.memory_space<vmem>>, vector<1x128x128xbf16>
    %51 = vector.shape_cast %50 : vector<1x128x128xbf16> to vector<128x128xbf16>
    %cst_27 = arith.constant dense<0.000000e+00> : vector<256x128xf32>
    %52 = tpu.matmul %49, %51, %cst_27 {dimension_numbers = #tpu.dot_dimension_numbers<[1], [0], [0], [1], [0, 0, 1, 1], [], []>} : vector<256x128xbf16>, vector<128x128xbf16>, vector<256x128xf32> -> vector<256x128xf32>
    %53 = arith.addf %47, %52 : vector<256x128xf32>
    %54 = vector.extract_strided_slice %41 {offsets = [2, 0, 0], sizes = [16, 16, 128], strides = [1, 1, 1]} : vector<18x16x128xbf16> to vector<16x16x128xbf16>
    %55 = vector.shape_cast %54 : vector<16x16x128xbf16> to vector<256x128xbf16>
    %c8 = arith.constant 8 : index
    %c0_28 = arith.constant 0 : index
    %c0_29 = arith.constant 0 : index
    %56 = vector.load %arg2[%c8, %c0_28, %c0_29] : memref<9x128x128xbf16, #tpu.memory_space<vmem>>, vector<1x128x128xbf16>
    %57 = vector.shape_cast %56 : vector<1x128x128xbf16> to vector<128x128xbf16>
    %cst_30 = arith.constant dense<0.000000e+00> : vector<256x128xf32>
    %58 = tpu.matmul %55, %57, %cst_30 {dimension_numbers = #tpu.dot_dimension_numbers<[1], [0], [0], [1], [0, 0, 1, 1], [], []>} : vector<256x128xbf16>, vector<128x128xbf16>, vector<256x128xf32> -> vector<256x128xf32>
    %59 = arith.addf %53, %58 : vector<256x128xf32>
    %c0_31 = arith.constant 0 : index
    %c0_32 = arith.constant 0 : index
    %60 = vector.load %arg3[%c0_31, %c0_32] : memref<1x128xf32, #tpu.memory_space<vmem>>, vector<1x128xf32>
    %61 = vector.broadcast %60 : vector<1x128xf32> to vector<256x128xf32>
    %62 = arith.addf %59, %61 : vector<256x128xf32>
    %cst_33 = arith.constant 0.000000e+00 : f32
    %63 = vector.broadcast %cst_33 : f32 to vector<256x128xf32>
    %64 = arith.maximumf %62, %63 : vector<256x128xf32>
    %65 = arith.truncf %64 : vector<256x128xf32> to vector<256x128xbf16>
    %c0_34 = arith.constant 0 : index
    %c0_35 = arith.constant 0 : index
    %66 = vector.load %arg4[%c0_34, %c0_35] : memref<256x128xbf16, #tpu.memory_space<vmem>>, vector<256x128xbf16>
    tpu.vector_store %arg4[%c0_34, %c0_35], %65 {strides = array<i32>} : memref<256x128xbf16, #tpu.memory_space<vmem>>, vector<256x128xbf16>,
    return
  }
  func.func @transform_0(%arg0: i32) -> (i32, i32, i32, i32) {
    %c0_i32 = arith.constant 0 : i32
    %c0_i32_0 = arith.constant 0 : i32
    %c0_i32_1 = arith.constant 0 : i32
    %c0_i32_2 = arith.constant 0 : i32
    return %arg0, %c0_i32, %c0_i32_0, %c0_i32_1 : i32, i32, i32, i32
  }
  func.func @transform_1(%arg0: i32) -> (i32, i32, i32) {
    %c0_i32 = arith.constant 0 : i32
    %c0_i32_0 = arith.constant 0 : i32
    %c0_i32_1 = arith.constant 0 : i32
    %c0_i32_2 = arith.constant 0 : i32
    return %c0_i32, %c0_i32_0, %c0_i32_1 : i32, i32, i32
  }
  func.func @transform_2(%arg0: i32) -> (i32, i32) {
    %c0_i32 = arith.constant 0 : i32
    %c0_i32_0 = arith.constant 0 : i32
    %c0_i32_1 = arith.constant 0 : i32
    return %c0_i32, %c0_i32_0 : i32, i32
  }
  func.func @transform_3(%arg0: i32) -> (i32, i32) {
    %c0_i32 = arith.constant 0 : i32
    %c0_i32_0 = arith.constant 0 : i32
    return %arg0, %c0_i32 : i32, i32
  }
}

module attributes {stable_mosaic.version = 11 : i64} {
  func.func @_res_head_kernel(%arg0: i32, %arg1: memref<256x128xbf16, #tpu.memory_space<vmem>>, %arg2: memref<256x128xbf16, #tpu.memory_space<vmem>>, %arg3: memref<128x128xbf16, #tpu.memory_space<vmem>>, %arg4: memref<1x128xf32, #tpu.memory_space<vmem>>, %arg5: memref<128x128xbf16, #tpu.memory_space<vmem>>, %arg6: memref<1x128xf32, #tpu.memory_space<vmem>>, %arg7: memref<128x128xbf16, #tpu.memory_space<vmem>>, %arg8: memref<1x128xf32, #tpu.memory_space<vmem>>, %arg9: memref<1x1x128xf32, #tpu.memory_space<vmem>>) attributes {dimension_semantics = [#tpu.dimension_semantics<parallel>], iteration_bounds = array<i64: 2>, scalar_prefetch = 0 : i64, scratch_operands = 0 : i64, tpu.core_type = #tpu.core_type<tc>, window_params = [{transform_indices = @transform_0, window_bounds = array<i64: 256, 128>}, {transform_indices = @transform_1, window_bounds = array<i64: 256, 128>}, {pipeline_mode = #tpu.pipeline_mode<synchronous>, transform_indices = @transform_2, window_bounds = array<i64: 128, 128>}, {pipeline_mode = #tpu.pipeline_mode<synchronous>, transform_indices = @transform_3, window_bounds = array<i64: 1, 128>}, {pipeline_mode = #tpu.pipeline_mode<synchronous>, transform_indices = @transform_4, window_bounds = array<i64: 128, 128>}, {pipeline_mode = #tpu.pipeline_mode<synchronous>, transform_indices = @transform_5, window_bounds = array<i64: 1, 128>}, {pipeline_mode = #tpu.pipeline_mode<synchronous>, transform_indices = @transform_6, window_bounds = array<i64: 128, 128>}, {pipeline_mode = #tpu.pipeline_mode<synchronous>, transform_indices = @transform_7, window_bounds = array<i64: 1, 128>}, {transform_indices = @transform_8, window_bounds = array<i64: 1, 1, 128>}]} {
    %c0 = arith.constant 0 : index
    %c0_0 = arith.constant 0 : index
    %0 = vector.load %arg1[%c0, %c0_0] : memref<256x128xbf16, #tpu.memory_space<vmem>>, vector<256x128xbf16>
    %c0_1 = arith.constant 0 : index
    %c0_2 = arith.constant 0 : index
    %1 = vector.load %arg3[%c0_1, %c0_2] : memref<128x128xbf16, #tpu.memory_space<vmem>>, vector<128x128xbf16>
    %cst = arith.constant dense<0.000000e+00> : vector<256x128xf32>
    %2 = tpu.matmul %0, %1, %cst {dimension_numbers = #tpu.dot_dimension_numbers<[1], [0], [0], [1], [0, 0, 1, 1], [], []>} : vector<256x128xbf16>, vector<128x128xbf16>, vector<256x128xf32> -> vector<256x128xf32>
    %c0_3 = arith.constant 0 : index
    %c0_4 = arith.constant 0 : index
    %3 = vector.load %arg2[%c0_3, %c0_4] : memref<256x128xbf16, #tpu.memory_space<vmem>>, vector<256x128xbf16>
    %c0_5 = arith.constant 0 : index
    %c0_6 = arith.constant 0 : index
    %4 = vector.load %arg5[%c0_5, %c0_6] : memref<128x128xbf16, #tpu.memory_space<vmem>>, vector<128x128xbf16>
    %cst_7 = arith.constant dense<0.000000e+00> : vector<256x128xf32>
    %5 = tpu.matmul %3, %4, %cst_7 {dimension_numbers = #tpu.dot_dimension_numbers<[1], [0], [0], [1], [0, 0, 1, 1], [], []>} : vector<256x128xbf16>, vector<128x128xbf16>, vector<256x128xf32> -> vector<256x128xf32>
    %6 = arith.addf %2, %5 : vector<256x128xf32>
    %c0_8 = arith.constant 0 : index
    %c0_9 = arith.constant 0 : index
    %7 = vector.load %arg4[%c0_8, %c0_9] : memref<1x128xf32, #tpu.memory_space<vmem>>, vector<1x128xf32>
    %8 = vector.broadcast %7 : vector<1x128xf32> to vector<256x128xf32>
    %9 = arith.addf %6, %8 : vector<256x128xf32>
    %c0_10 = arith.constant 0 : index
    %c0_11 = arith.constant 0 : index
    %10 = vector.load %arg6[%c0_10, %c0_11] : memref<1x128xf32, #tpu.memory_space<vmem>>, vector<1x128xf32>
    %11 = vector.broadcast %10 : vector<1x128xf32> to vector<256x128xf32>
    %12 = arith.addf %9, %11 : vector<256x128xf32>
    %cst_12 = arith.constant 0.000000e+00 : f32
    %13 = vector.broadcast %cst_12 : f32 to vector<256x128xf32>
    %14 = arith.maximumf %12, %13 : vector<256x128xf32>
    %cst_13 = arith.constant dense<0.000000e+00> : vector<128xf32>
    %15 = vector.multi_reduction <add>, %14, %cst_13 [0] : vector<256x128xf32> to vector<128xf32>
    %16 = vector.shape_cast %15 : vector<128xf32> to vector<1x128xf32>
    %cst_14 = arith.constant 2.560000e+02 : f32
    %17 = vector.broadcast %cst_14 : f32 to vector<1x128xf32>
    %18 = arith.divf %16, %17 : vector<1x128xf32>
    %19 = arith.truncf %18 : vector<1x128xf32> to vector<1x128xbf16>
    %c0_15 = arith.constant 0 : index
    %c0_16 = arith.constant 0 : index
    %20 = vector.load %arg7[%c0_15, %c0_16] : memref<128x128xbf16, #tpu.memory_space<vmem>>, vector<128x128xbf16>
    %cst_17 = arith.constant dense<0.000000e+00> : vector<1x128xf32>
    %21 = tpu.matmul %19, %20, %cst_17 {dimension_numbers = #tpu.dot_dimension_numbers<[1], [0], [0], [1], [0, 0, 1, 1], [], []>} : vector<1x128xbf16>, vector<128x128xbf16>, vector<1x128xf32> -> vector<1x128xf32>
    %c0_18 = arith.constant 0 : index
    %c0_19 = arith.constant 0 : index
    %22 = vector.load %arg8[%c0_18, %c0_19] : memref<1x128xf32, #tpu.memory_space<vmem>>, vector<1x128xf32>
    %23 = arith.addf %21, %22 : vector<1x128xf32>
    %24 = vector.shape_cast %23 : vector<1x128xf32> to vector<1x1x128xf32>
    %c0_20 = arith.constant 0 : index
    %c0_21 = arith.constant 0 : index
    %c0_22 = arith.constant 0 : index
    %25 = vector.load %arg9[%c0_20, %c0_21, %c0_22] : memref<1x1x128xf32, #tpu.memory_space<vmem>>, vector<1x1x128xf32>
    tpu.vector_store %arg9[%c0_20, %c0_21, %c0_22], %24 {strides = array<i32>} : memref<1x1x128xf32, #tpu.memory_space<vmem>>, vector<1x1x128xf32>,
    return
  }
  func.func @transform_0(%arg0: i32) -> (i32, i32) {
    %c0_i32 = arith.constant 0 : i32
    %c0_i32_0 = arith.constant 0 : i32
    return %arg0, %c0_i32 : i32, i32
  }
  func.func @transform_1(%arg0: i32) -> (i32, i32) {
    %c0_i32 = arith.constant 0 : i32
    %c0_i32_0 = arith.constant 0 : i32
    return %arg0, %c0_i32 : i32, i32
  }
  func.func @transform_2(%arg0: i32) -> (i32, i32) {
    %c0_i32 = arith.constant 0 : i32
    %c0_i32_0 = arith.constant 0 : i32
    %c0_i32_1 = arith.constant 0 : i32
    return %c0_i32, %c0_i32_0 : i32, i32
  }
  func.func @transform_3(%arg0: i32) -> (i32, i32) {
    %c0_i32 = arith.constant 0 : i32
    %c0_i32_0 = arith.constant 0 : i32
    %c0_i32_1 = arith.constant 0 : i32
    return %c0_i32, %c0_i32_0 : i32, i32
  }
  func.func @transform_4(%arg0: i32) -> (i32, i32) {
    %c0_i32 = arith.constant 0 : i32
    %c0_i32_0 = arith.constant 0 : i32
    %c0_i32_1 = arith.constant 0 : i32
    return %c0_i32, %c0_i32_0 : i32, i32
  }
  func.func @transform_5(%arg0: i32) -> (i32, i32) {
    %c0_i32 = arith.constant 0 : i32
    %c0_i32_0 = arith.constant 0 : i32
    %c0_i32_1 = arith.constant 0 : i32
    return %c0_i32, %c0_i32_0 : i32, i32
  }
  func.func @transform_6(%arg0: i32) -> (i32, i32) {
    %c0_i32 = arith.constant 0 : i32
    %c0_i32_0 = arith.constant 0 : i32
    %c0_i32_1 = arith.constant 0 : i32
    return %c0_i32, %c0_i32_0 : i32, i32
  }
  func.func @transform_7(%arg0: i32) -> (i32, i32) {
    %c0_i32 = arith.constant 0 : i32
    %c0_i32_0 = arith.constant 0 : i32
    %c0_i32_1 = arith.constant 0 : i32
    return %c0_i32, %c0_i32_0 : i32, i32
  }
  func.func @transform_8(%arg0: i32) -> (i32, i32, i32) {
    %c0_i32 = arith.constant 0 : i32
    %c0_i32_0 = arith.constant 0 : i32
    %c0_i32_1 = arith.constant 0 : i32
    return %arg0, %c0_i32, %c0_i32_0 : i32, i32, i32
  }
}

</mosaic_0001>

<llo_original>
// kernel: _lambda_.3
$region0: #{_lambda_.3}
  #allocation0 [shape = 'u32[]', space=smem, size = 0x4, offset = 0x4, fixed_abs, tag = 'smem constant byte address 0x4 - core index']
  #allocation1 [shape = 'u32[144,128]{1,0:T(1,128)}', space=vmem, size = 0x12000, scoped, tag = 'internal scratch']
  %s0 = inlined_call_operand.vmem [shape: bf16[512,32], index: 0, kind: input, shape index: {}]
  %s1 = inlined_call_operand.vmem [shape: bf16[32,128], index: 1, kind: input, shape index: {}]
  %s2 = inlined_call_operand.vmem [shape: f32[1,128], index: 2, kind: input, shape index: {}, may-alias: {2,4}]
  %s3 = inlined_call_operand.vmem [shape: bf16[128,128], index: 3, kind: input, shape index: {}]
  %s4 = inlined_call_operand.vmem [shape: f32[1,128], index: 4, kind: input, shape index: {}, may-alias: {2,4}]
  %s5 = inlined_call_operand.vmem [shape: bf16[512,128], index: 5, kind: output, shape index: {0}]
  %s6 = inlined_call_operand.vmem [shape: bf16[512,128], index: 6, kind: output, shape index: {1}]
  %7 = xla_tuple %s5, %s6
  %s8 = sld [smem:[#allocation0]]
  $region61: #{_lambda_.3} parent=0
    _
  %s10 = ssub.s32 1, %s8
  %s11 = scalar_select 0, %s10, %s8
  loop: start=0, step=1, limit=4
  $region2: #{_lambda_.3} parent=0 // loop_pre_header
    _
  $region3: #{_lambda_.3} parent=0 // loop_header
    %s13 = sphi 0, %s17
    %p14 = scmp.ge.s32.totalorder %s13, 4
    %s23 = sphi 0, %s25
    %s26 = sphi 0, %s23
    %s27 = sphi 0, %s26
    %s43 = sphi 0, %s27
    %s47 = sphi 0, %s47
    %s49 = sphi 0, %s47
    %s50 = sphi 0, %s49
    %s64 = sphi 0, %s50
    %s68 = sphi 0, %s68
    %s70 = sphi 0, %s68
    %s71 = sphi 0, %s70
    %s85 = sphi 0, %s71
    %s89 = sphi 0, %s89
    %s91 = sphi 0, %s89
    %s92 = sphi 0, %s91
    %s106 = sphi 0, %s92
    %s110 = sphi 0, %s110
    %s112 = sphi 0, %s110
    %s113 = sphi 0, %s112
    %s127 = sphi 0, %s113
    %s133 = sphi 0, %s135
    %s136 = sphi 0, %s133
    %s137 = sphi 0, %s136
    %s153 = sphi 0, %s137
    %s159 = sphi 0, %s161
    %s162 = sphi 0, %s159
    %s163 = sphi 0, %s162
    %s179 = sphi 0, %s163
  $region4: #{_lambda_.3} parent=0 // loop_header_branch
    %16 = sbr.rel (%p14) target = $region8
  $region5: #{_lambda_.3} parent=0 // loop_body
    %s18 = ssub.s32 %s13, 1
    %s19 = ssub.s32 %s13, 2
    %s20 = sadd.s32 %s13, 1
    %s21 = ssub.s32 %s13, %s20
    %p22 = scmp.eq.s32.totalorder %s21, 0
    %s24 = sadd.s32 %s23, 1
    %s25 = scalar_select %p22, %s23, %s24
    %p28 = pneg %p22
    %p29 = scmp.eq.s32.totalorder %s13, 1
    %p30 = por %p28, %p29
    %p31 = scmp.ne.s32.totalorder %s23, %s26
    %p32 = scmp.eq.s32.totalorder %s13, 0
    %p33 = por %p31, %p32
    %p34 = scmp.ne.s32.totalorder %s23, %s26
    %p35 = scmp.eq.s32.totalorder %s18, 1
    %p36 = por %p34, %p35
    %p37 = scmp.ne.s32.totalorder %s26, %s27
    %p38 = scmp.eq.s32.totalorder %s18, 0
    %p39 = por %p37, %p38
    %p40 = scmp.ne.s32.totalorder %s26, %s27
    %p41 = scmp.eq.s32.totalorder %s19, 1
    %p42 = por %p40, %p41
    %p44 = scmp.ne.s32.totalorder %s27, %s43
    %p45 = scmp.eq.s32.totalorder %s19, 0
    %p46 = por %p44, %p45
    %s48 = sadd.s32 %s47, 1
    %p51 = scmp.eq.s32.totalorder %s13, 1
    %p52 = scmp.ne.s32.totalorder %s47, %s49
    %p53 = scmp.eq.s32.totalorder %s13, 0
    %p54 = por %p52, %p53
    %p55 = scmp.ne.s32.totalorder %s47, %s49
    %p56 = scmp.eq.s32.totalorder %s18, 1
    %p57 = por %p55, %p56
    %p58 = scmp.ne.s32.totalorder %s49, %s50
    %p59 = scmp.eq.s32.totalorder %s18, 0
    %p60 = por %p58, %p59
    %p61 = scmp.ne.s32.totalorder %s49, %s50
    %p62 = scmp.eq.s32.totalorder %s19, 1
    %p63 = por %p61, %p62
    %p65 = scmp.ne.s32.totalorder %s50, %s64
    %p66 = scmp.eq.s32.totalorder %s19, 0
    %p67 = por %p65, %p66
    %s69 = sadd.s32 %s68, 1
    %p72 = scmp.eq.s32.totalorder %s13, 1
    %p73 = scmp.ne.s32.totalorder %s68, %s70
    %p74 = scmp.eq.s32.totalorder %s13, 0
    %p75 = por %p73, %p74
    %p76 = scmp.ne.s32.totalorder %s68, %s70
    %p77 = scmp.eq.s32.totalorder %s18, 1
    %p78 = por %p76, %p77
    %p79 = scmp.ne.s32.totalorder %s70, %s71
    %p80 = scmp.eq.s32.totalorder %s18, 0
    %p81 = por %p79, %p80
    %p82 = scmp.ne.s32.totalorder %s70, %s71
    %p83 = scmp.eq.s32.totalorder %s19, 1
    %p84 = por %p82, %p83
    %p86 = scmp.ne.s32.totalorder %s71, %s85
    %p87 = scmp.eq.s32.totalorder %s19, 0
    %p88 = por %p86, %p87
    %s90 = sadd.s32 %s89, 1
    %p93 = scmp.eq.s32.totalorder %s13, 1
    %p94 = scmp.ne.s32.totalorder %s89, %s91
    %p95 = scmp.eq.s32.totalorder %s13, 0
    %p96 = por %p94, %p95
    %p97 = scmp.ne.s32.totalorder %s89, %s91
    %p98 = scmp.eq.s32.totalorder %s18, 1
    %p99 = por %p97, %p98
    %p100 = scmp.ne.s32.totalorder %s91, %s92
    %p101 = scmp.eq.s32.totalorder %s18, 0
    %p102 = por %p100, %p101
    %p103 = scmp.ne.s32.totalorder %s91, %s92
    %p104 = scmp.eq.s32.totalorder %s19, 1
    %p105 = por %p103, %p104
    %p107 = scmp.ne.s32.totalorder %s92, %s106
    %p108 = scmp.eq.s32.totalorder %s19, 0
    %p109 = por %p107, %p108
    %s111 = sadd.s32 %s110, 1
    %p114 = scmp.eq.s32.totalorder %s13, 1
    %p115 = scmp.ne.s32.totalorder %s110, %s112
    %p116 = scmp.eq.s32.totalorder %s13, 0
    %p117 = por %p115, %p116
    %p118 = scmp.ne.s32.totalorder %s110, %s112
    %p119 = scmp.eq.s32.totalorder %s18, 1
    %p120 = por %p118, %p119
    %p121 = scmp.ne.s32.totalorder %s112, %s113
    %p122 = scmp.eq.s32.totalorder %s18, 0
    %p123 = por %p121, %p122
    %p124 = scmp.ne.s32.totalorder %s112, %s113
    %p125 = scmp.eq.s32.totalorder %s19, 1
    %p126 = por %p124, %p125
    %p128 = scmp.ne.s32.totalorder %s113, %s127
    %p129 = scmp.eq.s32.totalorder %s19, 0
    %p130 = por %p128, %p129
    %s131 = ssub.s32 %s13, %s20
    %p132 = scmp.eq.s32.totalorder %s131, 0
    %s134 = sadd.s32 %s133, 1
    %s135 = scalar_select %p132, %s133, %s134
    %p138 = pneg %p132
    %p139 = scmp.eq.s32.totalorder %s13, 1
    %p140 = por %p138, %p139
    %p141 = scmp.ne.s32.totalorder %s133, %s136
    %p142 = scmp.eq.s32.totalorder %s13, 0
    %p143 = por %p141, %p142
    %p144 = scmp.ne.s32.totalorder %s133, %s136
    %p145 = scmp.eq.s32.totalorder %s18, 1
    %p146 = por %p144, %p145
    %p147 = scmp.ne.s32.totalorder %s136, %s137
    %p148 = scmp.eq.s32.totalorder %s18, 0
    %p149 = por %p147, %p148
    %p150 = scmp.ne.s32.totalorder %s136, %s137
    %p151 = scmp.eq.s32.totalorder %s19, 1
    %p152 = por %p150, %p151
    %p154 = scmp.ne.s32.totalorder %s137, %s153
    %p155 = scmp.eq.s32.totalorder %s19, 0
    %p156 = por %p154, %p155
    %s157 = ssub.s32 %s13, %s20
    %p158 = scmp.eq.s32.totalorder %s157, 0
    %s160 = sadd.s32 %s159, 1
    %s161 = scalar_select %p158, %s159, %s160
    %p164 = pneg %p158
    %p165 = scmp.eq.s32.totalorder %s13, 1
    %p166 = por %p164, %p165
    %p167 = scmp.ne.s32.totalorder %s159, %s162
    %p168 = scmp.eq.s32.totalorder %s13, 0
    %p169 = por %p167, %p168
    %p170 = scmp.ne.s32.totalorder %s159, %s162
    %p171 = scmp.eq.s32.totalorder %s18, 1
    %p172 = por %p170, %p171
    %p173 = scmp.ne.s32.totalorder %s162, %s163
    %p174 = scmp.eq.s32.totalorder %s18, 0
    %p175 = por %p173, %p174
    %p176 = scmp.ne.s32.totalorder %s162, %s163
    %p177 = scmp.eq.s32.totalorder %s19, 1
    %p178 = por %p176, %p177
    %p180 = scmp.ne.s32.totalorder %s163, %s179
    %p181 = scmp.eq.s32.totalorder %s19, 0
    %p182 = por %p180, %p181
    %p183 = scmp.le.s32.totalorder 1, %s13
    %p184 = scmp.lt.s32.totalorder %s13, 3
    %p185 = pnand %p183, %p184
    %p186 = pneg %p185
    // Predicated region
    $region9: #{_lambda_.3} parent=5 // pred_check
      _
    $region10: #{_lambda_.3} parent=5 // pred_check_branch
      %188 = sbr.rel (%p185) target = $region12
    $region11: #{_lambda_.3} parent=5 // pred_region
      %s189 = ssub.s32 %s13, 1
      // Predicated region
      $region13: #{_lambda_.3} parent=11 // pred_check
        %p190 = pneg %p60
      $region14: #{_lambda_.3} parent=11 // pred_check_branch
        %192 = sbr.rel (%p190) target = $region16
      $region15: #{_lambda_.3} parent=11 // pred_region
        _
      $region16: #{_lambda_.3} parent=11 // pred_fallthru
        _
      // Predicated region
      $region17: #{_lambda_.3} parent=11 // pred_check
        %p193 = pneg %p81
      $region18: #{_lambda_.3} parent=11 // pred_check_branch
        %195 = sbr.rel (%p193) target = $region20
      $region19: #{_lambda_.3} parent=11 // pred_region
        _
      $region20: #{_lambda_.3} parent=11 // pred_fallthru
        _
      // Predicated region
      $region21: #{_lambda_.3} parent=11 // pred_check
        %p196 = pneg %p102
      $region22: #{_lambda_.3} parent=11 // pred_check_branch
        %198 = sbr.rel (%p196) target = $region24
      $region23: #{_lambda_.3} parent=11 // pred_region
        _
      $region24: #{_lambda_.3} parent=11 // pred_fallthru
        _
      // Predicated region
      $region25: #{_lambda_.3} parent=11 // pred_check
        %p199 = pneg %p123
      $region26: #{_lambda_.3} parent=11 // pred_check_branch
        %201 = sbr.rel (%p199) target = $region28
      $region27: #{_lambda_.3} parent=11 // pred_region
        _
      $region28: #{_lambda_.3} parent=11 // pred_fallthru
        _
    $region12: #{_lambda_.3} parent=5 // pred_fallthru
      _
    %p202 = scmp.lt.s32.totalorder %s13, 2
    // Predicated region
    $region29: #{_lambda_.3} parent=5 // pred_check
      %p203 = pneg %p202
    $region30: #{_lambda_.3} parent=5 // pred_check_branch
      %205 = sbr.rel (%p203) target = $region32
    $region31: #{_lambda_.3} parent=5 // pred_region
      // Predicated region
      $region33: #{_lambda_.3} parent=31 // pred_check
        %p206 = pneg %p33
      $region34: #{_lambda_.3} parent=31 // pred_check_branch
        %208 = sbr.rel (%p206) target = $region36
      $region35: #{_lambda_.3} parent=31 // pred_region
        %s209 = smul.u32 32, %s13
        %p210 = scmp.lt.s32.totalorder %s209, 63
        %s211 = scalar_select %p210, %s209, 63
        %s212 = smul.addr %s211, 4
        %s213 = scalar_lea.vmem %s0, %s212
        %s214 = smul.u32 32, %s13
      $region36: #{_lambda_.3} parent=31 // pred_fallthru
        _
    $region32: #{_lambda_.3} parent=5 // pred_fallthru
      _
    %p215 = scmp.le.s32.totalorder 1, %s13
    %p216 = scmp.lt.s32.totalorder %s13, 3
    %p217 = pnand %p215, %p216
    %p218 = pneg %p217
    // Predicated region
    $region37: #{_lambda_.3} parent=5 // pred_check
      _
    $region38: #{_lambda_.3} parent=5 // pred_check_branch
      %220 = sbr.rel (%p217) target = $region40
    $region39: #{_lambda_.3} parent=5 // pred_region
      %s221 = ssub.s32 %s13, 1
      %s222 = smul.u32 32, %s18
      %p223 = scmp.lt.s32.totalorder %s222, 63
      %s224 = scalar_select %p223, %s222, 63
      %s225 = smul.addr %s224, 4
      %s226 = scalar_lea.vmem %s0, %s225
      %p227 = pneg %p39
      %p228 = pneg %p36
      %p229 = pneg %p60
      %p230 = pneg %p57
      %p231 = pneg %p81
      %p232 = pneg %p78
      %p233 = pneg %p102
      %p234 = pneg %p99
      %p235 = pneg %p123
      %p236 = pneg %p120
      %p237 = pneg %p149
      %p238 = pneg %p146
      %s239 = smul.u32 32, %s18
      %p240 = scmp.lt.s32.totalorder %s239, 63
      %s241 = scalar_select %p240, %s239, 63
      %s242 = smul.addr %s241, 4
      %s243 = scalar_lea.vmem %s5, %s242
      %p244 = pneg %p175
      %p245 = pneg %p172
      %s246 = smul.u32 32, %s18
      %p247 = scmp.lt.s32.totalorder %s246, 63
      %s248 = scalar_select %p247, %s246, 63
      %s249 = smul.addr %s248, 4
      %s250 = scalar_lea.vmem %s6, %s249
      %s251 = smul.u32 32, %s18
      %p252 = scmp.lt.s32.totalorder %s251, 63
      %s253 = scalar_select %p252, %s251, 63
      %s254 = smul.addr %s253, 4
      %s255 = scalar_lea.vmem %s0, %s254
      %s256 = smul.u32 32, %s18
      %s257 = smul.u32 32, %s18
      %p258 = scmp.lt.s32.totalorder %s257, 63
      %s259 = scalar_select %p258, %s257, 63
      %s260 = smul.addr %s259, 4
      %s261 = scalar_lea.vmem %s5, %s260
      %s262 = smul.u32 32, %s18
      %s263 = smul.u32 32, %s18
      %p264 = scmp.lt.s32.totalorder %s263, 63
      %s265 = scalar_select %p264, %s263, 63
      %s266 = smul.addr %s265, 4
      %s267 = scalar_lea.vmem %s6, %s266
      %s268 = smul.u32 32, %s18
      %v270 = vld [vmem:[%s255] sm:$0xf]
      %v271 = vld [vmem:[%s255 + $0x4] sm:$0xf]
      %v272 = vld [vmem:[%s255 + $0x8] sm:$0xf]
      %v273 = vld [vmem:[%s255 + $0xc] sm:$0xf]
      %v274 = vld [vmem:[%s255 + $0x10] sm:$0xf]
      %v275 = vld [vmem:[%s255 + $0x14] sm:$0xf]
      %v276 = vld [vmem:[%s255 + $0x18] sm:$0xf]
      %v277 = vld [vmem:[%s255 + $0x1c] sm:$0xf]
      %v278 = vld [vmem:[%s255 + $0x20] sm:$0xf]
      %v279 = vld [vmem:[%s255 + $0x24] sm:$0xf]
      %v280 = vld [vmem:[%s255 + $0x28] sm:$0xf]
      %v281 = vld [vmem:[%s255 + $0x2c] sm:$0xf]
      %v282 = vld [vmem:[%s255 + $0x30] sm:$0xf]
      %v283 = vld [vmem:[%s255 + $0x34] sm:$0xf]
      %v284 = vld [vmem:[%s255 + $0x38] sm:$0xf]
      %v285 = vld [vmem:[%s255 + $0x3c] sm:$0xf]
      %v286 = vld [vmem:[%s255 + $0x40] sm:$0xf]
      %v287 = vld [vmem:[%s255 + $0x44] sm:$0xf]
      %v288 = vld [vmem:[%s255 + $0x48] sm:$0xf]
      %v289 = vld [vmem:[%s255 + $0x4c] sm:$0xf]
      %v290 = vld [vmem:[%s255 + $0x50] sm:$0xf]
      %v291 = vld [vmem:[%s255 + $0x54] sm:$0xf]
      %v292 = vld [vmem:[%s255 + $0x58] sm:$0xf]
      %v293 = vld [vmem:[%s255 + $0x5c] sm:$0xf]
      %v294 = vld [vmem:[%s255 + $0x60] sm:$0xf]
      %v295 = vld [vmem:[%s255 + $0x64] sm:$0xf]
      %v296 = vld [vmem:[%s255 + $0x68] sm:$0xf]
      %v297 = vld [vmem:[%s255 + $0x6c] sm:$0xf]
      %v298 = vld [vmem:[%s255 + $0x70] sm:$0xf]
      %v299 = vld [vmem:[%s255 + $0x74] sm:$0xf]
      %v300 = vld [vmem:[%s255 + $0x78] sm:$0xf]
      %v301 = vld [vmem:[%s255 + $0x7c] sm:$0xf]
      %v302 = vld [vmem:[%s1] sm:$0xf]
      %v303 = vld [vmem:[%s1 + $0x4] sm:$0xf]
      %v304 = vld [vmem:[%s1 + $0x8] sm:$0xf]
      %v305 = vld [vmem:[%s1 + $0xc] sm:$0xf]
      %v306 = vld [vmem:[%s2] sm:$0x1]
      %v308 = vlaneseq
      %v309 = vshrl.u32 %v308, 7
      %v310 = vsub.s32 0, %v309
      %v311 = vrot.slane %v306, %v310
      %v345 = vunpack.c.l.b16 %v270
      %v346 = vunpack.c.l.b16 %v271
      %v347 = vunpack.c.l.b16 %v272
      %v348 = vunpack.c.l.b16 %v273
      %v349 = vunpack.c.l.b16 %v274
      %v350 = vunpack.c.l.b16 %v275
      %v351 = vunpack.c.l.b16 %v276
      %v352 = vunpack.c.l.b16 %v277
      %v353 = vunpack.c.l.b16 %v278
      %v354 = vunpack.c.l.b16 %v279
      %v355 = vunpack.c.l.b16 %v280
      %v356 = vunpack.c.l.b16 %v281
      %v357 = vunpack.c.l.b16 %v282
      %v358 = vunpack.c.l.b16 %v283
      %v359 = vunpack.c.l.b16 %v284
      %v360 = vunpack.c.l.b16 %v285
      %v361 = vunpack.c.l.b16 %v286
      %v362 = vunpack.c.l.b16 %v287
      %v363 = vunpack.c.l.b16 %v288
      %v364 = vunpack.c.l.b16 %v289
      %v365 = vunpack.c.l.b16 %v290
      %v366 = vunpack.c.l.b16 %v291
      %v367 = vunpack.c.l.b16 %v292
      %v368 = vunpack.c.l.b16 %v293
      %v369 = vunpack.c.l.b16 %v294
      %v370 = vunpack.c.l.b16 %v295
      %v371 = vunpack.c.l.b16 %v296
      %v372 = vunpack.c.l.b16 %v297
      %v373 = vunpack.c.l.b16 %v298
      %v374 = vunpack.c.l.b16 %v299
      %v375 = vunpack.c.l.b16 %v300
      %v376 = vunpack.c.l.b16 %v301
      %v377 = vpack.c.b16 %v346, %v345
      %v378 = vpack.c.b16 %v348, %v347
      %v379 = vpack.c.b16 %v350, %v349
      %v380 = vpack.c.b16 %v352, %v351
      %v381 = vpack.c.b16 %v354, %v353
      %v382 = vpack.c.b16 %v356, %v355
      %v383 = vpack.c.b16 %v358, %v357
      %v384 = vpack.c.b16 %v360, %v359
      %v385 = vpack.c.b16 %v362, %v361
      %v386 = vpack.c.b16 %v364, %v363
      %v387 = vpack.c.b16 %v366, %v365
      %v388 = vpack.c.b16 %v368, %v367
      %v389 = vpack.c.b16 %v370, %v369
      %v390 = vpack.c.b16 %v372, %v371
      %v391 = vpack.c.b16 %v374, %v373
      %v392 = vpack.c.b16 %v376, %v375
      %v397 = vunpack.c.l.b16 %v302
      %v398 = vunpack.c.l.b16 %v303
      %v399 = vunpack.c.l.b16 %v304
      %v400 = vunpack.c.l.b16 %v305
      %v401 = vpack.c.b16 %v398, %v397
      %v402 = vpack.c.b16 %v400, %v399
      %vm405 = vcmask 261120
      %v407 = vsel %vm405, %v377, 0
      %v410 = vsel %vm405, %v378, 0
      %v413 = vsel %vm405, %v379, 0
      %v416 = vsel %vm405, %v380, 0
      %v419 = vsel %vm405, %v381, 0
      %v422 = vsel %vm405, %v382, 0
      %v425 = vsel %vm405, %v383, 0
      %v428 = vsel %vm405, %v384, 0
      %v431 = vsel %vm405, %v385, 0
      %v434 = vsel %vm405, %v386, 0
      %v437 = vsel %vm405, %v387, 0
      %v440 = vsel %vm405, %v388, 0
      %v443 = vsel %vm405, %v389, 0
      %v446 = vsel %vm405, %v390, 0
      %v449 = vsel %vm405, %v391, 0
      %v452 = vsel %vm405, %v392, 0
      %454 = vmatprep.subr.bf16.mxu0 0
      %455 = vmatpush1.bf16.msra.mxu0 0
      %456 = vmatprep.subr.bf16.mxu0 0
      %457 = vmatpush1.bf16.msra.mxu0 0
      %458 = vmatprep.subr.bf16.mxu0 0
      %459 = vmatpush1.bf16.msra.mxu0 0
      %460 = vmatprep.subr.bf16.mxu0 0
      %461 = vmatpush1.bf16.msra.mxu0 0
      %462 = vmatprep.subr.bf16.mxu0 0
      %463 = vmatpush1.bf16.msra.mxu0 0
      %464 = vmatprep.subr.bf16.mxu0 0
      %465 = vmatpush1.bf16.msra.mxu0 0
      %466 = vmatprep.subr.bf16.mxu0 0
      %467 = vmatpush1.bf16.msra.mxu0 %v402
      %468 = vmatprep.subr.bf16.mxu0 0
      %469 = vmatpush1.bf16.msra.mxu0 %v401
      %470 = vmatprep.subr.bf16.mxu0 0
      %471 = vmatpush2.bf16.msra.mxu0 0
      %472 = vmatprep.subr.bf16.mxu0 0
      %473 = vmatpush2.bf16.msra.mxu0 0
      %474 = vmatprep.subr.bf16.mxu0 0
      %475 = vmatpush2.bf16.msra.mxu0 0
      %476 = vmatprep.subr.bf16.mxu0 0
      %477 = vmatpush2.bf16.msra.mxu0 0
      %478 = vmatprep.subr.bf16.mxu0 0
      %479 = vmatpush2.bf16.msra.mxu0 0
      %480 = vmatprep.subr.bf16.mxu0 0
      %481 = vmatpush2.bf16.msra.mxu0 0
      %482 = vmatprep.subr.bf16.mxu0 0
      %483 = vmatpush2.bf16.msra.mxu0 0
      %484 = vmatprep.subr.bf16.mxu0 0
      %485 = vmatpush2.bf16.msra.mxu0 0
      %486 = vmatprep.mubr.bf16.mxu0 0
      %487 = vmatmul.mubr.bf16.gmra.mxu0 %v407
      %v488 = vpop.f32.mrf.mxu0
      %v489 = vadd.f32 %v311, %v488
      %v490 = vpop.f32.mrf.mxu0
      %v491 = vpop.f32.mrf.mxu0
      %v492 = vadd.f32 %v311, %v491
      %v493 = vpop.f32.mrf.mxu0
      %494 = vmatprep.mubr.bf16.mxu0 0
      %495 = vmatmul.mubr.bf16.gmra.mxu0 %v410
      %v496 = vpop.f32.mrf.mxu0
      %v497 = vadd.f32 %v311, %v496
      %v498 = vpop.f32.mrf.mxu0
      %v499 = vpop.f32.mrf.mxu0
      %v500 = vadd.f32 %v311, %v499
      %v501 = vpop.f32.mrf.mxu0
      %502 = vmatprep.mubr.bf16.mxu0 0
      %503 = vmatmul.mubr.bf16.gmra.mxu0 %v413
      %v504 = vpop.f32.mrf.mxu0
      %v505 = vadd.f32 %v311, %v504
      %v506 = vpop.f32.mrf.mxu0
      %v507 = vpop.f32.mrf.mxu0
      %v508 = vadd.f32 %v311, %v507
      %v509 = vpop.f32.mrf.mxu0
      %510 = vmatprep.mubr.bf16.mxu0 0
      %511 = vmatmul.mubr.bf16.gmra.mxu0 %v416
      %v512 = vpop.f32.mrf.mxu0
      %v513 = vadd.f32 %v311, %v512
      %v514 = vpop.f32.mrf.mxu0
      %v515 = vpop.f32.mrf.mxu0
      %v516 = vadd.f32 %v311, %v515
      %v517 = vpop.f32.mrf.mxu0
      %518 = vmatprep.mubr.bf16.mxu0 0
      %519 = vmatmul.mubr.bf16.gmra.mxu0 %v419
      %v520 = vpop.f32.mrf.mxu0
      %v521 = vadd.f32 %v311, %v520
      %v522 = vpop.f32.mrf.mxu0
      %v523 = vpop.f32.mrf.mxu0
      %v524 = vadd.f32 %v311, %v523
      %v525 = vpop.f32.mrf.mxu0
      %526 = vmatprep.mubr.bf16.mxu0 0
      %527 = vmatmul.mubr.bf16.gmra.mxu0 %v422
      %v528 = vpop.f32.mrf.mxu0
      %v529 = vadd.f32 %v311, %v528
      %v530 = vpop.f32.mrf.mxu0
      %v531 = vpop.f32.mrf.mxu0
      %v532 = vadd.f32 %v311, %v531
      %v533 = vpop.f32.mrf.mxu0
      %534 = vmatprep.mubr.bf16.mxu0 0
      %535 = vmatmul.mubr.bf16.gmra.mxu0 %v425
      %v536 = vpop.f32.mrf.mxu0
      %v537 = vadd.f32 %v311, %v536
      %v538 = vpop.f32.mrf.mxu0
      %v539 = vpop.f32.mrf.mxu0
      %v540 = vadd.f32 %v311, %v539
      %v541 = vpop.f32.mrf.mxu0
      %542 = vmatprep.mubr.bf16.mxu0 0
      %543 = vmatmul.mubr.bf16.gmra.mxu0 %v428
      %v544 = vpop.f32.mrf.mxu0
      %v545 = vadd.f32 %v311, %v544
      %v546 = vpop.f32.mrf.mxu0
      %v547 = vpop.f32.mrf.mxu0
      %v548 = vadd.f32 %v311, %v547
      %v549 = vpop.f32.mrf.mxu0
      %550 = vmatprep.mubr.bf16.mxu0 0
      %551 = vmatmul.mubr.bf16.gmra.mxu0 %v431
      %v552 = vpop.f32.mrf.mxu0
      %v553 = vadd.f32 %v311, %v552
      %v554 = vpop.f32.mrf.mxu0
      %v555 = vpop.f32.mrf.mxu0
      %v556 = vadd.f32 %v311, %v555
      %v557 = vpop.f32.mrf.mxu0
      %558 = vmatprep.mubr.bf16.mxu0 0
      %559 = vmatmul.mubr.bf16.gmra.mxu0 %v434
      %v560 = vpop.f32.mrf.mxu0
      %v561 = vadd.f32 %v311, %v560
      %v562 = vpop.f32.mrf.mxu0
      %v563 = vpop.f32.mrf.mxu0
      %v564 = vadd.f32 %v311, %v563
      %v565 = vpop.f32.mrf.mxu0
      %566 = vmatprep.mubr.bf16.mxu0 0
      %567 = vmatmul.mubr.bf16.gmra.mxu0 %v437
      %v568 = vpop.f32.mrf.mxu0
      %v569 = vadd.f32 %v311, %v568
      %v570 = vpop.f32.mrf.mxu0
      %v571 = vpop.f32.mrf.mxu0
      %v572 = vadd.f32 %v311, %v571
      %v573 = vpop.f32.mrf.mxu0
      %574 = vmatprep.mubr.bf16.mxu0 0
      %575 = vmatmul.mubr.bf16.gmra.mxu0 %v440
      %v576 = vpop.f32.mrf.mxu0
      %v577 = vadd.f32 %v311, %v576
      %v578 = vpop.f32.mrf.mxu0
      %v579 = vpop.f32.mrf.mxu0
      %v580 = vadd.f32 %v311, %v579
      %v581 = vpop.f32.mrf.mxu0
      %582 = vmatprep.mubr.bf16.mxu0 0
      %583 = vmatmul.mubr.bf16.gmra.mxu0 %v443
      %v584 = vpop.f32.mrf.mxu0
      %v585 = vadd.f32 %v311, %v584
      %v586 = vpop.f32.mrf.mxu0
      %v587 = vpop.f32.mrf.mxu0
      %v588 = vadd.f32 %v311, %v587
      %v589 = vpop.f32.mrf.mxu0
      %590 = vmatprep.mubr.bf16.mxu0 0
      %591 = vmatmul.mubr.bf16.gmra.mxu0 %v446
      %v592 = vpop.f32.mrf.mxu0
      %v593 = vadd.f32 %v311, %v592
      %v594 = vpop.f32.mrf.mxu0
      %v595 = vpop.f32.mrf.mxu0
      %v596 = vadd.f32 %v311, %v595
      %v597 = vpop.f32.mrf.mxu0
      %598 = vmatprep.mubr.bf16.mxu0 0
      %599 = vmatmul.mubr.bf16.gmra.mxu0 %v449
      %v600 = vpop.f32.mrf.mxu0
      %v601 = vadd.f32 %v311, %v600
      %v602 = vpop.f32.mrf.mxu0
      %v603 = vpop.f32.mrf.mxu0
      %v604 = vadd.f32 %v311, %v603
      %v605 = vpop.f32.mrf.mxu0
      %606 = vmatprep.mubr.bf16.mxu0 0
      %607 = vmatmul.mubr.bf16.gmra.mxu0 %v452
      %v608 = vpop.f32.mrf.mxu0
      %v609 = vadd.f32 %v311, %v608
      %v610 = vpop.f32.mrf.mxu0
      %v611 = vpop.f32.mrf.mxu0
      %v612 = vadd.f32 %v311, %v611
      %v613 = vpop.f32.mrf.mxu0
      %614 = vdwg.mxu0
      %v615 = vmax.f32 %v489, 0.0
      %v616 = vmax.f32 %v492, 0.0
      %v617 = vmax.f32 %v497, 0.0
      %v618 = vmax.f32 %v500, 0.0
      %v619 = vmax.f32 %v505, 0.0
      %v620 = vmax.f32 %v508, 0.0
      %v621 = vmax.f32 %v513, 0.0
      %v622 = vmax.f32 %v516, 0.0
      %v623 = vmax.f32 %v521, 0.0
      %v624 = vmax.f32 %v524, 0.0
      %v625 = vmax.f32 %v529, 0.0
      %v626 = vmax.f32 %v532, 0.0
      %v627 = vmax.f32 %v537, 0.0
      %v628 = vmax.f32 %v540, 0.0
      %v629 = vmax.f32 %v545, 0.0
      %v630 = vmax.f32 %v548, 0.0
      %v631 = vmax.f32 %v553, 0.0
      %v632 = vmax.f32 %v556, 0.0
      %v633 = vmax.f32 %v561, 0.0
      %v634 = vmax.f32 %v564, 0.0
      %v635 = vmax.f32 %v569, 0.0
      %v636 = vmax.f32 %v572, 0.0
      %v637 = vmax.f32 %v577, 0.0
      %v638 = vmax.f32 %v580, 0.0
      %v639 = vmax.f32 %v585, 0.0
      %v640 = vmax.f32 %v588, 0.0
      %v641 = vmax.f32 %v593, 0.0
      %v642 = vmax.f32 %v596, 0.0
      %v643 = vmax.f32 %v601, 0.0
      %v644 = vmax.f32 %v604, 0.0
      %v645 = vmax.f32 %v609, 0.0
      %v646 = vmax.f32 %v612, 0.0
      %v647 = vpack.c.bf16 %v616, %v615
      %v648 = vpack.c.bf16 %v618, %v617
      %v649 = vpack.c.bf16 %v620, %v619
      %v650 = vpack.c.bf16 %v622, %v621
      %v651 = vpack.c.bf16 %v624, %v623
      %v652 = vpack.c.bf16 %v626, %v625
      %v653 = vpack.c.bf16 %v628, %v627
      %v654 = vpack.c.bf16 %v630, %v629
      %v655 = vpack.c.bf16 %v632, %v631
      %v656 = vpack.c.bf16 %v634, %v633
      %v657 = vpack.c.bf16 %v636, %v635
      %v658 = vpack.c.bf16 %v638, %v637
      %v659 = vpack.c.bf16 %v640, %v639
      %v660 = vpack.c.bf16 %v642, %v641
      %v661 = vpack.c.bf16 %v644, %v643
      %v662 = vpack.c.bf16 %v646, %v645
      %v679 = vunpack.c.l.b16 %v647
      %v680 = vunpack.c.h.b16 %v647
      %v681 = vunpack.c.l.b16 %v648
      %v682 = vunpack.c.h.b16 %v648
      %v683 = vunpack.c.l.b16 %v649
      %v684 = vunpack.c.h.b16 %v649
      %v685 = vunpack.c.l.b16 %v650
      %v686 = vunpack.c.h.b16 %v650
      %v687 = vunpack.c.l.b16 %v651
      %v688 = vunpack.c.h.b16 %v651
      %v689 = vunpack.c.l.b16 %v652
      %v690 = vunpack.c.h.b16 %v652
      %v691 = vunpack.c.l.b16 %v653
      %v692 = vunpack.c.h.b16 %v653
      %v693 = vunpack.c.l.b16 %v654
      %v694 = vunpack.c.h.b16 %v654
      %v695 = vunpack.c.l.b16 %v655
      %v696 = vunpack.c.h.b16 %v655
      %v697 = vunpack.c.l.b16 %v656
      %v698 = vunpack.c.h.b16 %v656
      %v699 = vunpack.c.l.b16 %v657
      %v700 = vunpack.c.h.b16 %v657
      %v701 = vunpack.c.l.b16 %v658
      %v702 = vunpack.c.h.b16 %v658
      %v703 = vunpack.c.l.b16 %v659
      %v704 = vunpack.c.h.b16 %v659
      %v705 = vunpack.c.l.b16 %v660
      %v706 = vunpack.c.h.b16 %v660
      %v707 = vunpack.c.l.b16 %v661
      %v708 = vunpack.c.h.b16 %v661
      %v709 = vunpack.c.l.b16 %v662
      %v710 = vunpack.c.h.b16 %v662
      %v711 = vpack.c.b16 %v679, %v679
      %v712 = vpack.c.b16 %v680, %v680
      %v713 = vpack.c.b16 %v681, %v681
      %v714 = vpack.c.b16 %v682, %v682
      %v715 = vpack.c.b16 %v683, %v683
      %v716 = vpack.c.b16 %v684, %v684
      %v717 = vpack.c.b16 %v685, %v685
      %v718 = vpack.c.b16 %v686, %v686
      %v719 = vpack.c.b16 %v687, %v687
      %v720 = vpack.c.b16 %v688, %v688
      %v721 = vpack.c.b16 %v689, %v689
      %v722 = vpack.c.b16 %v690, %v690
      %v723 = vpack.c.b16 %v691, %v691
      %v724 = vpack.c.b16 %v692, %v692
      %v725 = vpack.c.b16 %v693, %v693
      %v726 = vpack.c.b16 %v694, %v694
      %v727 = vpack.c.b16 %v695, %v695
      %v728 = vpack.c.b16 %v696, %v696
      %v729 = vpack.c.b16 %v697, %v697
      %v730 = vpack.c.b16 %v698, %v698
      %v731 = vpack.c.b16 %v699, %v699
      %v732 = vpack.c.b16 %v700, %v700
      %v733 = vpack.c.b16 %v701, %v701
      %v734 = vpack.c.b16 %v702, %v702
      %v735 = vpack.c.b16 %v703, %v703
      %v736 = vpack.c.b16 %v704, %v704
      %v737 = vpack.c.b16 %v705, %v705
      %v738 = vpack.c.b16 %v706, %v706
      %v739 = vpack.c.b16 %v707, %v707
      %v740 = vpack.c.b16 %v708, %v708
      %v741 = vpack.c.b16 %v709, %v709
      %v742 = vpack.c.b16 %v710, %v710
      %775 = vst [vmem:[%s261] sm:$0xf] %v711
      %776 = vst [vmem:[%s261 + $0x4] sm:$0xf] %v712
      %777 = vst [vmem:[%s261 + $0x8] sm:$0xf] %v713
      %778 = vst [vmem:[%s261 + $0xc] sm:$0xf] %v714
      %779 = vst [vmem:[%s261 + $0x10] sm:$0xf] %v715
      %780 = vst [vmem:[%s261 + $0x14] sm:$0xf] %v716
      %781 = vst [vmem:[%s261 + $0x18] sm:$0xf] %v717
      %782 = vst [vmem:[%s261 + $0x1c] sm:$0xf] %v718
      %783 = vst [vmem:[%s261 + $0x20] sm:$0xf] %v719
      %784 = vst [vmem:[%s261 + $0x24] sm:$0xf] %v720
      %785 = vst [vmem:[%s261 + $0x28] sm:$0xf] %v721
      %786 = vst [vmem:[%s261 + $0x2c] sm:$0xf] %v722
      %787 = vst [vmem:[%s261 + $0x30] sm:$0xf] %v723
      %788 = vst [vmem:[%s261 + $0x34] sm:$0xf] %v724
      %789 = vst [vmem:[%s261 + $0x38] sm:$0xf] %v725
      %790 = vst [vmem:[%s261 + $0x3c] sm:$0xf] %v726
      %791 = vst [vmem:[%s261 + $0x40] sm:$0xf] %v727
      %792 = vst [vmem:[%s261 + $0x44] sm:$0xf] %v728
      %793 = vst [vmem:[%s261 + $0x48] sm:$0xf] %v729
      %794 = vst [vmem:[%s261 + $0x4c] sm:$0xf] %v730
      %795 = vst [vmem:[%s261 + $0x50] sm:$0xf] %v731
      %796 = vst [vmem:[%s261 + $0x54] sm:$0xf] %v732
      %797 = vst [vmem:[%s261 + $0x58] sm:$0xf] %v733
      %798 = vst [vmem:[%s261 + $0x5c] sm:$0xf] %v734
      %799 = vst [vmem:[%s261 + $0x60] sm:$0xf] %v735
      %800 = vst [vmem:[%s261 + $0x64] sm:$0xf] %v736
      %801 = vst [vmem:[%s261 + $0x68] sm:$0xf] %v737
      %802 = vst [vmem:[%s261 + $0x6c] sm:$0xf] %v738
      %803 = vst [vmem:[%s261 + $0x70] sm:$0xf] %v739
      %804 = vst [vmem:[%s261 + $0x74] sm:$0xf] %v740
      %805 = vst [vmem:[%s261 + $0x78] sm:$0xf] %v741
      %806 = vst [vmem:[%s261 + $0x7c] sm:$0xf] %v742
      %v807 = vld [vmem:[%s3] sm:$0xf]
      %v808 = vld [vmem:[%s3 + $0x4] sm:$0xf]
      %v809 = vld [vmem:[%s3 + $0x8] sm:$0xf]
      %v810 = vld [vmem:[%s3 + $0xc] sm:$0xf]
      %v811 = vld [vmem:[%s3 + $0x10] sm:$0xf]
      %v812 = vld [vmem:[%s3 + $0x14] sm:$0xf]
      %v813 = vld [vmem:[%s3 + $0x18] sm:$0xf]
      %v814 = vld [vmem:[%s3 + $0x1c] sm:$0xf]
      %v815 = vld [vmem:[%s3 + $0x20] sm:$0xf]
      %v816 = vld [vmem:[%s3 + $0x24] sm:$0xf]
      %v817 = vld [vmem:[%s3 + $0x28] sm:$0xf]
      %v818 = vld [vmem:[%s3 + $0x2c] sm:$0xf]
      %v819 = vld [vmem:[%s3 + $0x30] sm:$0xf]
      %v820 = vld [vmem:[%s3 + $0x34] sm:$0xf]
      %v821 = vld [vmem:[%s3 + $0x38] sm:$0xf]
      %v822 = vld [vmem:[%s3 + $0x3c] sm:$0xf]
      %v823 = vld [vmem:[%s4] sm:$0x1]
      %v825 = vlaneseq
      %v826 = vshrl.u32 %v825, 7
      %v827 = vsub.s32 0, %v826
      %v828 = vrot.slane %v823, %v827
      %v846 = vunpack.c.l.b16 %v807
      %v847 = vunpack.c.l.b16 %v808
      %v848 = vunpack.c.l.b16 %v809
      %v849 = vunpack.c.l.b16 %v810
      %v850 = vunpack.c.l.b16 %v811
      %v851 = vunpack.c.l.b16 %v812
      %v852 = vunpack.c.l.b16 %v813
      %v853 = vunpack.c.l.b16 %v814
      %v854 = vunpack.c.l.b16 %v815
      %v855 = vunpack.c.l.b16 %v816
      %v856 = vunpack.c.l.b16 %v817
      %v857 = vunpack.c.l.b16 %v818
      %v858 = vunpack.c.l.b16 %v819
      %v859 = vunpack.c.l.b16 %v820
      %v860 = vunpack.c.l.b16 %v821
      %v861 = vunpack.c.l.b16 %v822
      %v862 = vpack.c.b16 %v847, %v846
      %v863 = vpack.c.b16 %v849, %v848
      %v864 = vpack.c.b16 %v851, %v850
      %v865 = vpack.c.b16 %v853, %v852
      %v866 = vpack.c.b16 %v855, %v854
      %v867 = vpack.c.b16 %v857, %v856
      %v868 = vpack.c.b16 %v859, %v858
      %v869 = vpack.c.b16 %v861, %v860
      %878 = vmatprep.subr.bf16.mxu0 0
      %879 = vmatpush1.bf16.msra.mxu0 %v869
      %880 = vmatprep.subr.bf16.mxu0 0
      %881 = vmatpush1.bf16.msra.mxu0 %v868
      %882 = vmatprep.subr.bf16.mxu0 0
      %883 = vmatpush1.bf16.msra.mxu0 %v867
      %884 = vmatprep.subr.bf16.mxu0 0
      %885 = vmatpush1.bf16.msra.mxu0 %v866
      %886 = vmatprep.subr.bf16.mxu0 0
      %887 = vmatpush1.bf16.msra.mxu0 %v865
      %888 = vmatprep.subr.bf16.mxu0 0
      %889 = vmatpush1.bf16.msra.mxu0 %v864
      %890 = vmatprep.subr.bf16.mxu0 0
      %891 = vmatpush1.bf16.msra.mxu0 %v863
      %892 = vmatprep.subr.bf16.mxu0 0
      %893 = vmatpush1.bf16.msra.mxu0 %v862
      %894 = vmatprep.subr.bf16.mxu0 0
      %895 = vmatpush2.bf16.msra.mxu0 0
      %896 = vmatprep.subr.bf16.mxu0 0
      %897 = vmatpush2.bf16.msra.mxu0 0
      %898 = vmatprep.subr.bf16.mxu0 0
      %899 = vmatpush2.bf16.msra.mxu0 0
      %900 = vmatprep.subr.bf16.mxu0 0
      %901 = vmatpush2.bf16.msra.mxu0 0
      %902 = vmatprep.subr.bf16.mxu0 0
      %903 = vmatpush2.bf16.msra.mxu0 0
      %904 = vmatprep.subr.bf16.mxu0 0
      %905 = vmatpush2.bf16.msra.mxu0 0
      %906 = vmatprep.subr.bf16.mxu0 0
      %907 = vmatpush2.bf16.msra.mxu0 0
      %908 = vmatprep.subr.bf16.mxu0 0
      %909 = vmatpush2.bf16.msra.mxu0 0
      %910 = vmatprep.mubr.bf16.mxu0 0
      %911 = vmatmul.mubr.bf16.gmra.mxu0 %v647
      %v912 = vpop.f32.mrf.mxu0
      %v913 = vadd.f32 %v828, %v912
      %v914 = vpop.f32.mrf.mxu0
      %v915 = vpop.f32.mrf.mxu0
      %v916 = vadd.f32 %v828, %v915
      %v917 = vpop.f32.mrf.mxu0
      %918 = vmatprep.mubr.bf16.mxu0 0
      %919 = vmatmul.mubr.bf16.gmra.mxu0 %v648
      %v920 = vpop.f32.mrf.mxu0
      %v921 = vadd.f32 %v828, %v920
      %v922 = vpop.f32.mrf.mxu0
      %v923 = vpop.f32.mrf.mxu0
      %v924 = vadd.f32 %v828, %v923
      %v925 = vpop.f32.mrf.mxu0
      %926 = vmatprep.mubr.bf16.mxu0 0
      %927 = vmatmul.mubr.bf16.gmra.mxu0 %v649
      %v928 = vpop.f32.mrf.mxu0
      %v929 = vadd.f32 %v828, %v928
      %v930 = vpop.f32.mrf.mxu0
      %v931 = vpop.f32.mrf.mxu0
      %v932 = vadd.f32 %v828, %v931
      %v933 = vpop.f32.mrf.mxu0
      %934 = vmatprep.mubr.bf16.mxu0 0
      %935 = vmatmul.mubr.bf16.gmra.mxu0 %v650
      %v936 = vpop.f32.mrf.mxu0
      %v937 = vadd.f32 %v828, %v936
      %v938 = vpop.f32.mrf.mxu0
      %v939 = vpop.f32.mrf.mxu0
      %v940 = vadd.f32 %v828, %v939
      %v941 = vpop.f32.mrf.mxu0
      %942 = vmatprep.mubr.bf16.mxu0 0
      %943 = vmatmul.mubr.bf16.gmra.mxu0 %v651
      %v944 = vpop.f32.mrf.mxu0
      %v945 = vadd.f32 %v828, %v944
      %v946 = vpop.f32.mrf.mxu0
      %v947 = vpop.f32.mrf.mxu0
      %v948 = vadd.f32 %v828, %v947
      %v949 = vpop.f32.mrf.mxu0
      %950 = vmatprep.mubr.bf16.mxu0 0
      %951 = vmatmul.mubr.bf16.gmra.mxu0 %v652
      %v952 = vpop.f32.mrf.mxu0
      %v953 = vadd.f32 %v828, %v952
      %v954 = vpop.f32.mrf.mxu0
      %v955 = vpop.f32.mrf.mxu0
      %v956 = vadd.f32 %v828, %v955
      %v957 = vpop.f32.mrf.mxu0
      %958 = vmatprep.mubr.bf16.mxu0 0
      %959 = vmatmul.mubr.bf16.gmra.mxu0 %v653
      %v960 = vpop.f32.mrf.mxu0
      %v961 = vadd.f32 %v828, %v960
      %v962 = vpop.f32.mrf.mxu0
      %v963 = vpop.f32.mrf.mxu0
      %v964 = vadd.f32 %v828, %v963
      %v965 = vpop.f32.mrf.mxu0
      %966 = vmatprep.mubr.bf16.mxu0 0
      %967 = vmatmul.mubr.bf16.gmra.mxu0 %v654
      %v968 = vpop.f32.mrf.mxu0
      %v969 = vadd.f32 %v828, %v968
      %v970 = vpop.f32.mrf.mxu0
      %v971 = vpop.f32.mrf.mxu0
      %v972 = vadd.f32 %v828, %v971
      %v973 = vpop.f32.mrf.mxu0
      %974 = vmatprep.mubr.bf16.mxu0 0
      %975 = vmatmul.mubr.bf16.gmra.mxu0 %v655
      %v976 = vpop.f32.mrf.mxu0
      %v977 = vadd.f32 %v828, %v976
      %v978 = vpop.f32.mrf.mxu0
      %v979 = vpop.f32.mrf.mxu0
      %v980 = vadd.f32 %v828, %v979
      %v981 = vpop.f32.mrf.mxu0
      %982 = vmatprep.mubr.bf16.mxu0 0
      %983 = vmatmul.mubr.bf16.gmra.mxu0 %v656
      %v984 = vpop.f32.mrf.mxu0
      %v985 = vadd.f32 %v828, %v984
      %v986 = vpop.f32.mrf.mxu0
      %v987 = vpop.f32.mrf.mxu0
      %v988 = vadd.f32 %v828, %v987
      %v989 = vpop.f32.mrf.mxu0
      %990 = vmatprep.mubr.bf16.mxu0 0
      %991 = vmatmul.mubr.bf16.gmra.mxu0 %v657
      %v992 = vpop.f32.mrf.mxu0
      %v993 = vadd.f32 %v828, %v992
      %v994 = vpop.f32.mrf.mxu0
      %v995 = vpop.f32.mrf.mxu0
      %v996 = vadd.f32 %v828, %v995
      %v997 = vpop.f32.mrf.mxu0
      %998 = vmatprep.mubr.bf16.mxu0 0
      %999 = vmatmul.mubr.bf16.gmra.mxu0 %v658
      %v1000 = vpop.f32.mrf.mxu0
      %v1001 = vadd.f32 %v828, %v1000
      %v1002 = vpop.f32.mrf.mxu0
      %v1003 = vpop.f32.mrf.mxu0
      %v1004 = vadd.f32 %v828, %v1003
      %v1005 = vpop.f32.mrf.mxu0
      %1006 = vmatprep.mubr.bf16.mxu0 0
      %1007 = vmatmul.mubr.bf16.gmra.mxu0 %v659
      %v1008 = vpop.f32.mrf.mxu0
      %v1009 = vadd.f32 %v828, %v1008
      %v1010 = vpop.f32.mrf.mxu0
      %v1011 = vpop.f32.mrf.mxu0
      %v1012 = vadd.f32 %v828, %v1011
      %v1013 = vpop.f32.mrf.mxu0
      %1014 = vmatprep.mubr.bf16.mxu0 0
      %1015 = vmatmul.mubr.bf16.gmra.mxu0 %v660
      %v1016 = vpop.f32.mrf.mxu0
      %v1017 = vadd.f32 %v828, %v1016
      %v1018 = vpop.f32.mrf.mxu0
      %v1019 = vpop.f32.mrf.mxu0
      %v1020 = vadd.f32 %v828, %v1019
      %v1021 = vpop.f32.mrf.mxu0
      %1022 = vmatprep.mubr.bf16.mxu0 0
      %1023 = vmatmul.mubr.bf16.gmra.mxu0 %v661
      %v1024 = vpop.f32.mrf.mxu0
      %v1025 = vadd.f32 %v828, %v1024
      %v1026 = vpop.f32.mrf.mxu0
      %v1027 = vpop.f32.mrf.mxu0
      %v1028 = vadd.f32 %v828, %v1027
      %v1029 = vpop.f32.mrf.mxu0
      %1030 = vmatprep.mubr.bf16.mxu0 0
      %1031 = vmatmul.mubr.bf16.gmra.mxu0 %v662
      %v1032 = vpop.f32.mrf.mxu0
      %v1033 = vadd.f32 %v828, %v1032
      %v1034 = vpop.f32.mrf.mxu0
      %v1035 = vpop.f32.mrf.mxu0
      %v1036 = vadd.f32 %v828, %v1035
      %v1037 = vpop.f32.mrf.mxu0
      %1038 = vdwg.mxu0
      %v1039 = vmax.f32 %v913, 0.0
      %v1040 = vmax.f32 %v916, 0.0
      %v1041 = vmax.f32 %v921, 0.0
      %v1042 = vmax.f32 %v924, 0.0
      %v1043 = vmax.f32 %v929, 0.0
      %v1044 = vmax.f32 %v932, 0.0
      %v1045 = vmax.f32 %v937, 0.0
      %v1046 = vmax.f32 %v940, 0.0
      %v1047 = vmax.f32 %v945, 0.0
      %v1048 = vmax.f32 %v948, 0.0
      %v1049 = vmax.f32 %v953, 0.0
      %v1050 = vmax.f32 %v956, 0.0
      %v1051 = vmax.f32 %v961, 0.0
      %v1052 = vmax.f32 %v964, 0.0
      %v1053 = vmax.f32 %v969, 0.0
      %v1054 = vmax.f32 %v972, 0.0
      %v1055 = vmax.f32 %v977, 0.0
      %v1056 = vmax.f32 %v980, 0.0
      %v1057 = vmax.f32 %v985, 0.0
      %v1058 = vmax.f32 %v988, 0.0
      %v1059 = vmax.f32 %v993, 0.0
      %v1060 = vmax.f32 %v996, 0.0
      %v1061 = vmax.f32 %v1001, 0.0
      %v1062 = vmax.f32 %v1004, 0.0
      %v1063 = vmax.f32 %v1009, 0.0
      %v1064 = vmax.f32 %v1012, 0.0
      %v1065 = vmax.f32 %v1017, 0.0
      %v1066 = vmax.f32 %v1020, 0.0
      %v1067 = vmax.f32 %v1025, 0.0
      %v1068 = vmax.f32 %v1028, 0.0
      %v1069 = vmax.f32 %v1033, 0.0
      %v1070 = vmax.f32 %v1036, 0.0
      %v1071 = vpack.c.bf16 %v1040, %v1039
      %v1072 = vpack.c.bf16 %v1042, %v1041
      %v1073 = vpack.c.bf16 %v1044, %v1043
      %v1074 = vpack.c.bf16 %v1046, %v1045
      %v1075 = vpack.c.bf16 %v1048, %v1047
      %v1076 = vpack.c.bf16 %v1050, %v1049
      %v1077 = vpack.c.bf16 %v1052, %v1051
      %v1078 = vpack.c.bf16 %v1054, %v1053
      %v1079 = vpack.c.bf16 %v1056, %v1055
      %v1080 = vpack.c.bf16 %v1058, %v1057
      %v1081 = vpack.c.bf16 %v1060, %v1059
      %v1082 = vpack.c.bf16 %v1062, %v1061
      %v1083 = vpack.c.bf16 %v1064, %v1063
      %v1084 = vpack.c.bf16 %v1066, %v1065
      %v1085 = vpack.c.bf16 %v1068, %v1067
      %v1086 = vpack.c.bf16 %v1070, %v1069
      %v1103 = vunpack.c.l.b16 %v1071
      %v1104 = vunpack.c.h.b16 %v1071
      %v1105 = vunpack.c.l.b16 %v1072
      %v1106 = vunpack.c.h.b16 %v1072
      %v1107 = vunpack.c.l.b16 %v1073
      %v1108 = vunpack.c.h.b16 %v1073
      %v1109 = vunpack.c.l.b16 %v1074
      %v1110 = vunpack.c.h.b16 %v1074
      %v1111 = vunpack.c.l.b16 %v1075
      %v1112 = vunpack.c.h.b16 %v1075
      %v1113 = vunpack.c.l.b16 %v1076
      %v1114 = vunpack.c.h.b16 %v1076
      %v1115 = vunpack.c.l.b16 %v1077
      %v1116 = vunpack.c.h.b16 %v1077
      %v1117 = vunpack.c.l.b16 %v1078
      %v1118 = vunpack.c.h.b16 %v1078
      %v1119 = vunpack.c.l.b16 %v1079
      %v1120 = vunpack.c.h.b16 %v1079
      %v1121 = vunpack.c.l.b16 %v1080
      %v1122 = vunpack.c.h.b16 %v1080
      %v1123 = vunpack.c.l.b16 %v1081
      %v1124 = vunpack.c.h.b16 %v1081
      %v1125 = vunpack.c.l.b16 %v1082
      %v1126 = vunpack.c.h.b16 %v1082
      %v1127 = vunpack.c.l.b16 %v1083
      %v1128 = vunpack.c.h.b16 %v1083
      %v1129 = vunpack.c.l.b16 %v1084
      %v1130 = vunpack.c.h.b16 %v1084
      %v1131 = vunpack.c.l.b16 %v1085
      %v1132 = vunpack.c.h.b16 %v1085
      %v1133 = vunpack.c.l.b16 %v1086
      %v1134 = vunpack.c.h.b16 %v1086
      %v1135 = vpack.c.b16 %v1103, %v1103
      %v1136 = vpack.c.b16 %v1104, %v1104
      %v1137 = vpack.c.b16 %v1105, %v1105
      %v1138 = vpack.c.b16 %v1106, %v1106
      %v1139 = vpack.c.b16 %v1107, %v1107
      %v1140 = vpack.c.b16 %v1108, %v1108
      %v1141 = vpack.c.b16 %v1109, %v1109
      %v1142 = vpack.c.b16 %v1110, %v1110
      %v1143 = vpack.c.b16 %v1111, %v1111
      %v1144 = vpack.c.b16 %v1112, %v1112
      %v1145 = vpack.c.b16 %v1113, %v1113
      %v1146 = vpack.c.b16 %v1114, %v1114
      %v1147 = vpack.c.b16 %v1115, %v1115
      %v1148 = vpack.c.b16 %v1116, %v1116
      %v1149 = vpack.c.b16 %v1117, %v1117
      %v1150 = vpack.c.b16 %v1118, %v1118
      %v1151 = vpack.c.b16 %v1119, %v1119
      %v1152 = vpack.c.b16 %v1120, %v1120
      %v1153 = vpack.c.b16 %v1121, %v1121
      %v1154 = vpack.c.b16 %v1122, %v1122
      %v1155 = vpack.c.b16 %v1123, %v1123
      %v1156 = vpack.c.b16 %v1124, %v1124
      %v1157 = vpack.c.b16 %v1125, %v1125
      %v1158 = vpack.c.b16 %v1126, %v1126
      %v1159 = vpack.c.b16 %v1127, %v1127
      %v1160 = vpack.c.b16 %v1128, %v1128
      %v1161 = vpack.c.b16 %v1129, %v1129
      %v1162 = vpack.c.b16 %v1130, %v1130
      %v1163 = vpack.c.b16 %v1131, %v1131
      %v1164 = vpack.c.b16 %v1132, %v1132
      %v1165 = vpack.c.b16 %v1133, %v1133
      %v1166 = vpack.c.b16 %v1134, %v1134
      %1199 = vst [vmem:[%s267] sm:$0xf] %v1135
      %1200 = vst [vmem:[%s267 + $0x4] sm:$0xf] %v1136
      %1201 = vst [vmem:[%s267 + $0x8] sm:$0xf] %v1137
      %1202 = vst [vmem:[%s267 + $0xc] sm:$0xf] %v1138
      %1203 = vst [vmem:[%s267 + $0x10] sm:$0xf] %v1139
      %1204 = vst [vmem:[%s267 + $0x14] sm:$0xf] %v1140
      %1205 = vst [vmem:[%s267 + $0x18] sm:$0xf] %v1141
      %1206 = vst [vmem:[%s267 + $0x1c] sm:$0xf] %v1142
      %1207 = vst [vmem:[%s267 + $0x20] sm:$0xf] %v1143
      %1208 = vst [vmem:[%s267 + $0x24] sm:$0xf] %v1144
      %1209 = vst [vmem:[%s267 + $0x28] sm:$0xf] %v1145
      %1210 = vst [vmem:[%s267 + $0x2c] sm:$0xf] %v1146
      %1211 = vst [vmem:[%s267 + $0x30] sm:$0xf] %v1147
      %1212 = vst [vmem:[%s267 + $0x34] sm:$0xf] %v1148
      %1213 = vst [vmem:[%s267 + $0x38] sm:$0xf] %v1149
      %1214 = vst [vmem:[%s267 + $0x3c] sm:$0xf] %v1150
      %1215 = vst [vmem:[%s267 + $0x40] sm:$0xf] %v1151
      %1216 = vst [vmem:[%s267 + $0x44] sm:$0xf] %v1152
      %1217 = vst [vmem:[%s267 + $0x48] sm:$0xf] %v1153
      %1218 = vst [vmem:[%s267 + $0x4c] sm:$0xf] %v1154
      %1219 = vst [vmem:[%s267 + $0x50] sm:$0xf] %v1155
      %1220 = vst [vmem:[%s267 + $0x54] sm:$0xf] %v1156
      %1221 = vst [vmem:[%s267 + $0x58] sm:$0xf] %v1157
      %1222 = vst [vmem:[%s267 + $0x5c] sm:$0xf] %v1158
      %1223 = vst [vmem:[%s267 + $0x60] sm:$0xf] %v1159
      %1224 = vst [vmem:[%s267 + $0x64] sm:$0xf] %v1160
      %1225 = vst [vmem:[%s267 + $0x68] sm:$0xf] %v1161
      %1226 = vst [vmem:[%s267 + $0x6c] sm:$0xf] %v1162
      %1227 = vst [vmem:[%s267 + $0x70] sm:$0xf] %v1163
      %1228 = vst [vmem:[%s267 + $0x74] sm:$0xf] %v1164
      %1229 = vst [vmem:[%s267 + $0x78] sm:$0xf] %v1165
      %1230 = vst [vmem:[%s267 + $0x7c] sm:$0xf] %v1166
      %s1231 = smul.u32 32, %s18
      %p1232 = scmp.lt.s32.totalorder %s1231, 63
      %s1233 = scalar_select %p1232, %s1231, 63
      %s1234 = smul.addr %s1233, 4
      %s1235 = scalar_lea.vmem %s5, %s1234
      %s1236 = smul.u32 32, %s18
      %p1237 = scmp.lt.s32.totalorder %s1236, 63
      %s1238 = scalar_select %p1237, %s1236, 63
      %s1239 = smul.addr %s1238, 4
      %s1240 = scalar_lea.vmem %s6, %s1239
      // Predicated region
      $region41: #{_lambda_.3} parent=39 // pred_check
        %p1241 = pneg %p146
      $region42: #{_lambda_.3} parent=39 // pred_check_branch
        %1243 = sbr.rel (%p1241) target = $region44
      $region43: #{_lambda_.3} parent=39 // pred_region
        %s1244 = smul.u32 32, %s18
      $region44: #{_lambda_.3} parent=39 // pred_fallthru
        _
      // Predicated region
      $region45: #{_lambda_.3} parent=39 // pred_check
        %p1245 = pneg %p172
      $region46: #{_lambda_.3} parent=39 // pred_check_branch
        %1247 = sbr.rel (%p1245) target = $region48
      $region47: #{_lambda_.3} parent=39 // pred_region
        %s1248 = smul.u32 32, %s18
      $region48: #{_lambda_.3} parent=39 // pred_fallthru
        _
    $region40: #{_lambda_.3} parent=5 // pred_fallthru
      _
    %p1249 = scmp.le.s32.totalorder 2, %s13
    // Predicated region
    $region49: #{_lambda_.3} parent=5 // pred_check
      %p1250 = pneg %p1249
    $region50: #{_lambda_.3} parent=5 // pred_check_branch
      %1252 = sbr.rel (%p1250) target = $region52
    $region51: #{_lambda_.3} parent=5 // pred_region
      %s1253 = ssub.s32 %s13, 2
      // Predicated region
      $region53: #{_lambda_.3} parent=51 // pred_check
        %p1254 = pneg %p152
      $region54: #{_lambda_.3} parent=51 // pred_check_branch
        %1256 = sbr.rel (%p1254) target = $region56
      $region55: #{_lambda_.3} parent=51 // pred_region
        %s1257 = smul.u32 32, %s19
        %p1258 = scmp.lt.s32.totalorder %s1257, 63
        %s1259 = scalar_select %p1258, %s1257, 63
        %s1260 = smul.addr %s1259, 4
        %s1261 = scalar_lea.vmem %s5, %s1260
      $region56: #{_lambda_.3} parent=51 // pred_fallthru
        _
      // Predicated region
      $region57: #{_lambda_.3} parent=51 // pred_check
        %p1262 = pneg %p178
      $region58: #{_lambda_.3} parent=51 // pred_check_branch
        %1264 = sbr.rel (%p1262) target = $region60
      $region59: #{_lambda_.3} parent=51 // pred_region
        %s1265 = smul.u32 32, %s19
        %p1266 = scmp.lt.s32.totalorder %s1265, 63
        %s1267 = scalar_select %p1266, %s1265, 63
        %s1268 = smul.addr %s1267, 4
        %s1269 = scalar_lea.vmem %s6, %s1268
      $region60: #{_lambda_.3} parent=51 // pred_fallthru
        _
    $region52: #{_lambda_.3} parent=5 // pred_fallthru
      _
  $region6: #{_lambda_.3} parent=0 // loop_footer
    %s17 = sadd.s32 1, %s13
  $region7: #{_lambda_.3} parent=0 // loop_footer_branch
    %12 = sbr.rel target = $region3
  $region8: #{_lambda_.3} parent=0 // loop_exit
    _

// kernel: _lambda_.5
$region0: #{_lambda_.5}
  #allocation0 [shape = 'u32[]', space=smem, size = 0x4, offset = 0x4, fixed_abs, tag = 'smem constant byte address 0x4 - core index']
  #allocation1 [shape = 'u32[144,128]{1,0:T(1,128)}', space=vmem, size = 0x12000, scoped, tag = 'internal scratch']
  %s0 = inlined_call_operand.vmem [shape: bf16[512,128], index: 0, kind: input, shape index: {}]
  %s1 = inlined_call_operand.vmem [shape: bf16[512,128], index: 1, kind: input, shape index: {}]
  %s2 = inlined_call_operand.vmem [shape: bf16[128,128], index: 2, kind: input, shape index: {}]
  %s3 = inlined_call_operand.vmem [shape: f32[1,128], index: 3, kind: input, shape index: {}, may-alias: {3,5,7}]
  %s4 = inlined_call_operand.vmem [shape: bf16[128,128], index: 4, kind: input, shape index: {}]
  %s5 = inlined_call_operand.vmem [shape: f32[1,128], index: 5, kind: input, shape index: {}, may-alias: {3,5,7}]
  %s6 = inlined_call_operand.vmem [shape: bf16[128,128], index: 6, kind: input, shape index: {}]
  %s7 = inlined_call_operand.vmem [shape: f32[1,128], index: 7, kind: input, shape index: {}, may-alias: {3,5,7}]
  %s8 = inlined_call_operand.hbm [shape: f32[2,1,128], index: 8, kind: output, shape index: {}]
  %s9 = sld [smem:[#allocation0]]
  $region65: #{_lambda_.5} parent=0
    _
  %s11 = ssub.s32 1, %s9
  %s12 = scalar_select 0, %s11, %s9
  $region1: #{_lambda_.5} parent=0
    #allocation2 [shape = 'u8[1024]{0}', space=vmem, size = 0x400, scoped, tag = 'output window, operand 0']
    #allocation3 [shape = 's32[2]{0}', space=sflag, size = 0x8, scoped, tag = 'scoped memory for _lambda_.5']
    %13 = vsyncpa [#allocation3], 0
    %s14 = scalar_lea.sflag [#allocation3], 1
    %15 = vsyncpa %s14, 0
    loop: start=0, step=1, limit=4
    $region2: #{_lambda_.5} parent=1 // loop_pre_header
      _
    $region3: #{_lambda_.5} parent=1 // loop_header
      %s17 = sphi 0, %s21
      %p18 = scmp.ge.s32.totalorder %s17, 4
      %s27 = sphi 0, %s29
      %s30 = sphi 0, %s27
      %s31 = sphi 0, %s30
      %s47 = sphi 0, %s31
      %s53 = sphi 0, %s55
      %s56 = sphi 0, %s53
      %s57 = sphi 0, %s56
      %s73 = sphi 0, %s57
      %s77 = sphi 0, %s77
      %s79 = sphi 0, %s77
      %s80 = sphi 0, %s79
      %s94 = sphi 0, %s80
      %s98 = sphi 0, %s98
      %s100 = sphi 0, %s98
      %s101 = sphi 0, %s100
      %s115 = sphi 0, %s101
      %s119 = sphi 0, %s119
      %s121 = sphi 0, %s119
      %s122 = sphi 0, %s121
      %s136 = sphi 0, %s122
      %s140 = sphi 0, %s140
      %s142 = sphi 0, %s140
      %s143 = sphi 0, %s142
      %s157 = sphi 0, %s143
      %s161 = sphi 0, %s161
      %s163 = sphi 0, %s161
      %s164 = sphi 0, %s163
      %s178 = sphi 0, %s164
      %s182 = sphi 0, %s182
      %s184 = sphi 0, %s182
      %s185 = sphi 0, %s184
      %s199 = sphi 0, %s185
      %s205 = sphi 0, %s207
      %s208 = sphi 0, %s205
      %s209 = sphi 0, %s208
      %s225 = sphi 0, %s209
    $region4: #{_lambda_.5} parent=1 // loop_header_branch
      %20 = sbr.rel (%p18) target = $region8
    $region5: #{_lambda_.5} parent=1 // loop_body
      %s22 = ssub.s32 %s17, 1
      %s23 = ssub.s32 %s17, 2
      %s24 = sadd.s32 %s17, 1
      %s25 = ssub.s32 %s17, %s24
      %p26 = scmp.eq.s32.totalorder %s25, 0
      %s28 = sadd.s32 %s27, 1
      %s29 = scalar_select %p26, %s27, %s28
      %p32 = pneg %p26
      %p33 = scmp.eq.s32.totalorder %s17, 1
      %p34 = por %p32, %p33
      %p35 = scmp.ne.s32.totalorder %s27, %s30
      %p36 = scmp.eq.s32.totalorder %s17, 0
      %p37 = por %p35, %p36
      %p38 = scmp.ne.s32.totalorder %s27, %s30
      %p39 = scmp.eq.s32.totalorder %s22, 1
      %p40 = por %p38, %p39
      %p41 = scmp.ne.s32.totalorder %s30, %s31
      %p42 = scmp.eq.s32.totalorder %s22, 0
      %p43 = por %p41, %p42
      %p44 = scmp.ne.s32.totalorder %s30, %s31
      %p45 = scmp.eq.s32.totalorder %s23, 1
      %p46 = por %p44, %p45
      %p48 = scmp.ne.s32.totalorder %s31, %s47
      %p49 = scmp.eq.s32.totalorder %s23, 0
      %p50 = por %p48, %p49
      %s51 = ssub.s32 %s17, %s24
      %p52 = scmp.eq.s32.totalorder %s51, 0
      %s54 = sadd.s32 %s53, 1
      %s55 = scalar_select %p52, %s53, %s54
      %p58 = pneg %p52
      %p59 = scmp.eq.s32.totalorder %s17, 1
      %p60 = por %p58, %p59
      %p61 = scmp.ne.s32.totalorder %s53, %s56
      %p62 = scmp.eq.s32.totalorder %s17, 0
      %p63 = por %p61, %p62
      %p64 = scmp.ne.s32.totalorder %s53, %s56
      %p65 = scmp.eq.s32.totalorder %s22, 1
      %p66 = por %p64, %p65
      %p67 = scmp.ne.s32.totalorder %s56, %s57
      %p68 = scmp.eq.s32.totalorder %s22, 0
      %p69 = por %p67, %p68
      %p70 = scmp.ne.s32.totalorder %s56, %s57
      %p71 = scmp.eq.s32.totalorder %s23, 1
      %p72 = por %p70, %p71
      %p74 = scmp.ne.s32.totalorder %s57, %s73
      %p75 = scmp.eq.s32.totalorder %s23, 0
      %p76 = por %p74, %p75
      %s78 = sadd.s32 %s77, 1
      %p81 = scmp.eq.s32.totalorder %s17, 1
      %p82 = scmp.ne.s32.totalorder %s77, %s79
      %p83 = scmp.eq.s32.totalorder %s17, 0
      %p84 = por %p82, %p83
      %p85 = scmp.ne.s32.totalorder %s77, %s79
      %p86 = scmp.eq.s32.totalorder %s22, 1
      %p87 = por %p85, %p86
      %p88 = scmp.ne.s32.totalorder %s79, %s80
      %p89 = scmp.eq.s32.totalorder %s22, 0
      %p90 = por %p88, %p89
      %p91 = scmp.ne.s32.totalorder %s79, %s80
      %p92 = scmp.eq.s32.totalorder %s23, 1
      %p93 = por %p91, %p92
      %p95 = scmp.ne.s32.totalorder %s80, %s94
      %p96 = scmp.eq.s32.totalorder %s23, 0
      %p97 = por %p95, %p96
      %s99 = sadd.s32 %s98, 1
      %p102 = scmp.eq.s32.totalorder %s17, 1
      %p103 = scmp.ne.s32.totalorder %s98, %s100
      %p104 = scmp.eq.s32.totalorder %s17, 0
      %p105 = por %p103, %p104
      %p106 = scmp.ne.s32.totalorder %s98, %s100
      %p107 = scmp.eq.s32.totalorder %s22, 1
      %p108 = por %p106, %p107
      %p109 = scmp.ne.s32.totalorder %s100, %s101
      %p110 = scmp.eq.s32.totalorder %s22, 0
      %p111 = por %p109, %p110
      %p112 = scmp.ne.s32.totalorder %s100, %s101
      %p113 = scmp.eq.s32.totalorder %s23, 1
      %p114 = por %p112, %p113
      %p116 = scmp.ne.s32.totalorder %s101, %s115
      %p117 = scmp.eq.s32.totalorder %s23, 0
      %p118 = por %p116, %p117
      %s120 = sadd.s32 %s119, 1
      %p123 = scmp.eq.s32.totalorder %s17, 1
      %p124 = scmp.ne.s32.totalorder %s119, %s121
      %p125 = scmp.eq.s32.totalorder %s17, 0
      %p126 = por %p124, %p125
      %p127 = scmp.ne.s32.totalorder %s119, %s121
      %p128 = scmp.eq.s32.totalorder %s22, 1
      %p129 = por %p127, %p128
      %p130 = scmp.ne.s32.totalorder %s121, %s122
      %p131 = scmp.eq.s32.totalorder %s22, 0
      %p132 = por %p130, %p131
      %p133 = scmp.ne.s32.totalorder %s121, %s122
      %p134 = scmp.eq.s32.totalorder %s23, 1
      %p135 = por %p133, %p134
      %p137 = scmp.ne.s32.totalorder %s122, %s136
      %p138 = scmp.eq.s32.totalorder %s23, 0
      %p139 = por %p137, %p138
      %s141 = sadd.s32 %s140, 1
      %p144 = scmp.eq.s32.totalorder %s17, 1
      %p145 = scmp.ne.s32.totalorder %s140, %s142
      %p146 = scmp.eq.s32.totalorder %s17, 0
      %p147 = por %p145, %p146
      %p148 = scmp.ne.s32.totalorder %s140, %s142
      %p149 = scmp.eq.s32.totalorder %s22, 1
      %p150 = por %p148, %p149
      %p151 = scmp.ne.s32.totalorder %s142, %s143
      %p152 = scmp.eq.s32.totalorder %s22, 0
      %p153 = por %p151, %p152
      %p154 = scmp.ne.s32.totalorder %s142, %s143
      %p155 = scmp.eq.s32.totalorder %s23, 1
      %p156 = por %p154, %p155
      %p158 = scmp.ne.s32.totalorder %s143, %s157
      %p159 = scmp.eq.s32.totalorder %s23, 0
      %p160 = por %p158, %p159
      %s162 = sadd.s32 %s161, 1
      %p165 = scmp.eq.s32.totalorder %s17, 1
      %p166 = scmp.ne.s32.totalorder %s161, %s163
      %p167 = scmp.eq.s32.totalorder %s17, 0
      %p168 = por %p166, %p167
      %p169 = scmp.ne.s32.totalorder %s161, %s163
      %p170 = scmp.eq.s32.totalorder %s22, 1
      %p171 = por %p169, %p170
      %p172 = scmp.ne.s32.totalorder %s163, %s164
      %p173 = scmp.eq.s32.totalorder %s22, 0
      %p174 = por %p172, %p173
      %p175 = scmp.ne.s32.totalorder %s163, %s164
      %p176 = scmp.eq.s32.totalorder %s23, 1
      %p177 = por %p175, %p176
      %p179 = scmp.ne.s32.totalorder %s164, %s178
      %p180 = scmp.eq.s32.totalorder %s23, 0
      %p181 = por %p179, %p180
      %s183 = sadd.s32 %s182, 1
      %p186 = scmp.eq.s32.totalorder %s17, 1
      %p187 = scmp.ne.s32.totalorder %s182, %s184
      %p188 = scmp.eq.s32.totalorder %s17, 0
      %p189 = por %p187, %p188
      %p190 = scmp.ne.s32.totalorder %s182, %s184
      %p191 = scmp.eq.s32.totalorder %s22, 1
      %p192 = por %p190, %p191
      %p193 = scmp.ne.s32.totalorder %s184, %s185
      %p194 = scmp.eq.s32.totalorder %s22, 0
      %p195 = por %p193, %p194
      %p196 = scmp.ne.s32.totalorder %s184, %s185
      %p197 = scmp.eq.s32.totalorder %s23, 1
      %p198 = por %p196, %p197
      %p200 = scmp.ne.s32.totalorder %s185, %s199
      %p201 = scmp.eq.s32.totalorder %s23, 0
      %p202 = por %p200, %p201
      %s203 = ssub.s32 %s17, %s24
      %p204 = scmp.eq.s32.totalorder %s203, 0
      %s206 = sadd.s32 %s205, 1
      %s207 = scalar_select %p204, %s205, %s206
      %p210 = pneg %p204
      %p211 = scmp.eq.s32.totalorder %s17, 1
      %p212 = por %p210, %p211
      %p213 = scmp.ne.s32.totalorder %s205, %s208
      %p214 = scmp.eq.s32.totalorder %s17, 0
      %p215 = por %p213, %p214
      %p216 = scmp.ne.s32.totalorder %s205, %s208
      %p217 = scmp.eq.s32.totalorder %s22, 1
      %p218 = por %p216, %p217
      %p219 = scmp.ne.s32.totalorder %s208, %s209
      %p220 = scmp.eq.s32.totalorder %s22, 0
      %p221 = por %p219, %p220
      %p222 = scmp.ne.s32.totalorder %s208, %s209
      %p223 = scmp.eq.s32.totalorder %s23, 1
      %p224 = por %p222, %p223
      %p226 = scmp.ne.s32.totalorder %s209, %s225
      %p227 = scmp.eq.s32.totalorder %s23, 0
      %p228 = por %p226, %p227
      %p229 = scmp.le.s32.totalorder 1, %s17
      %p230 = scmp.lt.s32.totalorder %s17, 3
      %p231 = pnand %p229, %p230
      %p232 = pneg %p231
      // Predicated region
      $region9: #{_lambda_.5} parent=5 // pred_check
        _
      $region10: #{_lambda_.5} parent=5 // pred_check_branch
        %234 = sbr.rel (%p231) target = $region12
      $region11: #{_lambda_.5} parent=5 // pred_region
        %s235 = ssub.s32 %s17, 1
        // Predicated region
        $region13: #{_lambda_.5} parent=11 // pred_check
          %p236 = pneg %p90
        $region14: #{_lambda_.5} parent=11 // pred_check_branch
          %238 = sbr.rel (%p236) target = $region16
        $region15: #{_lambda_.5} parent=11 // pred_region
          _
        $region16: #{_lambda_.5} parent=11 // pred_fallthru
          _
        // Predicated region
        $region17: #{_lambda_.5} parent=11 // pred_check
          %p239 = pneg %p111
        $region18: #{_lambda_.5} parent=11 // pred_check_branch
          %241 = sbr.rel (%p239) target = $region20
        $region19: #{_lambda_.5} parent=11 // pred_region
          _
        $region20: #{_lambda_.5} parent=11 // pred_fallthru
          _
        // Predicated region
        $region21: #{_lambda_.5} parent=11 // pred_check
          %p242 = pneg %p132
        $region22: #{_lambda_.5} parent=11 // pred_check_branch
          %244 = sbr.rel (%p242) target = $region24
        $region23: #{_lambda_.5} parent=11 // pred_region
          _
        $region24: #{_lambda_.5} parent=11 // pred_fallthru
          _
        // Predicated region
        $region25: #{_lambda_.5} parent=11 // pred_check
          %p245 = pneg %p153
        $region26: #{_lambda_.5} parent=11 // pred_check_branch
          %247 = sbr.rel (%p245) target = $region28
        $region27: #{_lambda_.5} parent=11 // pred_region
          _
        $region28: #{_lambda_.5} parent=11 // pred_fallthru
          _
        // Predicated region
        $region29: #{_lambda_.5} parent=11 // pred_check
          %p248 = pneg %p174
        $region30: #{_lambda_.5} parent=11 // pred_check_branch
          %250 = sbr.rel (%p248) target = $region32
        $region31: #{_lambda_.5} parent=11 // pred_region
          _
        $region32: #{_lambda_.5} parent=11 // pred_fallthru
          _
        // Predicated region
        $region33: #{_lambda_.5} parent=11 // pred_check
          %p251 = pneg %p195
        $region34: #{_lambda_.5} parent=11 // pred_check_branch
          %253 = sbr.rel (%p251) target = $region36
        $region35: #{_lambda_.5} parent=11 // pred_region
          _
        $region36: #{_lambda_.5} parent=11 // pred_fallthru
          _
      $region12: #{_lambda_.5} parent=5 // pred_fallthru
        _
      %p254 = scmp.lt.s32.totalorder %s17, 2
      // Predicated region
      $region37: #{_lambda_.5} parent=5 // pred_check
        %p255 = pneg %p254
      $region38: #{_lambda_.5} parent=5 // pred_check_branch
        %257 = sbr.rel (%p255) target = $region40
      $region39: #{_lambda_.5} parent=5 // pred_region
        // Predicated region
        $region41: #{_lambda_.5} parent=39 // pred_check
          %p258 = pneg %p37
        $region42: #{_lambda_.5} parent=39 // pred_check_branch
          %260 = sbr.rel (%p258) target = $region44
        $region43: #{_lambda_.5} parent=39 // pred_region
          %s261 = smul.u32 32, %s17
          %p262 = scmp.lt.s32.totalorder %s261, 63
          %s263 = scalar_select %p262, %s261, 63
          %s264 = smul.addr %s263, 4
          %s265 = scalar_lea.vmem %s0, %s264
          %s266 = smul.u32 32, %s17
        $region44: #{_lambda_.5} parent=39 // pred_fallthru
          _
        // Predicated region
        $region45: #{_lambda_.5} parent=39 // pred_check
          %p267 = pneg %p63
        $region46: #{_lambda_.5} parent=39 // pred_check_branch
          %269 = sbr.rel (%p267) target = $region48
        $region47: #{_lambda_.5} parent=39 // pred_region
          %s270 = smul.u32 32, %s17
          %p271 = scmp.lt.s32.totalorder %s270, 63
          %s272 = scalar_select %p271, %s270, 63
          %s273 = smul.addr %s272, 4
          %s274 = scalar_lea.vmem %s1, %s273
          %s275 = smul.u32 32, %s17
        $region48: #{_lambda_.5} parent=39 // pred_fallthru
          _
      $region40: #{_lambda_.5} parent=5 // pred_fallthru
        _
      %p276 = scmp.le.s32.totalorder 1, %s17
      %p277 = scmp.lt.s32.totalorder %s17, 3
      %p278 = pnand %p276, %p277
      %p279 = pneg %p278
      // Predicated region
      $region49: #{_lambda_.5} parent=5 // pred_check
        _
      $region50: #{_lambda_.5} parent=5 // pred_check_branch
        %281 = sbr.rel (%p278) target = $region52
      $region51: #{_lambda_.5} parent=5 // pred_region
        %s282 = ssub.s32 %s17, 1
        %s283 = smul.u32 32, %s22
        %p284 = scmp.lt.s32.totalorder %s283, 63
        %s285 = scalar_select %p284, %s283, 63
        %s286 = smul.addr %s285, 4
        %s287 = scalar_lea.vmem %s0, %s286
        %p288 = pneg %p43
        %p289 = pneg %p40
        %s290 = smul.u32 32, %s22
        %p291 = scmp.lt.s32.totalorder %s290, 63
        %s292 = scalar_select %p291, %s290, 63
        %s293 = smul.addr %s292, 4
        %s294 = scalar_lea.vmem %s1, %s293
        %p295 = pneg %p69
        %p296 = pneg %p66
        %p297 = pneg %p90
        %p298 = pneg %p87
        %p299 = pneg %p111
        %p300 = pneg %p108
        %p301 = pneg %p132
        %p302 = pneg %p129
        %p303 = pneg %p153
        %p304 = pneg %p150
        %p305 = pneg %p174
        %p306 = pneg %p171
        %p307 = pneg %p195
        %p308 = pneg %p192
        %p309 = pneg %p221
        %p310 = pneg %p218
        %s311 = sand.u32 %s208, 1
        %s312 = scalar_lea.sflag [#allocation3], %s311
        %s313 = sand.u32 %s208, 1
        %s314 = scalar_lea.vmem [#allocation2], %s313
        %s315 = smul.u32 32, %s22
        %p316 = scmp.lt.s32.totalorder %s315, 63
        %s317 = scalar_select %p316, %s315, 63
        %s318 = smul.addr %s317, 4
        %s319 = scalar_lea.vmem %s0, %s318
        %s320 = smul.u32 32, %s22
        %s321 = smul.u32 32, %s22
        %p322 = scmp.lt.s32.totalorder %s321, 63
        %s323 = scalar_select %p322, %s321, 63
        %s324 = smul.addr %s323, 4
        %s325 = scalar_lea.vmem %s1, %s324
        %s326 = smul.u32 32, %s22
        %v328 = vld [vmem:[%s319] sm:$0xf]
        %v329 = vld [vmem:[%s319 + $0x4] sm:$0xf]
        %v330 = vld [vmem:[%s319 + $0x8] sm:$0xf]
        %v331 = vld [vmem:[%s319 + $0xc] sm:$0xf]
        %v332 = vld [vmem:[%s319 + $0x10] sm:$0xf]
        %v333 = vld [vmem:[%s319 + $0x14] sm:$0xf]
        %v334 = vld [vmem:[%s319 + $0x18] sm:$0xf]
        %v335 = vld [vmem:[%s319 + $0x1c] sm:$0xf]
        %v336 = vld [vmem:[%s319 + $0x20] sm:$0xf]
        %v337 = vld [vmem:[%s319 + $0x24] sm:$0xf]
        %v338 = vld [vmem:[%s319 + $0x28] sm:$0xf]
        %v339 = vld [vmem:[%s319 + $0x2c] sm:$0xf]
        %v340 = vld [vmem:[%s319 + $0x30] sm:$0xf]
        %v341 = vld [vmem:[%s319 + $0x34] sm:$0xf]
        %v342 = vld [vmem:[%s319 + $0x38] sm:$0xf]
        %v343 = vld [vmem:[%s319 + $0x3c] sm:$0xf]
        %v344 = vld [vmem:[%s319 + $0x40] sm:$0xf]
        %v345 = vld [vmem:[%s319 + $0x44] sm:$0xf]
        %v346 = vld [vmem:[%s319 + $0x48] sm:$0xf]
        %v347 = vld [vmem:[%s319 + $0x4c] sm:$0xf]
        %v348 = vld [vmem:[%s319 + $0x50] sm:$0xf]
        %v349 = vld [vmem:[%s319 + $0x54] sm:$0xf]
        %v350 = vld [vmem:[%s319 + $0x58] sm:$0xf]
        %v351 = vld [vmem:[%s319 + $0x5c] sm:$0xf]
        %v352 = vld [vmem:[%s319 + $0x60] sm:$0xf]
        %v353 = vld [vmem:[%s319 + $0x64] sm:$0xf]
        %v354 = vld [vmem:[%s319 + $0x68] sm:$0xf]
        %v355 = vld [vmem:[%s319 + $0x6c] sm:$0xf]
        %v356 = vld [vmem:[%s319 + $0x70] sm:$0xf]
        %v357 = vld [vmem:[%s319 + $0x74] sm:$0xf]
        %v358 = vld [vmem:[%s319 + $0x78] sm:$0xf]
        %v359 = vld [vmem:[%s319 + $0x7c] sm:$0xf]
        %v360 = vld [vmem:[%s2] sm:$0xf]
        %v361 = vld [vmem:[%s2 + $0x4] sm:$0xf]
        %v362 = vld [vmem:[%s2 + $0x8] sm:$0xf]
        %v363 = vld [vmem:[%s2 + $0xc] sm:$0xf]
        %v364 = vld [vmem:[%s2 + $0x10] sm:$0xf]
        %v365 = vld [vmem:[%s2 + $0x14] sm:$0xf]
        %v366 = vld [vmem:[%s2 + $0x18] sm:$0xf]
        %v367 = vld [vmem:[%s2 + $0x1c] sm:$0xf]
        %v368 = vld [vmem:[%s2 + $0x20] sm:$0xf]
        %v369 = vld [vmem:[%s2 + $0x24] sm:$0xf]
        %v370 = vld [vmem:[%s2 + $0x28] sm:$0xf]
        %v371 = vld [vmem:[%s2 + $0x2c] sm:$0xf]
        %v372 = vld [vmem:[%s2 + $0x30] sm:$0xf]
        %v373 = vld [vmem:[%s2 + $0x34] sm:$0xf]
        %v374 = vld [vmem:[%s2 + $0x38] sm:$0xf]
        %v375 = vld [vmem:[%s2 + $0x3c] sm:$0xf]
        %v376 = vld [vmem:[%s325] sm:$0xf]
        %v377 = vld [vmem:[%s325 + $0x4] sm:$0xf]
        %v378 = vld [vmem:[%s325 + $0x8] sm:$0xf]
        %v379 = vld [vmem:[%s325 + $0xc] sm:$0xf]
        %v380 = vld [vmem:[%s325 + $0x10] sm:$0xf]
        %v381 = vld [vmem:[%s325 + $0x14] sm:$0xf]
        %v382 = vld [vmem:[%s325 + $0x18] sm:$0xf]
        %v383 = vld [vmem:[%s325 + $0x1c] sm:$0xf]
        %v384 = vld [vmem:[%s325 + $0x20] sm:$0xf]
        %v385 = vld [vmem:[%s325 + $0x24] sm:$0xf]
        %v386 = vld [vmem:[%s325 + $0x28] sm:$0xf]
        %v387 = vld [vmem:[%s325 + $0x2c] sm:$0xf]
        %v388 = vld [vmem:[%s325 + $0x30] sm:$0xf]
        %v389 = vld [vmem:[%s325 + $0x34] sm:$0xf]
        %v390 = vld [vmem:[%s325 + $0x38] sm:$0xf]
        %v391 = vld [vmem:[%s325 + $0x3c] sm:$0xf]
        %v392 = vld [vmem:[%s325 + $0x40] sm:$0xf]
        %v393 = vld [vmem:[%s325 + $0x44] sm:$0xf]
        %v394 = vld [vmem:[%s325 + $0x48] sm:$0xf]
        %v395 = vld [vmem:[%s325 + $0x4c] sm:$0xf]
        %v396 = vld [vmem:[%s325 + $0x50] sm:$0xf]
        %v397 = vld [vmem:[%s325 + $0x54] sm:$0xf]
        %v398 = vld [vmem:[%s325 + $0x58] sm:$0xf]
        %v399 = vld [vmem:[%s325 + $0x5c] sm:$0xf]
        %v400 = vld [vmem:[%s325 + $0x60] sm:$0xf]
        %v401 = vld [vmem:[%s325 + $0x64] sm:$0xf]
        %v402 = vld [vmem:[%s325 + $0x68] sm:$0xf]
        %v403 = vld [vmem:[%s325 + $0x6c] sm:$0xf]
        %v404 = vld [vmem:[%s325 + $0x70] sm:$0xf]
        %v405 = vld [vmem:[%s325 + $0x74] sm:$0xf]
        %v406 = vld [vmem:[%s325 + $0x78] sm:$0xf]
        %v407 = vld [vmem:[%s325 + $0x7c] sm:$0xf]
        %v408 = vld [vmem:[%s4] sm:$0xf]
        %v409 = vld [vmem:[%s4 + $0x4] sm:$0xf]
        %v410 = vld [vmem:[%s4 + $0x8] sm:$0xf]
        %v411 = vld [vmem:[%s4 + $0xc] sm:$0xf]
        %v412 = vld [vmem:[%s4 + $0x10] sm:$0xf]
        %v413 = vld [vmem:[%s4 + $0x14] sm:$0xf]
        %v414 = vld [vmem:[%s4 + $0x18] sm:$0xf]
        %v415 = vld [vmem:[%s4 + $0x1c] sm:$0xf]
        %v416 = vld [vmem:[%s4 + $0x20] sm:$0xf]
        %v417 = vld [vmem:[%s4 + $0x24] sm:$0xf]
        %v418 = vld [vmem:[%s4 + $0x28] sm:$0xf]
        %v419 = vld [vmem:[%s4 + $0x2c] sm:$0xf]
        %v420 = vld [vmem:[%s4 + $0x30] sm:$0xf]
        %v421 = vld [vmem:[%s4 + $0x34] sm:$0xf]
        %v422 = vld [vmem:[%s4 + $0x38] sm:$0xf]
        %v423 = vld [vmem:[%s4 + $0x3c] sm:$0xf]
        %v456 = vunpack.c.l.b16 %v376
        %v457 = vunpack.c.l.b16 %v377
        %v458 = vunpack.c.l.b16 %v378
        %v459 = vunpack.c.l.b16 %v379
        %v460 = vunpack.c.l.b16 %v380
        %v461 = vunpack.c.l.b16 %v381
        %v462 = vunpack.c.l.b16 %v382
        %v463 = vunpack.c.l.b16 %v383
        %v464 = vunpack.c.l.b16 %v384
        %v465 = vunpack.c.l.b16 %v385
        %v466 = vunpack.c.l.b16 %v386
        %v467 = vunpack.c.l.b16 %v387
        %v468 = vunpack.c.l.b16 %v388
        %v469 = vunpack.c.l.b16 %v389
        %v470 = vunpack.c.l.b16 %v390
        %v471 = vunpack.c.l.b16 %v391
        %v472 = vunpack.c.l.b16 %v392
        %v473 = vunpack.c.l.b16 %v393
        %v474 = vunpack.c.l.b16 %v394
        %v475 = vunpack.c.l.b16 %v395
        %v476 = vunpack.c.l.b16 %v396
        %v477 = vunpack.c.l.b16 %v397
        %v478 = vunpack.c.l.b16 %v398
        %v479 = vunpack.c.l.b16 %v399
        %v480 = vunpack.c.l.b16 %v400
        %v481 = vunpack.c.l.b16 %v401
        %v482 = vunpack.c.l.b16 %v402
        %v483 = vunpack.c.l.b16 %v403
        %v484 = vunpack.c.l.b16 %v404
        %v485 = vunpack.c.l.b16 %v405
        %v486 = vunpack.c.l.b16 %v406
        %v487 = vunpack.c.l.b16 %v407
        %v488 = vpack.c.b16 %v457, %v456
        %v489 = vpack.c.b16 %v459, %v458
        %v490 = vpack.c.b16 %v461, %v460
        %v491 = vpack.c.b16 %v463, %v462
        %v492 = vpack.c.b16 %v465, %v464
        %v493 = vpack.c.b16 %v467, %v466
        %v494 = vpack.c.b16 %v469, %v468
        %v495 = vpack.c.b16 %v471, %v470
        %v496 = vpack.c.b16 %v473, %v472
        %v497 = vpack.c.b16 %v475, %v474
        %v498 = vpack.c.b16 %v477, %v476
        %v499 = vpack.c.b16 %v479, %v478
        %v500 = vpack.c.b16 %v481, %v480
        %v501 = vpack.c.b16 %v483, %v482
        %v502 = vpack.c.b16 %v485, %v484
        %v503 = vpack.c.b16 %v487, %v486
        %v536 = vunpack.c.l.b16 %v408
        %v537 = vunpack.c.l.b16 %v409
        %v538 = vunpack.c.l.b16 %v410
        %v539 = vunpack.c.l.b16 %v411
        %v540 = vunpack.c.l.b16 %v412
        %v541 = vunpack.c.l.b16 %v413
        %v542 = vunpack.c.l.b16 %v414
        %v543 = vunpack.c.l.b16 %v415
        %v544 = vunpack.c.l.b16 %v416
        %v545 = vunpack.c.l.b16 %v417
        %v546 = vunpack.c.l.b16 %v418
        %v547 = vunpack.c.l.b16 %v419
        %v548 = vunpack.c.l.b16 %v420
        %v549 = vunpack.c.l.b16 %v421
        %v550 = vunpack.c.l.b16 %v422
        %v551 = vunpack.c.l.b16 %v423
        %v552 = vpack.c.b16 %v537, %v536
        %v553 = vpack.c.b16 %v539, %v538
        %v554 = vpack.c.b16 %v541, %v540
        %v555 = vpack.c.b16 %v543, %v542
        %v556 = vpack.c.b16 %v545, %v544
        %v557 = vpack.c.b16 %v547, %v546
        %v558 = vpack.c.b16 %v549, %v548
        %v559 = vpack.c.b16 %v551, %v550
        %568 = vmatprep.subr.bf16.mxu0 0
        %569 = vmatpush1.bf16.msra.mxu0 %v559
        %570 = vmatprep.subr.bf16.mxu0 0
        %571 = vmatpush1.bf16.msra.mxu0 %v558
        %572 = vmatprep.subr.bf16.mxu0 0
        %573 = vmatpush1.bf16.msra.mxu0 %v557
        %574 = vmatprep.subr.bf16.mxu0 0
        %575 = vmatpush1.bf16.msra.mxu0 %v556
        %576 = vmatprep.subr.bf16.mxu0 0
        %577 = vmatpush1.bf16.msra.mxu0 %v555
        %578 = vmatprep.subr.bf16.mxu0 0
        %579 = vmatpush1.bf16.msra.mxu0 %v554
        %580 = vmatprep.subr.bf16.mxu0 0
        %581 = vmatpush1.bf16.msra.mxu0 %v553
        %582 = vmatprep.subr.bf16.mxu0 0
        %583 = vmatpush1.bf16.msra.mxu0 %v552
        %584 = vmatprep.subr.bf16.mxu0 0
        %585 = vmatpush2.bf16.msra.mxu0 0
        %586 = vmatprep.subr.bf16.mxu0 0
        %587 = vmatpush2.bf16.msra.mxu0 0
        %588 = vmatprep.subr.bf16.mxu0 0
        %589 = vmatpush2.bf16.msra.mxu0 0
        %590 = vmatprep.subr.bf16.mxu0 0
        %591 = vmatpush2.bf16.msra.mxu0 0
        %592 = vmatprep.subr.bf16.mxu0 0
        %593 = vmatpush2.bf16.msra.mxu0 0
        %594 = vmatprep.subr.bf16.mxu0 0
        %595 = vmatpush2.bf16.msra.mxu0 0
        %596 = vmatprep.subr.bf16.mxu0 0
        %597 = vmatpush2.bf16.msra.mxu0 0
        %598 = vmatprep.subr.bf16.mxu0 0
        %599 = vmatpush2.bf16.msra.mxu0 0
        %600 = vmatprep.mubr.bf16.mxu0 0
        %601 = vmatmul.mubr.bf16.gmra.mxu0 %v488
        %v602 = vpop.f32.mrf.mxu0
        %v603 = vadd.f32 0.0, %v602
        %v604 = vpop.f32.mrf.mxu0
        %v605 = vpop.f32.mrf.mxu0
        %v606 = vadd.f32 0.0, %v605
        %v607 = vpop.f32.mrf.mxu0
        %608 = vmatprep.mubr.bf16.mxu0 0
        %609 = vmatmul.mubr.bf16.gmra.mxu0 %v489
        %v610 = vpop.f32.mrf.mxu0
        %v611 = vadd.f32 0.0, %v610
        %v612 = vpop.f32.mrf.mxu0
        %v613 = vpop.f32.mrf.mxu0
        %v614 = vadd.f32 0.0, %v613
        %v615 = vpop.f32.mrf.mxu0
        %616 = vmatprep.mubr.bf16.mxu0 0
        %617 = vmatmul.mubr.bf16.gmra.mxu0 %v490
        %v618 = vpop.f32.mrf.mxu0
        %v619 = vadd.f32 0.0, %v618
        %v620 = vpop.f32.mrf.mxu0
        %v621 = vpop.f32.mrf.mxu0
        %v622 = vadd.f32 0.0, %v621
        %v623 = vpop.f32.mrf.mxu0
        %624 = vmatprep.mubr.bf16.mxu0 0
        %625 = vmatmul.mubr.bf16.gmra.mxu0 %v491
        %v626 = vpop.f32.mrf.mxu0
        %v627 = vadd.f32 0.0, %v626
        %v628 = vpop.f32.mrf.mxu0
        %v629 = vpop.f32.mrf.mxu0
        %v630 = vadd.f32 0.0, %v629
        %v631 = vpop.f32.mrf.mxu0
        %632 = vmatprep.mubr.bf16.mxu0 0
        %633 = vmatmul.mubr.bf16.gmra.mxu0 %v492
        %v634 = vpop.f32.mrf.mxu0
        %v635 = vadd.f32 0.0, %v634
        %v636 = vpop.f32.mrf.mxu0
        %v637 = vpop.f32.mrf.mxu0
        %v638 = vadd.f32 0.0, %v637
        %v639 = vpop.f32.mrf.mxu0
        %640 = vmatprep.mubr.bf16.mxu0 0
        %641 = vmatmul.mubr.bf16.gmra.mxu0 %v493
        %v642 = vpop.f32.mrf.mxu0
        %v643 = vadd.f32 0.0, %v642
        %v644 = vpop.f32.mrf.mxu0
        %v645 = vpop.f32.mrf.mxu0
        %v646 = vadd.f32 0.0, %v645
        %v647 = vpop.f32.mrf.mxu0
        %648 = vmatprep.mubr.bf16.mxu0 0
        %649 = vmatmul.mubr.bf16.gmra.mxu0 %v494
        %v650 = vpop.f32.mrf.mxu0
        %v651 = vadd.f32 0.0, %v650
        %v652 = vpop.f32.mrf.mxu0
        %v653 = vpop.f32.mrf.mxu0
        %v654 = vadd.f32 0.0, %v653
        %v655 = vpop.f32.mrf.mxu0
        %656 = vmatprep.mubr.bf16.mxu0 0
        %657 = vmatmul.mubr.bf16.gmra.mxu0 %v495
        %v658 = vpop.f32.mrf.mxu0
        %v659 = vadd.f32 0.0, %v658
        %v660 = vpop.f32.mrf.mxu0
        %v661 = vpop.f32.mrf.mxu0
        %v662 = vadd.f32 0.0, %v661
        %v663 = vpop.f32.mrf.mxu0
        %664 = vmatprep.mubr.bf16.mxu0 0
        %665 = vmatmul.mubr.bf16.gmra.mxu0 %v496
        %v666 = vpop.f32.mrf.mxu0
        %v667 = vadd.f32 0.0, %v666
        %v668 = vpop.f32.mrf.mxu0
        %v669 = vpop.f32.mrf.mxu0
        %v670 = vadd.f32 0.0, %v669
        %v671 = vpop.f32.mrf.mxu0
        %672 = vmatprep.mubr.bf16.mxu0 0
        %673 = vmatmul.mubr.bf16.gmra.mxu0 %v497
        %v674 = vpop.f32.mrf.mxu0
        %v675 = vadd.f32 0.0, %v674
        %v676 = vpop.f32.mrf.mxu0
        %v677 = vpop.f32.mrf.mxu0
        %v678 = vadd.f32 0.0, %v677
        %v679 = vpop.f32.mrf.mxu0
        %680 = vmatprep.mubr.bf16.mxu0 0
        %681 = vmatmul.mubr.bf16.gmra.mxu0 %v498
        %v682 = vpop.f32.mrf.mxu0
        %v683 = vadd.f32 0.0, %v682
        %v684 = vpop.f32.mrf.mxu0
        %v685 = vpop.f32.mrf.mxu0
        %v686 = vadd.f32 0.0, %v685
        %v687 = vpop.f32.mrf.mxu0
        %688 = vmatprep.mubr.bf16.mxu0 0
        %689 = vmatmul.mubr.bf16.gmra.mxu0 %v499
        %v690 = vpop.f32.mrf.mxu0
        %v691 = vadd.f32 0.0, %v690
        %v692 = vpop.f32.mrf.mxu0
        %v693 = vpop.f32.mrf.mxu0
        %v694 = vadd.f32 0.0, %v693
        %v695 = vpop.f32.mrf.mxu0
        %696 = vmatprep.mubr.bf16.mxu0 0
        %697 = vmatmul.mubr.bf16.gmra.mxu0 %v500
        %v698 = vpop.f32.mrf.mxu0
        %v699 = vadd.f32 0.0, %v698
        %v700 = vpop.f32.mrf.mxu0
        %v701 = vpop.f32.mrf.mxu0
        %v702 = vadd.f32 0.0, %v701
        %v703 = vpop.f32.mrf.mxu0
        %704 = vmatprep.mubr.bf16.mxu0 0
        %705 = vmatmul.mubr.bf16.gmra.mxu0 %v501
        %v706 = vpop.f32.mrf.mxu0
        %v707 = vadd.f32 0.0, %v706
        %v708 = vpop.f32.mrf.mxu0
        %v709 = vpop.f32.mrf.mxu0
        %v710 = vadd.f32 0.0, %v709
        %v711 = vpop.f32.mrf.mxu0
        %712 = vmatprep.mubr.bf16.mxu0 0
        %713 = vmatmul.mubr.bf16.gmra.mxu0 %v502
        %v714 = vpop.f32.mrf.mxu0
        %v715 = vadd.f32 0.0, %v714
        %v716 = vpop.f32.mrf.mxu0
        %v717 = vpop.f32.mrf.mxu0
        %v718 = vadd.f32 0.0, %v717
        %v719 = vpop.f32.mrf.mxu0
        %720 = vmatprep.mubr.bf16.mxu0 0
        %721 = vmatmul.mubr.bf16.gmra.mxu0 %v503
        %v722 = vpop.f32.mrf.mxu0
        %v723 = vadd.f32 0.0, %v722
        %v724 = vpop.f32.mrf.mxu0
        %v725 = vpop.f32.mrf.mxu0
        %v726 = vadd.f32 0.0, %v725
        %v727 = vpop.f32.mrf.mxu0
        %728 = vdwg.mxu0
        %v761 = vunpack.c.l.b16 %v328
        %v762 = vunpack.c.l.b16 %v329
        %v763 = vunpack.c.l.b16 %v330
        %v764 = vunpack.c.l.b16 %v331
        %v765 = vunpack.c.l.b16 %v332
        %v766 = vunpack.c.l.b16 %v333
        %v767 = vunpack.c.l.b16 %v334
        %v768 = vunpack.c.l.b16 %v335
        %v769 = vunpack.c.l.b16 %v336
        %v770 = vunpack.c.l.b16 %v337
        %v771 = vunpack.c.l.b16 %v338
        %v772 = vunpack.c.l.b16 %v339
        %v773 = vunpack.c.l.b16 %v340
        %v774 = vunpack.c.l.b16 %v341
        %v775 = vunpack.c.l.b16 %v342
        %v776 = vunpack.c.l.b16 %v343
        %v777 = vunpack.c.l.b16 %v344
        %v778 = vunpack.c.l.b16 %v345
        %v779 = vunpack.c.l.b16 %v346
        %v780 = vunpack.c.l.b16 %v347
        %v781 = vunpack.c.l.b16 %v348
        %v782 = vunpack.c.l.b16 %v349
        %v783 = vunpack.c.l.b16 %v350
        %v784 = vunpack.c.l.b16 %v351
        %v785 = vunpack.c.l.b16 %v352
        %v786 = vunpack.c.l.b16 %v353
        %v787 = vunpack.c.l.b16 %v354
        %v788 = vunpack.c.l.b16 %v355
        %v789 = vunpack.c.l.b16 %v356
        %v790 = vunpack.c.l.b16 %v357
        %v791 = vunpack.c.l.b16 %v358
        %v792 = vunpack.c.l.b16 %v359
        %v793 = vpack.c.b16 %v762, %v761
        %v794 = vpack.c.b16 %v764, %v763
        %v795 = vpack.c.b16 %v766, %v765
        %v796 = vpack.c.b16 %v768, %v767
        %v797 = vpack.c.b16 %v770, %v769
        %v798 = vpack.c.b16 %v772, %v771
        %v799 = vpack.c.b16 %v774, %v773
        %v800 = vpack.c.b16 %v776, %v775
        %v801 = vpack.c.b16 %v778, %v777
        %v802 = vpack.c.b16 %v780, %v779
        %v803 = vpack.c.b16 %v782, %v781
        %v804 = vpack.c.b16 %v784, %v783
        %v805 = vpack.c.b16 %v786, %v785
        %v806 = vpack.c.b16 %v788, %v787
        %v807 = vpack.c.b16 %v790, %v789
        %v808 = vpack.c.b16 %v792, %v791
        %v841 = vunpack.c.l.b16 %v360
        %v842 = vunpack.c.l.b16 %v361
        %v843 = vunpack.c.l.b16 %v362
        %v844 = vunpack.c.l.b16 %v363
        %v845 = vunpack.c.l.b16 %v364
        %v846 = vunpack.c.l.b16 %v365
        %v847 = vunpack.c.l.b16 %v366
        %v848 = vunpack.c.l.b16 %v367
        %v849 = vunpack.c.l.b16 %v368
        %v850 = vunpack.c.l.b16 %v369
        %v851 = vunpack.c.l.b16 %v370
        %v852 = vunpack.c.l.b16 %v371
        %v853 = vunpack.c.l.b16 %v372
        %v854 = vunpack.c.l.b16 %v373
        %v855 = vunpack.c.l.b16 %v374
        %v856 = vunpack.c.l.b16 %v375
        %v857 = vpack.c.b16 %v842, %v841
        %v858 = vpack.c.b16 %v844, %v843
        %v859 = vpack.c.b16 %v846, %v845
        %v860 = vpack.c.b16 %v848, %v847
        %v861 = vpack.c.b16 %v850, %v849
        %v862 = vpack.c.b16 %v852, %v851
        %v863 = vpack.c.b16 %v854, %v853
        %v864 = vpack.c.b16 %v856, %v855
        %873 = vmatprep.subr.bf16.mxu0 0
        %874 = vmatpush1.bf16.msra.mxu0 %v864
        %875 = vmatprep.subr.bf16.mxu0 0
        %876 = vmatpush1.bf16.msra.mxu0 %v863
        %877 = vmatprep.subr.bf16.mxu0 0
        %878 = vmatpush1.bf16.msra.mxu0 %v862
        %879 = vmatprep.subr.bf16.mxu0 0
        %880 = vmatpush1.bf16.msra.mxu0 %v861
        %881 = vmatprep.subr.bf16.mxu0 0
        %882 = vmatpush1.bf16.msra.mxu0 %v860
        %883 = vmatprep.subr.bf16.mxu0 0
        %884 = vmatpush1.bf16.msra.mxu0 %v859
        %885 = vmatprep.subr.bf16.mxu0 0
        %886 = vmatpush1.bf16.msra.mxu0 %v858
        %887 = vmatprep.subr.bf16.mxu0 0
        %888 = vmatpush1.bf16.msra.mxu0 %v857
        %889 = vmatprep.subr.bf16.mxu0 0
        %890 = vmatpush2.bf16.msra.mxu0 0
        %891 = vmatprep.subr.bf16.mxu0 0
        %892 = vmatpush2.bf16.msra.mxu0 0
        %893 = vmatprep.subr.bf16.mxu0 0
        %894 = vmatpush2.bf16.msra.mxu0 0
        %895 = vmatprep.subr.bf16.mxu0 0
        %896 = vmatpush2.bf16.msra.mxu0 0
        %897 = vmatprep.subr.bf16.mxu0 0
        %898 = vmatpush2.bf16.msra.mxu0 0
        %899 = vmatprep.subr.bf16.mxu0 0
        %900 = vmatpush2.bf16.msra.mxu0 0
        %901 = vmatprep.subr.bf16.mxu0 0
        %902 = vmatpush2.bf16.msra.mxu0 0
        %903 = vmatprep.subr.bf16.mxu0 0
        %904 = vmatpush2.bf16.msra.mxu0 0
        %905 = vmatprep.mubr.bf16.mxu0 0
        %906 = vmatmul.mubr.bf16.gmra.mxu0 %v793
        %v907 = vpop.f32.mrf.mxu0
        %v908 = vadd.f32 %v603, %v907
        %v909 = vpop.f32.mrf.mxu0
        %v910 = vpop.f32.mrf.mxu0
        %v911 = vadd.f32 %v606, %v910
        %v912 = vpop.f32.mrf.mxu0
        %913 = vmatprep.mubr.bf16.mxu0 0
        %914 = vmatmul.mubr.bf16.gmra.mxu0 %v794
        %v915 = vpop.f32.mrf.mxu0
        %v916 = vadd.f32 %v611, %v915
        %v917 = vpop.f32.mrf.mxu0
        %v918 = vpop.f32.mrf.mxu0
        %v919 = vadd.f32 %v614, %v918
        %v920 = vpop.f32.mrf.mxu0
        %921 = vmatprep.mubr.bf16.mxu0 0
        %922 = vmatmul.mubr.bf16.gmra.mxu0 %v795
        %v923 = vpop.f32.mrf.mxu0
        %v924 = vadd.f32 %v619, %v923
        %v925 = vpop.f32.mrf.mxu0
        %v926 = vpop.f32.mrf.mxu0
        %v927 = vadd.f32 %v622, %v926
        %v928 = vpop.f32.mrf.mxu0
        %929 = vmatprep.mubr.bf16.mxu0 0
        %930 = vmatmul.mubr.bf16.gmra.mxu0 %v796
        %v931 = vpop.f32.mrf.mxu0
        %v932 = vadd.f32 %v627, %v931
        %v933 = vpop.f32.mrf.mxu0
        %v934 = vpop.f32.mrf.mxu0
        %v935 = vadd.f32 %v630, %v934
        %v936 = vpop.f32.mrf.mxu0
        %937 = vmatprep.mubr.bf16.mxu0 0
        %938 = vmatmul.mubr.bf16.gmra.mxu0 %v797
        %v939 = vpop.f32.mrf.mxu0
        %v940 = vadd.f32 %v635, %v939
        %v941 = vpop.f32.mrf.mxu0
        %v942 = vpop.f32.mrf.mxu0
        %v943 = vadd.f32 %v638, %v942
        %v944 = vpop.f32.mrf.mxu0
        %945 = vmatprep.mubr.bf16.mxu0 0
        %946 = vmatmul.mubr.bf16.gmra.mxu0 %v798
        %v947 = vpop.f32.mrf.mxu0
        %v948 = vadd.f32 %v643, %v947
        %v949 = vpop.f32.mrf.mxu0
        %v950 = vpop.f32.mrf.mxu0
        %v951 = vadd.f32 %v646, %v950
        %v952 = vpop.f32.mrf.mxu0
        %953 = vmatprep.mubr.bf16.mxu0 0
        %954 = vmatmul.mubr.bf16.gmra.mxu0 %v799
        %v955 = vpop.f32.mrf.mxu0
        %v956 = vadd.f32 %v651, %v955
        %v957 = vpop.f32.mrf.mxu0
        %v958 = vpop.f32.mrf.mxu0
        %v959 = vadd.f32 %v654, %v958
        %v960 = vpop.f32.mrf.mxu0
        %961 = vmatprep.mubr.bf16.mxu0 0
        %962 = vmatmul.mubr.bf16.gmra.mxu0 %v800
        %v963 = vpop.f32.mrf.mxu0
        %v964 = vadd.f32 %v659, %v963
        %v965 = vpop.f32.mrf.mxu0
        %v966 = vpop.f32.mrf.mxu0
        %v967 = vadd.f32 %v662, %v966
        %v968 = vpop.f32.mrf.mxu0
        %969 = vmatprep.mubr.bf16.mxu0 0
        %970 = vmatmul.mubr.bf16.gmra.mxu0 %v801
        %v971 = vpop.f32.mrf.mxu0
        %v972 = vadd.f32 %v667, %v971
        %v973 = vpop.f32.mrf.mxu0
        %v974 = vpop.f32.mrf.mxu0
        %v975 = vadd.f32 %v670, %v974
        %v976 = vpop.f32.mrf.mxu0
        %977 = vmatprep.mubr.bf16.mxu0 0
        %978 = vmatmul.mubr.bf16.gmra.mxu0 %v802
        %v979 = vpop.f32.mrf.mxu0
        %v980 = vadd.f32 %v675, %v979
        %v981 = vpop.f32.mrf.mxu0
        %v982 = vpop.f32.mrf.mxu0
        %v983 = vadd.f32 %v678, %v982
        %v984 = vpop.f32.mrf.mxu0
        %985 = vmatprep.mubr.bf16.mxu0 0
        %986 = vmatmul.mubr.bf16.gmra.mxu0 %v803
        %v987 = vpop.f32.mrf.mxu0
        %v988 = vadd.f32 %v683, %v987
        %v989 = vpop.f32.mrf.mxu0
        %v990 = vpop.f32.mrf.mxu0
        %v991 = vadd.f32 %v686, %v990
        %v992 = vpop.f32.mrf.mxu0
        %993 = vmatprep.mubr.bf16.mxu0 0
        %994 = vmatmul.mubr.bf16.gmra.mxu0 %v804
        %v995 = vpop.f32.mrf.mxu0
        %v996 = vadd.f32 %v691, %v995
        %v997 = vpop.f32.mrf.mxu0
        %v998 = vpop.f32.mrf.mxu0
        %v999 = vadd.f32 %v694, %v998
        %v1000 = vpop.f32.mrf.mxu0
        %1001 = vmatprep.mubr.bf16.mxu0 0
        %1002 = vmatmul.mubr.bf16.gmra.mxu0 %v805
        %v1003 = vpop.f32.mrf.mxu0
        %v1004 = vadd.f32 %v699, %v1003
        %v1005 = vpop.f32.mrf.mxu0
        %v1006 = vpop.f32.mrf.mxu0
        %v1007 = vadd.f32 %v702, %v1006
        %v1008 = vpop.f32.mrf.mxu0
        %1009 = vmatprep.mubr.bf16.mxu0 0
        %1010 = vmatmul.mubr.bf16.gmra.mxu0 %v806
        %v1011 = vpop.f32.mrf.mxu0
        %v1012 = vadd.f32 %v707, %v1011
        %v1013 = vpop.f32.mrf.mxu0
        %v1014 = vpop.f32.mrf.mxu0
        %v1015 = vadd.f32 %v710, %v1014
        %v1016 = vpop.f32.mrf.mxu0
        %1017 = vmatprep.mubr.bf16.mxu0 0
        %1018 = vmatmul.mubr.bf16.gmra.mxu0 %v807
        %v1019 = vpop.f32.mrf.mxu0
        %v1020 = vadd.f32 %v715, %v1019
        %v1021 = vpop.f32.mrf.mxu0
        %v1022 = vpop.f32.mrf.mxu0
        %v1023 = vadd.f32 %v718, %v1022
        %v1024 = vpop.f32.mrf.mxu0
        %1025 = vmatprep.mubr.bf16.mxu0 0
        %1026 = vmatmul.mubr.bf16.gmra.mxu0 %v808
        %v1027 = vpop.f32.mrf.mxu0
        %v1028 = vadd.f32 %v723, %v1027
        %v1029 = vpop.f32.mrf.mxu0
        %v1030 = vpop.f32.mrf.mxu0
        %v1031 = vadd.f32 %v726, %v1030
        %v1032 = vpop.f32.mrf.mxu0
        %1033 = vdwg.mxu0
        %v1034 = vld [vmem:[%s3] sm:$0x1]
        %v1036 = vlaneseq
        %v1037 = vshrl.u32 %v1036, 7
        %v1038 = vsub.s32 0, %v1037
        %v1039 = vrot.slane %v1034, %v1038
        %v1041 = vadd.f32 %v908, %v1039
        %v1042 = vadd.f32 %v911, %v1039
        %v1043 = vadd.f32 %v916, %v1039
        %v1044 = vadd.f32 %v919, %v1039
        %v1045 = vadd.f32 %v924, %v1039
        %v1046 = vadd.f32 %v927, %v1039
        %v1047 = vadd.f32 %v932, %v1039
        %v1048 = vadd.f32 %v935, %v1039
        %v1049 = vadd.f32 %v940, %v1039
        %v1050 = vadd.f32 %v943, %v1039
        %v1051 = vadd.f32 %v948, %v1039
        %v1052 = vadd.f32 %v951, %v1039
        %v1053 = vadd.f32 %v956, %v1039
        %v1054 = vadd.f32 %v959, %v1039
        %v1055 = vadd.f32 %v964, %v1039
        %v1056 = vadd.f32 %v967, %v1039
        %v1057 = vadd.f32 %v972, %v1039
        %v1058 = vadd.f32 %v975, %v1039
        %v1059 = vadd.f32 %v980, %v1039
        %v1060 = vadd.f32 %v983, %v1039
        %v1061 = vadd.f32 %v988, %v1039
        %v1062 = vadd.f32 %v991, %v1039
        %v1063 = vadd.f32 %v996, %v1039
        %v1064 = vadd.f32 %v999, %v1039
        %v1065 = vadd.f32 %v1004, %v1039
        %v1066 = vadd.f32 %v1007, %v1039
        %v1067 = vadd.f32 %v1012, %v1039
        %v1068 = vadd.f32 %v1015, %v1039
        %v1069 = vadd.f32 %v1020, %v1039
        %v1070 = vadd.f32 %v1023, %v1039
        %v1071 = vadd.f32 %v1028, %v1039
        %v1072 = vadd.f32 %v1031, %v1039
        %v1073 = vld [vmem:[%s5] sm:$0x1]
        %v1075 = vlaneseq
        %v1076 = vshrl.u32 %v1075, 7
        %v1077 = vsub.s32 0, %v1076
        %v1078 = vrot.slane %v1073, %v1077
        %v1080 = vadd.f32 %v1041, %v1078
        %v1081 = vadd.f32 %v1042, %v1078
        %v1082 = vadd.f32 %v1043, %v1078
        %v1083 = vadd.f32 %v1044, %v1078
        %v1084 = vadd.f32 %v1045, %v1078
        %v1085 = vadd.f32 %v1046, %v1078
        %v1086 = vadd.f32 %v1047, %v1078
        %v1087 = vadd.f32 %v1048, %v1078
        %v1088 = vadd.f32 %v1049, %v1078
        %v1089 = vadd.f32 %v1050, %v1078
        %v1090 = vadd.f32 %v1051, %v1078
        %v1091 = vadd.f32 %v1052, %v1078
        %v1092 = vadd.f32 %v1053, %v1078
        %v1093 = vadd.f32 %v1054, %v1078
        %v1094 = vadd.f32 %v1055, %v1078
        %v1095 = vadd.f32 %v1056, %v1078
        %v1096 = vadd.f32 %v1057, %v1078
        %v1097 = vadd.f32 %v1058, %v1078
        %v1098 = vadd.f32 %v1059, %v1078
        %v1099 = vadd.f32 %v1060, %v1078
        %v1100 = vadd.f32 %v1061, %v1078
        %v1101 = vadd.f32 %v1062, %v1078
        %v1102 = vadd.f32 %v1063, %v1078
        %v1103 = vadd.f32 %v1064, %v1078
        %v1104 = vadd.f32 %v1065, %v1078
        %v1105 = vadd.f32 %v1066, %v1078
        %v1106 = vadd.f32 %v1067, %v1078
        %v1107 = vadd.f32 %v1068, %v1078
        %v1108 = vadd.f32 %v1069, %v1078
        %v1109 = vadd.f32 %v1070, %v1078
        %v1110 = vadd.f32 %v1071, %v1078
        %v1111 = vadd.f32 %v1072, %v1078
        %v1112 = vmax.f32 %v1080, 0.0
        %v1113 = vmax.f32 %v1081, 0.0
        %v1114 = vmax.f32 %v1082, 0.0
        %v1115 = vmax.f32 %v1083, 0.0
        %v1116 = vmax.f32 %v1084, 0.0
        %v1117 = vmax.f32 %v1085, 0.0
        %v1118 = vmax.f32 %v1086, 0.0
        %v1119 = vmax.f32 %v1087, 0.0
        %v1120 = vmax.f32 %v1088, 0.0
        %v1121 = vmax.f32 %v1089, 0.0
        %v1122 = vmax.f32 %v1090, 0.0
        %v1123 = vmax.f32 %v1091, 0.0
        %v1124 = vmax.f32 %v1092, 0.0
        %v1125 = vmax.f32 %v1093, 0.0
        %v1126 = vmax.f32 %v1094, 0.0
        %v1127 = vmax.f32 %v1095, 0.0
        %v1128 = vmax.f32 %v1096, 0.0
        %v1129 = vmax.f32 %v1097, 0.0
        %v1130 = vmax.f32 %v1098, 0.0
        %v1131 = vmax.f32 %v1099, 0.0
        %v1132 = vmax.f32 %v1100, 0.0
        %v1133 = vmax.f32 %v1101, 0.0
        %v1134 = vmax.f32 %v1102, 0.0
        %v1135 = vmax.f32 %v1103, 0.0
        %v1136 = vmax.f32 %v1104, 0.0
        %v1137 = vmax.f32 %v1105, 0.0
        %v1138 = vmax.f32 %v1106, 0.0
        %v1139 = vmax.f32 %v1107, 0.0
        %v1140 = vmax.f32 %v1108, 0.0
        %v1141 = vmax.f32 %v1109, 0.0
        %v1142 = vmax.f32 %v1110, 0.0
        %v1143 = vmax.f32 %v1111, 0.0
        %v1144 = vadd.f32 %v1112, %v1113
        %v1145 = vadd.f32 %v1144, %v1114
        %v1146 = vadd.f32 %v1145, %v1115
        %v1147 = vadd.f32 %v1146, %v1116
        %v1148 = vadd.f32 %v1147, %v1117
        %v1149 = vadd.f32 %v1148, %v1118
        %v1150 = vadd.f32 %v1149, %v1119
        %v1151 = vadd.f32 %v1150, %v1120
        %v1152 = vadd.f32 %v1151, %v1121
        %v1153 = vadd.f32 %v1152, %v1122
        %v1154 = vadd.f32 %v1153, %v1123
        %v1155 = vadd.f32 %v1154, %v1124
        %v1156 = vadd.f32 %v1155, %v1125
        %v1157 = vadd.f32 %v1156, %v1126
        %v1158 = vadd.f32 %v1157, %v1127
        %v1159 = vadd.f32 %v1158, %v1128
        %v1160 = vadd.f32 %v1159, %v1129
        %v1161 = vadd.f32 %v1160, %v1130
        %v1162 = vadd.f32 %v1161, %v1131
        %v1163 = vadd.f32 %v1162, %v1132
        %v1164 = vadd.f32 %v1163, %v1133
        %v1165 = vadd.f32 %v1164, %v1134
        %v1166 = vadd.f32 %v1165, %v1135
        %v1167 = vadd.f32 %v1166, %v1136
        %v1168 = vadd.f32 %v1167, %v1137
        %v1169 = vadd.f32 %v1168, %v1138
        %v1170 = vadd.f32 %v1169, %v1139
        %v1171 = vadd.f32 %v1170, %v1140
        %v1172 = vadd.f32 %v1171, %v1141
        %v1173 = vadd.f32 %v1172, %v1142
        %v1174 = vadd.f32 %v1173, %v1143
        %v1175 = vrot.slane %v1174, 4
        %v1176 = vadd.f32 %v1174, %v1175
        %v1177 = vrot.slane %v1176, 2
        %v1178 = vadd.f32 %v1176, %v1177
        %v1179 = vrot.slane %v1178, 1
        %v1180 = vadd.f32 %v1178, %v1179
        %v1181 = vrcp.pop 256.0
        %v1182 = vmul.f32 %v1180, %v1181
        %v1183 = vpack.c.bf16 %v1182, %v1182
        %v1184 = vld [vmem:[%s6] sm:$0xf]
        %v1185 = vld [vmem:[%s6 + $0x4] sm:$0xf]
        %v1186 = vld [vmem:[%s6 + $0x8] sm:$0xf]
        %v1187 = vld [vmem:[%s6 + $0xc] sm:$0xf]
        %v1188 = vld [vmem:[%s6 + $0x10] sm:$0xf]
        %v1189 = vld [vmem:[%s6 + $0x14] sm:$0xf]
        %v1190 = vld [vmem:[%s6 + $0x18] sm:$0xf]
        %v1191 = vld [vmem:[%s6 + $0x1c] sm:$0xf]
        %v1192 = vld [vmem:[%s6 + $0x20] sm:$0xf]
        %v1193 = vld [vmem:[%s6 + $0x24] sm:$0xf]
        %v1194 = vld [vmem:[%s6 + $0x28] sm:$0xf]
        %v1195 = vld [vmem:[%s6 + $0x2c] sm:$0xf]
        %v1196 = vld [vmem:[%s6 + $0x30] sm:$0xf]
        %v1197 = vld [vmem:[%s6 + $0x34] sm:$0xf]
        %v1198 = vld [vmem:[%s6 + $0x38] sm:$0xf]
        %v1199 = vld [vmem:[%s6 + $0x3c] sm:$0xf]
        %v1200 = vld [vmem:[%s7] sm:$0x1]
        %v1217 = vunpack.c.l.b16 %v1184
        %v1218 = vunpack.c.l.b16 %v1185
        %v1219 = vunpack.c.l.b16 %v1186
        %v1220 = vunpack.c.l.b16 %v1187
        %v1221 = vunpack.c.l.b16 %v1188
        %v1222 = vunpack.c.l.b16 %v1189
        %v1223 = vunpack.c.l.b16 %v1190
        %v1224 = vunpack.c.l.b16 %v1191
        %v1225 = vunpack.c.l.b16 %v1192
        %v1226 = vunpack.c.l.b16 %v1193
        %v1227 = vunpack.c.l.b16 %v1194
        %v1228 = vunpack.c.l.b16 %v1195
        %v1229 = vunpack.c.l.b16 %v1196
        %v1230 = vunpack.c.l.b16 %v1197
        %v1231 = vunpack.c.l.b16 %v1198
        %v1232 = vunpack.c.l.b16 %v1199
        %v1233 = vpack.c.b16 %v1218, %v1217
        %v1234 = vpack.c.b16 %v1220, %v1219
        %v1235 = vpack.c.b16 %v1222, %v1221
        %v1236 = vpack.c.b16 %v1224, %v1223
        %v1237 = vpack.c.b16 %v1226, %v1225
        %v1238 = vpack.c.b16 %v1228, %v1227
        %v1239 = vpack.c.b16 %v1230, %v1229
        %v1240 = vpack.c.b16 %v1232, %v1231
        %1249 = vmatprep.subr.bf16.mxu0 0
        %1250 = vmatpush1.bf16.msra.mxu0 %v1240
        %1251 = vmatprep.subr.bf16.mxu0 0
        %1252 = vmatpush1.bf16.msra.mxu0 %v1239
        %1253 = vmatprep.subr.bf16.mxu0 0
        %1254 = vmatpush1.bf16.msra.mxu0 %v1238
        %1255 = vmatprep.subr.bf16.mxu0 0
        %1256 = vmatpush1.bf16.msra.mxu0 %v1237
        %1257 = vmatprep.subr.bf16.mxu0 0
        %1258 = vmatpush1.bf16.msra.mxu0 %v1236
        %1259 = vmatprep.subr.bf16.mxu0 0
        %1260 = vmatpush1.bf16.msra.mxu0 %v1235
        %1261 = vmatprep.subr.bf16.mxu0 0
        %1262 = vmatpush1.bf16.msra.mxu0 %v1234
        %1263 = vmatprep.subr.bf16.mxu0 0
        %1264 = vmatpush1.bf16.msra.mxu0 %v1233
        %1265 = vmatprep.subr.bf16.mxu0 0
        %1266 = vmatpush2.bf16.msra.mxu0 0
        %1267 = vmatprep.subr.bf16.mxu0 0
        %1268 = vmatpush2.bf16.msra.mxu0 0
        %1269 = vmatprep.subr.bf16.mxu0 0
        %1270 = vmatpush2.bf16.msra.mxu0 0
        %1271 = vmatprep.subr.bf16.mxu0 0
        %1272 = vmatpush2.bf16.msra.mxu0 0
        %1273 = vmatprep.subr.bf16.mxu0 0
        %1274 = vmatpush2.bf16.msra.mxu0 0
        %1275 = vmatprep.subr.bf16.mxu0 0
        %1276 = vmatpush2.bf16.msra.mxu0 0
        %1277 = vmatprep.subr.bf16.mxu0 0
        %1278 = vmatpush2.bf16.msra.mxu0 0
        %1279 = vmatprep.subr.bf16.mxu0 0
        %1280 = vmatpush2.bf16.msra.mxu0 0
        %1281 = vmatprep.mubr.bf16.mxu0 0
        %1282 = vmatmul.mubr.bf16.gmra.mxu0 %v1183
        %v1283 = vpop.f32.mrf.mxu0
        %v1284 = vadd.f32 %v1200, %v1283
        %v1285 = vpop.f32.mrf.mxu0
        %v1286 = vpop.f32.mrf.mxu0
        %v1287 = vpop.f32.mrf.mxu0
        %1288 = vdwg.mxu0
        %1289 = vst [vmem:[%s314] sm:$0x1] %v1284
        %s1290 = sand.u32 %s208, 1
        %s1291 = scalar_lea.sflag [#allocation3], %s1290
        %s1292 = sand.u32 %s208, 1
        %s1293 = scalar_lea.vmem [#allocation2], %s1292
        // Predicated region
        $region53: #{_lambda_.5} parent=51 // pred_check
          %p1294 = pneg %p218
        $region54: #{_lambda_.5} parent=51 // pred_check_branch
          %1296 = sbr.rel (%p1294) target = $region56
        $region55: #{_lambda_.5} parent=51 // pred_region
          %s1298 = ssub.s32 16, 16
          %1299 = vsyncadd %s1291, %s1298
          %s1300 = smul.addr %s22, 16
          %s1301 = scalar_lea.hbm %s8, %s1300
          %s1303 = sshll.u32 %s1293, 4
          %s1304 = int_to_ptr.vmem [resolvable:$true] %s1303
          %1306 = dma.vmem_to_hbm [thread:$0]  %s1304, 16, %s1301, %s1291
        $region56: #{_lambda_.5} parent=51 // pred_fallthru
          _
      $region52: #{_lambda_.5} parent=5 // pred_fallthru
        _
      %p1307 = scmp.le.s32.totalorder 2, %s17
      // Predicated region
      $region57: #{_lambda_.5} parent=5 // pred_check
        %p1308 = pneg %p1307
      $region58: #{_lambda_.5} parent=5 // pred_check_branch
        %1310 = sbr.rel (%p1308) target = $region60
      $region59: #{_lambda_.5} parent=5 // pred_region
        %s1311 = ssub.s32 %s17, 2
        // Predicated region
        $region61: #{_lambda_.5} parent=59 // pred_check
          %p1312 = pneg %p224
        $region62: #{_lambda_.5} parent=59 // pred_check_branch
          %1314 = sbr.rel (%p1312) target = $region64
        $region63: #{_lambda_.5} parent=59 // pred_region
          %s1315 = sand.u32 %s209, 1
          %s1316 = scalar_lea.sflag [#allocation3], %s1315
          %s1317 = sand.u32 %s209, 1
          %s1318 = scalar_lea.vmem [#allocation2], %s1317
          %1319 = dma.done %s1316, 16
        $region64: #{_lambda_.5} parent=59 // pred_fallthru
          _
      $region60: #{_lambda_.5} parent=5 // pred_fallthru
        _
    $region6: #{_lambda_.5} parent=1 // loop_footer
      %s21 = sadd.s32 1, %s17
    $region7: #{_lambda_.5} parent=1 // loop_footer_branch
      %16 = sbr.rel target = $region3
    $region8: #{_lambda_.5} parent=1 // loop_exit
      _
    %1320 = vsyncpa [#allocation3], 1
    %s1321 = scalar_lea.sflag [#allocation3], 1
    %1322 = vsyncpa %s1321, 1

// kernel: _lambda_.4
$region0: #{_lambda_.4}
  #allocation0 [shape = 'u32[]', space=smem, size = 0x4, offset = 0x4, fixed_abs, tag = 'smem constant byte address 0x4 - core index']
  #allocation1 [shape = 'u32[144,128]{1,0:T(1,128)}', space=vmem, size = 0x12000, scoped, tag = 'internal scratch']
  %s0 = inlined_call_operand.vmem [shape: bf16[2,18,18,128], index: 0, kind: input, shape index: {}]
  %s1 = inlined_call_operand.vmem [shape: bf16[9,128,128], index: 1, kind: input, shape index: {}]
  %s2 = inlined_call_operand.vmem [shape: f32[1,128], index: 2, kind: input, shape index: {}]
  %s3 = inlined_call_operand.vmem [shape: bf16[512,128], index: 3, kind: output, shape index: {}]
  %s4 = sld [smem:[#allocation0]]
  $region45: #{_lambda_.4} parent=0
    _
  %s6 = ssub.s32 1, %s4
  %s7 = scalar_select 0, %s6, %s4
  loop: start=0, step=1, limit=4
  $region2: #{_lambda_.4} parent=0 // loop_pre_header
    _
  $region3: #{_lambda_.4} parent=0 // loop_header
    %s9 = sphi 0, %s13
    %p10 = scmp.ge.s32.totalorder %s9, 4
    %s19 = sphi 0, %s21
    %s22 = sphi 0, %s19
    %s23 = sphi 0, %s22
    %s39 = sphi 0, %s23
    %s43 = sphi 0, %s43
    %s45 = sphi 0, %s43
    %s46 = sphi 0, %s45
    %s60 = sphi 0, %s46
    %s64 = sphi 0, %s64
    %s66 = sphi 0, %s64
    %s67 = sphi 0, %s66
    %s81 = sphi 0, %s67
    %s87 = sphi 0, %s89
    %s90 = sphi 0, %s87
    %s91 = sphi 0, %s90
    %s107 = sphi 0, %s91
  $region4: #{_lambda_.4} parent=0 // loop_header_branch
    %12 = sbr.rel (%p10) target = $region8
  $region5: #{_lambda_.4} parent=0 // loop_body
    %s14 = ssub.s32 %s9, 1
    %s15 = ssub.s32 %s9, 2
    %s16 = sadd.s32 %s9, 1
    %s17 = ssub.s32 %s9, %s16
    %p18 = scmp.eq.s32.totalorder %s17, 0
    %s20 = sadd.s32 %s19, 1
    %s21 = scalar_select %p18, %s19, %s20
    %p24 = pneg %p18
    %p25 = scmp.eq.s32.totalorder %s9, 1
    %p26 = por %p24, %p25
    %p27 = scmp.ne.s32.totalorder %s19, %s22
    %p28 = scmp.eq.s32.totalorder %s9, 0
    %p29 = por %p27, %p28
    %p30 = scmp.ne.s32.totalorder %s19, %s22
    %p31 = scmp.eq.s32.totalorder %s14, 1
    %p32 = por %p30, %p31
    %p33 = scmp.ne.s32.totalorder %s22, %s23
    %p34 = scmp.eq.s32.totalorder %s14, 0
    %p35 = por %p33, %p34
    %p36 = scmp.ne.s32.totalorder %s22, %s23
    %p37 = scmp.eq.s32.totalorder %s15, 1
    %p38 = por %p36, %p37
    %p40 = scmp.ne.s32.totalorder %s23, %s39
    %p41 = scmp.eq.s32.totalorder %s15, 0
    %p42 = por %p40, %p41
    %s44 = sadd.s32 %s43, 1
    %p47 = scmp.eq.s32.totalorder %s9, 1
    %p48 = scmp.ne.s32.totalorder %s43, %s45
    %p49 = scmp.eq.s32.totalorder %s9, 0
    %p50 = por %p48, %p49
    %p51 = scmp.ne.s32.totalorder %s43, %s45
    %p52 = scmp.eq.s32.totalorder %s14, 1
    %p53 = por %p51, %p52
    %p54 = scmp.ne.s32.totalorder %s45, %s46
    %p55 = scmp.eq.s32.totalorder %s14, 0
    %p56 = por %p54, %p55
    %p57 = scmp.ne.s32.totalorder %s45, %s46
    %p58 = scmp.eq.s32.totalorder %s15, 1
    %p59 = por %p57, %p58
    %p61 = scmp.ne.s32.totalorder %s46, %s60
    %p62 = scmp.eq.s32.totalorder %s15, 0
    %p63 = por %p61, %p62
    %s65 = sadd.s32 %s64, 1
    %p68 = scmp.eq.s32.totalorder %s9, 1
    %p69 = scmp.ne.s32.totalorder %s64, %s66
    %p70 = scmp.eq.s32.totalorder %s9, 0
    %p71 = por %p69, %p70
    %p72 = scmp.ne.s32.totalorder %s64, %s66
    %p73 = scmp.eq.s32.totalorder %s14, 1
    %p74 = por %p72, %p73
    %p75 = scmp.ne.s32.totalorder %s66, %s67
    %p76 = scmp.eq.s32.totalorder %s14, 0
    %p77 = por %p75, %p76
    %p78 = scmp.ne.s32.totalorder %s66, %s67
    %p79 = scmp.eq.s32.totalorder %s15, 1
    %p80 = por %p78, %p79
    %p82 = scmp.ne.s32.totalorder %s67, %s81
    %p83 = scmp.eq.s32.totalorder %s15, 0
    %p84 = por %p82, %p83
    %s85 = ssub.s32 %s9, %s16
    %p86 = scmp.eq.s32.totalorder %s85, 0
    %s88 = sadd.s32 %s87, 1
    %s89 = scalar_select %p86, %s87, %s88
    %p92 = pneg %p86
    %p93 = scmp.eq.s32.totalorder %s9, 1
    %p94 = por %p92, %p93
    %p95 = scmp.ne.s32.totalorder %s87, %s90
    %p96 = scmp.eq.s32.totalorder %s9, 0
    %p97 = por %p95, %p96
    %p98 = scmp.ne.s32.totalorder %s87, %s90
    %p99 = scmp.eq.s32.totalorder %s14, 1
    %p100 = por %p98, %p99
    %p101 = scmp.ne.s32.totalorder %s90, %s91
    %p102 = scmp.eq.s32.totalorder %s14, 0
    %p103 = por %p101, %p102
    %p104 = scmp.ne.s32.totalorder %s90, %s91
    %p105 = scmp.eq.s32.totalorder %s15, 1
    %p106 = por %p104, %p105
    %p108 = scmp.ne.s32.totalorder %s91, %s107
    %p109 = scmp.eq.s32.totalorder %s15, 0
    %p110 = por %p108, %p109
    %p111 = scmp.le.s32.totalorder 1, %s9
    %p112 = scmp.lt.s32.totalorder %s9, 3
    %p113 = pnand %p111, %p112
    %p114 = pneg %p113
    // Predicated region
    $region9: #{_lambda_.4} parent=5 // pred_check
      _
    $region10: #{_lambda_.4} parent=5 // pred_check_branch
      %116 = sbr.rel (%p113) target = $region12
    $region11: #{_lambda_.4} parent=5 // pred_region
      %s117 = ssub.s32 %s9, 1
      // Predicated region
      $region13: #{_lambda_.4} parent=11 // pred_check
        %p118 = pneg %p56
      $region14: #{_lambda_.4} parent=11 // pred_check_branch
        %120 = sbr.rel (%p118) target = $region16
      $region15: #{_lambda_.4} parent=11 // pred_region
        _
      $region16: #{_lambda_.4} parent=11 // pred_fallthru
        _
      // Predicated region
      $region17: #{_lambda_.4} parent=11 // pred_check
        %p121 = pneg %p77
      $region18: #{_lambda_.4} parent=11 // pred_check_branch
        %123 = sbr.rel (%p121) target = $region20
      $region19: #{_lambda_.4} parent=11 // pred_region
        _
      $region20: #{_lambda_.4} parent=11 // pred_fallthru
        _
    $region12: #{_lambda_.4} parent=5 // pred_fallthru
      _
    %p124 = scmp.lt.s32.totalorder %s9, 2
    // Predicated region
    $region21: #{_lambda_.4} parent=5 // pred_check
      %p125 = pneg %p124
    $region22: #{_lambda_.4} parent=5 // pred_check_branch
      %127 = sbr.rel (%p125) target = $region24
    $region23: #{_lambda_.4} parent=5 // pred_region
      // Predicated region
      $region25: #{_lambda_.4} parent=23 // pred_check
        %p128 = pneg %p29
      $region26: #{_lambda_.4} parent=23 // pred_check_branch
        %130 = sbr.rel (%p128) target = $region28
      $region27: #{_lambda_.4} parent=23 // pred_region
        %p131 = scmp.lt.s32.totalorder %s9, 1
        %s132 = scalar_select %p131, %s9, 1
        %s133 = smul.addr %s132, 54
        %s134 = smul.addr %s133, 4
        %s135 = scalar_lea.vmem %s0, %s134
      $region28: #{_lambda_.4} parent=23 // pred_fallthru
        _
    $region24: #{_lambda_.4} parent=5 // pred_fallthru
      _
    %p136 = scmp.le.s32.totalorder 1, %s9
    %p137 = scmp.lt.s32.totalorder %s9, 3
    %p138 = pnand %p136, %p137
    %p139 = pneg %p138
    // Predicated region
    $region29: #{_lambda_.4} parent=5 // pred_check
      _
    $region30: #{_lambda_.4} parent=5 // pred_check_branch
      %141 = sbr.rel (%p138) target = $region32
    $region31: #{_lambda_.4} parent=5 // pred_region
      %s142 = ssub.s32 %s9, 1
      %p143 = scmp.lt.s32.totalorder %s14, 1
      %s144 = scalar_select %p143, %s14, 1
      %s145 = smul.addr %s144, 54
      %s146 = smul.addr %s145, 4
      %s147 = scalar_lea.vmem %s0, %s146
      %p148 = pneg %p35
      %p149 = pneg %p32
      %p150 = pneg %p56
      %p151 = pneg %p53
      %p152 = pneg %p77
      %p153 = pneg %p74
      %p154 = pneg %p103
      %p155 = pneg %p100
      %s156 = smul.u32 32, %s14
      %p157 = scmp.lt.s32.totalorder %s156, 63
      %s158 = scalar_select %p157, %s156, 63
      %s159 = smul.addr %s158, 4
      %s160 = scalar_lea.vmem %s3, %s159
      %p161 = scmp.lt.s32.totalorder %s14, 1
      %s162 = scalar_select %p161, %s14, 1
      %s163 = smul.addr %s162, 54
      %s164 = smul.addr %s163, 4
      %s165 = scalar_lea.vmem %s0, %s164
      %s166 = smul.u32 32, %s14
      %p167 = scmp.lt.s32.totalorder %s166, 63
      %s168 = scalar_select %p167, %s166, 63
      %s169 = smul.addr %s168, 4
      %s170 = scalar_lea.vmem %s3, %s169
      %s171 = smul.u32 32, %s14
      %v173 = vld [vmem:[%s165] sm:$0xf]
      %v174 = vld [vmem:[%s165 + $0x4] sm:$0xf]
      %v175 = vld [vmem:[%s165 + $0x8] sm:$0x1]
      %v176 = vld [vmem:[%s165 + $0xc] sm:$0xf]
      %v177 = vld [vmem:[%s165 + $0x10] sm:$0xf]
      %v178 = vld [vmem:[%s165 + $0x14] sm:$0x1]
      %v179 = vld [vmem:[%s165 + $0x18] sm:$0xf]
      %v180 = vld [vmem:[%s165 + $0x1c] sm:$0xf]
      %v181 = vld [vmem:[%s165 + $0x20] sm:$0x1]
      %v182 = vld [vmem:[%s165 + $0x24] sm:$0xf]
      %v183 = vld [vmem:[%s165 + $0x28] sm:$0xf]
      %v184 = vld [vmem:[%s165 + $0x2c] sm:$0x1]
      %v185 = vld [vmem:[%s165 + $0x30] sm:$0xf]
      %v186 = vld [vmem:[%s165 + $0x34] sm:$0xf]
      %v187 = vld [vmem:[%s165 + $0x38] sm:$0x1]
      %v188 = vld [vmem:[%s165 + $0x3c] sm:$0xf]
      %v189 = vld [vmem:[%s165 + $0x40] sm:$0xf]
      %v190 = vld [vmem:[%s165 + $0x44] sm:$0x1]
      %v191 = vld [vmem:[%s165 + $0x48] sm:$0xf]
      %v192 = vld [vmem:[%s165 + $0x4c] sm:$0xf]
      %v193 = vld [vmem:[%s165 + $0x50] sm:$0x1]
      %v194 = vld [vmem:[%s165 + $0x54] sm:$0xf]
      %v195 = vld [vmem:[%s165 + $0x58] sm:$0xf]
      %v196 = vld [vmem:[%s165 + $0x5c] sm:$0x1]
      %v197 = vld [vmem:[%s165 + $0x60] sm:$0xf]
      %v198 = vld [vmem:[%s165 + $0x64] sm:$0xf]
      %v199 = vld [vmem:[%s165 + $0x68] sm:$0x1]
      %v200 = vld [vmem:[%s165 + $0x6c] sm:$0xf]
      %v201 = vld [vmem:[%s165 + $0x70] sm:$0xf]
      %v202 = vld [vmem:[%s165 + $0x74] sm:$0x1]
      %v203 = vld [vmem:[%s165 + $0x78] sm:$0xf]
      %v204 = vld [vmem:[%s165 + $0x7c] sm:$0xf]
      %v205 = vld [vmem:[%s165 + $0x80] sm:$0x1]
      %v206 = vld [vmem:[%s165 + $0x84] sm:$0xf]
      %v207 = vld [vmem:[%s165 + $0x88] sm:$0xf]
      %v208 = vld [vmem:[%s165 + $0x8c] sm:$0x1]
      %v209 = vld [vmem:[%s165 + $0x90] sm:$0xf]
      %v210 = vld [vmem:[%s165 + $0x94] sm:$0xf]
      %v211 = vld [vmem:[%s165 + $0x98] sm:$0x1]
      %v212 = vld [vmem:[%s165 + $0x9c] sm:$0xf]
      %v213 = vld [vmem:[%s165 + $0xa0] sm:$0xf]
      %v214 = vld [vmem:[%s165 + $0xa4] sm:$0x1]
      %v215 = vld [vmem:[%s165 + $0xa8] sm:$0xf]
      %v216 = vld [vmem:[%s165 + $0xac] sm:$0xf]
      %v217 = vld [vmem:[%s165 + $0xb0] sm:$0x1]
      %v218 = vld [vmem:[%s165 + $0xb4] sm:$0xf]
      %v219 = vld [vmem:[%s165 + $0xb8] sm:$0xf]
      %v220 = vld [vmem:[%s165 + $0xbc] sm:$0x1]
      %v221 = vld [vmem:[%s165 + $0xc0] sm:$0xf]
      %v222 = vld [vmem:[%s165 + $0xc4] sm:$0xf]
      %v223 = vld [vmem:[%s165 + $0xc8] sm:$0x1]
      %v224 = vld [vmem:[%s165 + $0xcc] sm:$0xf]
      %v225 = vld [vmem:[%s165 + $0xd0] sm:$0xf]
      %v226 = vld [vmem:[%s165 + $0xd4] sm:$0x1]
      %v227 = vld [vmem:[%s1] sm:$0xf]
      %v228 = vld [vmem:[%s1 + $0x4] sm:$0xf]
      %v229 = vld [vmem:[%s1 + $0x8] sm:$0xf]
      %v230 = vld [vmem:[%s1 + $0xc] sm:$0xf]
      %v231 = vld [vmem:[%s1 + $0x10] sm:$0xf]
      %v232 = vld [vmem:[%s1 + $0x14] sm:$0xf]
      %v233 = vld [vmem:[%s1 + $0x18] sm:$0xf]
      %v234 = vld [vmem:[%s1 + $0x1c] sm:$0xf]
      %v235 = vld [vmem:[%s1 + $0x20] sm:$0xf]
      %v236 = vld [vmem:[%s1 + $0x24] sm:$0xf]
      %v237 = vld [vmem:[%s1 + $0x28] sm:$0xf]
      %v238 = vld [vmem:[%s1 + $0x2c] sm:$0xf]
      %v239 = vld [vmem:[%s1 + $0x30] sm:$0xf]
      %v240 = vld [vmem:[%s1 + $0x34] sm:$0xf]
      %v241 = vld [vmem:[%s1 + $0x38] sm:$0xf]
      %v242 = vld [vmem:[%s1 + $0x3c] sm:$0xf]
      %s243 = scalar_lea.vmem %s1, 192
      %v244 = vld [vmem:[%s243] sm:$0xf]
      %v245 = vld [vmem:[%s243 + $0x4] sm:$0xf]
      %v246 = vld [vmem:[%s243 + $0x8] sm:$0xf]
      %v247 = vld [vmem:[%s243 + $0xc] sm:$0xf]
      %v248 = vld [vmem:[%s243 + $0x10] sm:$0xf]
      %v249 = vld [vmem:[%s243 + $0x14] sm:$0xf]
      %v250 = vld [vmem:[%s243 + $0x18] sm:$0xf]
      %v251 = vld [vmem:[%s243 + $0x1c] sm:$0xf]
      %v252 = vld [vmem:[%s243 + $0x20] sm:$0xf]
      %v253 = vld [vmem:[%s243 + $0x24] sm:$0xf]
      %v254 = vld [vmem:[%s243 + $0x28] sm:$0xf]
      %v255 = vld [vmem:[%s243 + $0x2c] sm:$0xf]
      %v256 = vld [vmem:[%s243 + $0x30] sm:$0xf]
      %v257 = vld [vmem:[%s243 + $0x34] sm:$0xf]
      %v258 = vld [vmem:[%s243 + $0x38] sm:$0xf]
      %v259 = vld [vmem:[%s243 + $0x3c] sm:$0xf]
      %v292 = vunpack.c.l.b16 %v176
      %v293 = vunpack.c.l.b16 %v177
      %v294 = vunpack.c.l.b16 %v179
      %v295 = vunpack.c.l.b16 %v180
      %v296 = vunpack.c.l.b16 %v182
      %v297 = vunpack.c.l.b16 %v183
      %v298 = vunpack.c.l.b16 %v185
      %v299 = vunpack.c.l.b16 %v186
      %v300 = vunpack.c.l.b16 %v188
      %v301 = vunpack.c.l.b16 %v189
      %v302 = vunpack.c.l.b16 %v191
      %v303 = vunpack.c.l.b16 %v192
      %v304 = vunpack.c.l.b16 %v194
      %v305 = vunpack.c.l.b16 %v195
      %v306 = vunpack.c.l.b16 %v197
      %v307 = vunpack.c.l.b16 %v198
      %v308 = vunpack.c.l.b16 %v200
      %v309 = vunpack.c.l.b16 %v201
      %v310 = vunpack.c.l.b16 %v203
      %v311 = vunpack.c.l.b16 %v204
      %v312 = vunpack.c.l.b16 %v206
      %v313 = vunpack.c.l.b16 %v207
      %v314 = vunpack.c.l.b16 %v209
      %v315 = vunpack.c.l.b16 %v210
      %v316 = vunpack.c.l.b16 %v212
      %v317 = vunpack.c.l.b16 %v213
      %v318 = vunpack.c.l.b16 %v215
      %v319 = vunpack.c.l.b16 %v216
      %v320 = vunpack.c.l.b16 %v218
      %v321 = vunpack.c.l.b16 %v219
      %v322 = vunpack.c.l.b16 %v221
      %v323 = vunpack.c.l.b16 %v222
      %v324 = vpack.c.b16 %v293, %v292
      %v325 = vpack.c.b16 %v295, %v294
      %v326 = vpack.c.b16 %v297, %v296
      %v327 = vpack.c.b16 %v299, %v298
      %v328 = vpack.c.b16 %v301, %v300
      %v329 = vpack.c.b16 %v303, %v302
      %v330 = vpack.c.b16 %v305, %v304
      %v331 = vpack.c.b16 %v307, %v306
      %v332 = vpack.c.b16 %v309, %v308
      %v333 = vpack.c.b16 %v311, %v310
      %v334 = vpack.c.b16 %v313, %v312
      %v335 = vpack.c.b16 %v315, %v314
      %v336 = vpack.c.b16 %v317, %v316
      %v337 = vpack.c.b16 %v319, %v318
      %v338 = vpack.c.b16 %v321, %v320
      %v339 = vpack.c.b16 %v323, %v322
      %v372 = vunpack.c.l.b16 %v244
      %v373 = vunpack.c.l.b16 %v245
      %v374 = vunpack.c.l.b16 %v246
      %v375 = vunpack.c.l.b16 %v247
      %v376 = vunpack.c.l.b16 %v248
      %v377 = vunpack.c.l.b16 %v249
      %v378 = vunpack.c.l.b16 %v250
      %v379 = vunpack.c.l.b16 %v251
      %v380 = vunpack.c.l.b16 %v252
      %v381 = vunpack.c.l.b16 %v253
      %v382 = vunpack.c.l.b16 %v254
      %v383 = vunpack.c.l.b16 %v255
      %v384 = vunpack.c.l.b16 %v256
      %v385 = vunpack.c.l.b16 %v257
      %v386 = vunpack.c.l.b16 %v258
      %v387 = vunpack.c.l.b16 %v259
      %v388 = vpack.c.b16 %v373, %v372
      %v389 = vpack.c.b16 %v375, %v374
      %v390 = vpack.c.b16 %v377, %v376
      %v391 = vpack.c.b16 %v379, %v378
      %v392 = vpack.c.b16 %v381, %v380
      %v393 = vpack.c.b16 %v383, %v382
      %v394 = vpack.c.b16 %v385, %v384
      %v395 = vpack.c.b16 %v387, %v386
      %404 = vmatprep.subr.bf16.mxu0 0
      %405 = vmatpush1.bf16.msra.mxu0 %v395
      %406 = vmatprep.subr.bf16.mxu0 0
      %407 = vmatpush1.bf16.msra.mxu0 %v394
      %408 = vmatprep.subr.bf16.mxu0 0
      %409 = vmatpush1.bf16.msra.mxu0 %v393
      %410 = vmatprep.subr.bf16.mxu0 0
      %411 = vmatpush1.bf16.msra.mxu0 %v392
      %412 = vmatprep.subr.bf16.mxu0 0
      %413 = vmatpush1.bf16.msra.mxu0 %v391
      %414 = vmatprep.subr.bf16.mxu0 0
      %415 = vmatpush1.bf16.msra.mxu0 %v390
      %416 = vmatprep.subr.bf16.mxu0 0
      %417 = vmatpush1.bf16.msra.mxu0 %v389
      %418 = vmatprep.subr.bf16.mxu0 0
      %419 = vmatpush1.bf16.msra.mxu0 %v388
      %420 = vmatprep.subr.bf16.mxu0 0
      %421 = vmatpush2.bf16.msra.mxu0 0
      %422 = vmatprep.subr.bf16.mxu0 0
      %423 = vmatpush2.bf16.msra.mxu0 0
      %424 = vmatprep.subr.bf16.mxu0 0
      %425 = vmatpush2.bf16.msra.mxu0 0
      %426 = vmatprep.subr.bf16.mxu0 0
      %427 = vmatpush2.bf16.msra.mxu0 0
      %428 = vmatprep.subr.bf16.mxu0 0
      %429 = vmatpush2.bf16.msra.mxu0 0
      %430 = vmatprep.subr.bf16.mxu0 0
      %431 = vmatpush2.bf16.msra.mxu0 0
      %432 = vmatprep.subr.bf16.mxu0 0
      %433 = vmatpush2.bf16.msra.mxu0 0
      %434 = vmatprep.subr.bf16.mxu0 0
      %435 = vmatpush2.bf16.msra.mxu0 0
      %436 = vmatprep.mubr.bf16.mxu0 0
      %437 = vmatmul.mubr.bf16.gmra.mxu0 %v324
      %v438 = vpop.f32.mrf.mxu0
      %v439 = vadd.f32 0.0, %v438
      %v440 = vpop.f32.mrf.mxu0
      %v441 = vpop.f32.mrf.mxu0
      %v442 = vadd.f32 0.0, %v441
      %v443 = vpop.f32.mrf.mxu0
      %444 = vmatprep.mubr.bf16.mxu0 0
      %445 = vmatmul.mubr.bf16.gmra.mxu0 %v325
      %v446 = vpop.f32.mrf.mxu0
      %v447 = vadd.f32 0.0, %v446
      %v448 = vpop.f32.mrf.mxu0
      %v449 = vpop.f32.mrf.mxu0
      %v450 = vadd.f32 0.0, %v449
      %v451 = vpop.f32.mrf.mxu0
      %452 = vmatprep.mubr.bf16.mxu0 0
      %453 = vmatmul.mubr.bf16.gmra.mxu0 %v326
      %v454 = vpop.f32.mrf.mxu0
      %v455 = vadd.f32 0.0, %v454
      %v456 = vpop.f32.mrf.mxu0
      %v457 = vpop.f32.mrf.mxu0
      %v458 = vadd.f32 0.0, %v457
      %v459 = vpop.f32.mrf.mxu0
      %460 = vmatprep.mubr.bf16.mxu0 0
      %461 = vmatmul.mubr.bf16.gmra.mxu0 %v327
      %v462 = vpop.f32.mrf.mxu0
      %v463 = vadd.f32 0.0, %v462
      %v464 = vpop.f32.mrf.mxu0
      %v465 = vpop.f32.mrf.mxu0
      %v466 = vadd.f32 0.0, %v465
      %v467 = vpop.f32.mrf.mxu0
      %468 = vmatprep.mubr.bf16.mxu0 0
      %469 = vmatmul.mubr.bf16.gmra.mxu0 %v328
      %v470 = vpop.f32.mrf.mxu0
      %v471 = vadd.f32 0.0, %v470
      %v472 = vpop.f32.mrf.mxu0
      %v473 = vpop.f32.mrf.mxu0
      %v474 = vadd.f32 0.0, %v473
      %v475 = vpop.f32.mrf.mxu0
      %476 = vmatprep.mubr.bf16.mxu0 0
      %477 = vmatmul.mubr.bf16.gmra.mxu0 %v329
      %v478 = vpop.f32.mrf.mxu0
      %v479 = vadd.f32 0.0, %v478
      %v480 = vpop.f32.mrf.mxu0
      %v481 = vpop.f32.mrf.mxu0
      %v482 = vadd.f32 0.0, %v481
      %v483 = vpop.f32.mrf.mxu0
      %484 = vmatprep.mubr.bf16.mxu0 0
      %485 = vmatmul.mubr.bf16.gmra.mxu0 %v330
      %v486 = vpop.f32.mrf.mxu0
      %v487 = vadd.f32 0.0, %v486
      %v488 = vpop.f32.mrf.mxu0
      %v489 = vpop.f32.mrf.mxu0
      %v490 = vadd.f32 0.0, %v489
      %v491 = vpop.f32.mrf.mxu0
      %492 = vmatprep.mubr.bf16.mxu0 0
      %493 = vmatmul.mubr.bf16.gmra.mxu0 %v331
      %v494 = vpop.f32.mrf.mxu0
      %v495 = vadd.f32 0.0, %v494
      %v496 = vpop.f32.mrf.mxu0
      %v497 = vpop.f32.mrf.mxu0
      %v498 = vadd.f32 0.0, %v497
      %v499 = vpop.f32.mrf.mxu0
      %500 = vmatprep.mubr.bf16.mxu0 0
      %501 = vmatmul.mubr.bf16.gmra.mxu0 %v332
      %v502 = vpop.f32.mrf.mxu0
      %v503 = vadd.f32 0.0, %v502
      %v504 = vpop.f32.mrf.mxu0
      %v505 = vpop.f32.mrf.mxu0
      %v506 = vadd.f32 0.0, %v505
      %v507 = vpop.f32.mrf.mxu0
      %508 = vmatprep.mubr.bf16.mxu0 0
      %509 = vmatmul.mubr.bf16.gmra.mxu0 %v333
      %v510 = vpop.f32.mrf.mxu0
      %v511 = vadd.f32 0.0, %v510
      %v512 = vpop.f32.mrf.mxu0
      %v513 = vpop.f32.mrf.mxu0
      %v514 = vadd.f32 0.0, %v513
      %v515 = vpop.f32.mrf.mxu0
      %516 = vmatprep.mubr.bf16.mxu0 0
      %517 = vmatmul.mubr.bf16.gmra.mxu0 %v334
      %v518 = vpop.f32.mrf.mxu0
      %v519 = vadd.f32 0.0, %v518
      %v520 = vpop.f32.mrf.mxu0
      %v521 = vpop.f32.mrf.mxu0
      %v522 = vadd.f32 0.0, %v521
      %v523 = vpop.f32.mrf.mxu0
      %524 = vmatprep.mubr.bf16.mxu0 0
      %525 = vmatmul.mubr.bf16.gmra.mxu0 %v335
      %v526 = vpop.f32.mrf.mxu0
      %v527 = vadd.f32 0.0, %v526
      %v528 = vpop.f32.mrf.mxu0
      %v529 = vpop.f32.mrf.mxu0
      %v530 = vadd.f32 0.0, %v529
      %v531 = vpop.f32.mrf.mxu0
      %532 = vmatprep.mubr.bf16.mxu0 0
      %533 = vmatmul.mubr.bf16.gmra.mxu0 %v336
      %v534 = vpop.f32.mrf.mxu0
      %v535 = vadd.f32 0.0, %v534
      %v536 = vpop.f32.mrf.mxu0
      %v537 = vpop.f32.mrf.mxu0
      %v538 = vadd.f32 0.0, %v537
      %v539 = vpop.f32.mrf.mxu0
      %540 = vmatprep.mubr.bf16.mxu0 0
      %541 = vmatmul.mubr.bf16.gmra.mxu0 %v337
      %v542 = vpop.f32.mrf.mxu0
      %v543 = vadd.f32 0.0, %v542
      %v544 = vpop.f32.mrf.mxu0
      %v545 = vpop.f32.mrf.mxu0
      %v546 = vadd.f32 0.0, %v545
      %v547 = vpop.f32.mrf.mxu0
      %548 = vmatprep.mubr.bf16.mxu0 0
      %549 = vmatmul.mubr.bf16.gmra.mxu0 %v338
      %v550 = vpop.f32.mrf.mxu0
      %v551 = vadd.f32 0.0, %v550
      %v552 = vpop.f32.mrf.mxu0
      %v553 = vpop.f32.mrf.mxu0
      %v554 = vadd.f32 0.0, %v553
      %v555 = vpop.f32.mrf.mxu0
      %556 = vmatprep.mubr.bf16.mxu0 0
      %557 = vmatmul.mubr.bf16.gmra.mxu0 %v339
      %v558 = vpop.f32.mrf.mxu0
      %v559 = vadd.f32 0.0, %v558
      %v560 = vpop.f32.mrf.mxu0
      %v561 = vpop.f32.mrf.mxu0
      %v562 = vadd.f32 0.0, %v561
      %v563 = vpop.f32.mrf.mxu0
      %564 = vdwg.mxu0
      %v567 = vunpack.c.l.b16 %v173
      %v568 = vunpack.c.l.b16 %v174
      %v569 = vpack.c.b16 %v568, %v567
      %v587 = vunpack.c.l.b16 %v227
      %v588 = vunpack.c.l.b16 %v228
      %v589 = vunpack.c.l.b16 %v229
      %v590 = vunpack.c.l.b16 %v230
      %v591 = vunpack.c.l.b16 %v231
      %v592 = vunpack.c.l.b16 %v232
      %v593 = vunpack.c.l.b16 %v233
      %v594 = vunpack.c.l.b16 %v234
      %v595 = vunpack.c.l.b16 %v235
      %v596 = vunpack.c.l.b16 %v236
      %v597 = vunpack.c.l.b16 %v237
      %v598 = vunpack.c.l.b16 %v238
      %v599 = vunpack.c.l.b16 %v239
      %v600 = vunpack.c.l.b16 %v240
      %v601 = vunpack.c.l.b16 %v241
      %v602 = vunpack.c.l.b16 %v242
      %v603 = vpack.c.b16 %v588, %v587
      %v604 = vpack.c.b16 %v590, %v589
      %v605 = vpack.c.b16 %v592, %v591
      %v606 = vpack.c.b16 %v594, %v593
      %v607 = vpack.c.b16 %v596, %v595
      %v608 = vpack.c.b16 %v598, %v597
      %v609 = vpack.c.b16 %v600, %v599
      %v610 = vpack.c.b16 %v602, %v601
      %619 = vmatprep.subr.bf16.mxu0 0
      %620 = vmatpush1.bf16.msra.mxu0 %v610
      %621 = vmatprep.subr.bf16.mxu0 0
      %622 = vmatpush1.bf16.msra.mxu0 %v609
      %623 = vmatprep.subr.bf16.mxu0 0
      %624 = vmatpush1.bf16.msra.mxu0 %v608
      %625 = vmatprep.subr.bf16.mxu0 0
      %626 = vmatpush1.bf16.msra.mxu0 %v607
      %627 = vmatprep.subr.bf16.mxu0 0
      %628 = vmatpush1.bf16.msra.mxu0 %v606
      %629 = vmatprep.subr.bf16.mxu0 0
      %630 = vmatpush1.bf16.msra.mxu0 %v605
      %631 = vmatprep.subr.bf16.mxu0 0
      %632 = vmatpush1.bf16.msra.mxu0 %v604
      %633 = vmatprep.subr.bf16.mxu0 0
      %634 = vmatpush1.bf16.msra.mxu0 %v603
      %635 = vmatprep.subr.bf16.mxu0 0
      %636 = vmatpush2.bf16.msra.mxu0 0
      %637 = vmatprep.subr.bf16.mxu0 0
      %638 = vmatpush2.bf16.msra.mxu0 0
      %639 = vmatprep.subr.bf16.mxu0 0
      %640 = vmatpush2.bf16.msra.mxu0 0
      %641 = vmatprep.subr.bf16.mxu0 0
      %642 = vmatpush2.bf16.msra.mxu0 0
      %643 = vmatprep.subr.bf16.mxu0 0
      %644 = vmatpush2.bf16.msra.mxu0 0
      %645 = vmatprep.subr.bf16.mxu0 0
      %646 = vmatpush2.bf16.msra.mxu0 0
      %647 = vmatprep.subr.bf16.mxu0 0
      %648 = vmatpush2.bf16.msra.mxu0 0
      %649 = vmatprep.subr.bf16.mxu0 0
      %650 = vmatpush2.bf16.msra.mxu0 0
      %651 = vmatprep.mubr.bf16.mxu0 0
      %652 = vmatmul.mubr.bf16.gmra.mxu0 %v569
      %v653 = vpop.f32.mrf.mxu0
      %v654 = vadd.f32 %v439, %v653
      %v655 = vpop.f32.mrf.mxu0
      %v656 = vpop.f32.mrf.mxu0
      %v657 = vadd.f32 %v442, %v656
      %v658 = vpop.f32.mrf.mxu0
      %659 = vmatprep.mubr.bf16.mxu0 0
      %660 = vmatmul.mubr.bf16.gmra.mxu0 %v324
      %v661 = vpop.f32.mrf.mxu0
      %v662 = vadd.f32 %v447, %v661
      %v663 = vpop.f32.mrf.mxu0
      %v664 = vpop.f32.mrf.mxu0
      %v665 = vadd.f32 %v450, %v664
      %v666 = vpop.f32.mrf.mxu0
      %667 = vmatprep.mubr.bf16.mxu0 0
      %668 = vmatmul.mubr.bf16.gmra.mxu0 %v325
      %v669 = vpop.f32.mrf.mxu0
      %v670 = vadd.f32 %v455, %v669
      %v671 = vpop.f32.mrf.mxu0
      %v672 = vpop.f32.mrf.mxu0
      %v673 = vadd.f32 %v458, %v672
      %v674 = vpop.f32.mrf.mxu0
      %675 = vmatprep.mubr.bf16.mxu0 0
      %676 = vmatmul.mubr.bf16.gmra.mxu0 %v326
      %v677 = vpop.f32.mrf.mxu0
      %v678 = vadd.f32 %v463, %v677
      %v679 = vpop.f32.mrf.mxu0
      %v680 = vpop.f32.mrf.mxu0
      %v681 = vadd.f32 %v466, %v680
      %v682 = vpop.f32.mrf.mxu0
      %683 = vmatprep.mubr.bf16.mxu0 0
      %684 = vmatmul.mubr.bf16.gmra.mxu0 %v327
      %v685 = vpop.f32.mrf.mxu0
      %v686 = vadd.f32 %v471, %v685
      %v687 = vpop.f32.mrf.mxu0
      %v688 = vpop.f32.mrf.mxu0
      %v689 = vadd.f32 %v474, %v688
      %v690 = vpop.f32.mrf.mxu0
      %691 = vmatprep.mubr.bf16.mxu0 0
      %692 = vmatmul.mubr.bf16.gmra.mxu0 %v328
      %v693 = vpop.f32.mrf.mxu0
      %v694 = vadd.f32 %v479, %v693
      %v695 = vpop.f32.mrf.mxu0
      %v696 = vpop.f32.mrf.mxu0
      %v697 = vadd.f32 %v482, %v696
      %v698 = vpop.f32.mrf.mxu0
      %699 = vmatprep.mubr.bf16.mxu0 0
      %700 = vmatmul.mubr.bf16.gmra.mxu0 %v329
      %v701 = vpop.f32.mrf.mxu0
      %v702 = vadd.f32 %v487, %v701
      %v703 = vpop.f32.mrf.mxu0
      %v704 = vpop.f32.mrf.mxu0
      %v705 = vadd.f32 %v490, %v704
      %v706 = vpop.f32.mrf.mxu0
      %707 = vmatprep.mubr.bf16.mxu0 0
      %708 = vmatmul.mubr.bf16.gmra.mxu0 %v330
      %v709 = vpop.f32.mrf.mxu0
      %v710 = vadd.f32 %v495, %v709
      %v711 = vpop.f32.mrf.mxu0
      %v712 = vpop.f32.mrf.mxu0
      %v713 = vadd.f32 %v498, %v712
      %v714 = vpop.f32.mrf.mxu0
      %715 = vmatprep.mubr.bf16.mxu0 0
      %716 = vmatmul.mubr.bf16.gmra.mxu0 %v331
      %v717 = vpop.f32.mrf.mxu0
      %v718 = vadd.f32 %v503, %v717
      %v719 = vpop.f32.mrf.mxu0
      %v720 = vpop.f32.mrf.mxu0
      %v721 = vadd.f32 %v506, %v720
      %v722 = vpop.f32.mrf.mxu0
      %723 = vmatprep.mubr.bf16.mxu0 0
      %724 = vmatmul.mubr.bf16.gmra.mxu0 %v332
      %v725 = vpop.f32.mrf.mxu0
      %v726 = vadd.f32 %v511, %v725
      %v727 = vpop.f32.mrf.mxu0
      %v728 = vpop.f32.mrf.mxu0
      %v729 = vadd.f32 %v514, %v728
      %v730 = vpop.f32.mrf.mxu0
      %731 = vmatprep.mubr.bf16.mxu0 0
      %732 = vmatmul.mubr.bf16.gmra.mxu0 %v333
      %v733 = vpop.f32.mrf.mxu0
      %v734 = vadd.f32 %v519, %v733
      %v735 = vpop.f32.mrf.mxu0
      %v736 = vpop.f32.mrf.mxu0
      %v737 = vadd.f32 %v522, %v736
      %v738 = vpop.f32.mrf.mxu0
      %739 = vmatprep.mubr.bf16.mxu0 0
      %740 = vmatmul.mubr.bf16.gmra.mxu0 %v334
      %v741 = vpop.f32.mrf.mxu0
      %v742 = vadd.f32 %v527, %v741
      %v743 = vpop.f32.mrf.mxu0
      %v744 = vpop.f32.mrf.mxu0
      %v745 = vadd.f32 %v530, %v744
      %v746 = vpop.f32.mrf.mxu0
      %747 = vmatprep.mubr.bf16.mxu0 0
      %748 = vmatmul.mubr.bf16.gmra.mxu0 %v335
      %v749 = vpop.f32.mrf.mxu0
      %v750 = vadd.f32 %v535, %v749
      %v751 = vpop.f32.mrf.mxu0
      %v752 = vpop.f32.mrf.mxu0
      %v753 = vadd.f32 %v538, %v752
      %v754 = vpop.f32.mrf.mxu0
      %755 = vmatprep.mubr.bf16.mxu0 0
      %756 = vmatmul.mubr.bf16.gmra.mxu0 %v336
      %v757 = vpop.f32.mrf.mxu0
      %v758 = vadd.f32 %v543, %v757
      %v759 = vpop.f32.mrf.mxu0
      %v760 = vpop.f32.mrf.mxu0
      %v761 = vadd.f32 %v546, %v760
      %v762 = vpop.f32.mrf.mxu0
      %763 = vmatprep.mubr.bf16.mxu0 0
      %764 = vmatmul.mubr.bf16.gmra.mxu0 %v337
      %v765 = vpop.f32.mrf.mxu0
      %v766 = vadd.f32 %v551, %v765
      %v767 = vpop.f32.mrf.mxu0
      %v768 = vpop.f32.mrf.mxu0
      %v769 = vadd.f32 %v554, %v768
      %v770 = vpop.f32.mrf.mxu0
      %771 = vmatprep.mubr.bf16.mxu0 0
      %772 = vmatmul.mubr.bf16.gmra.mxu0 %v338
      %v773 = vpop.f32.mrf.mxu0
      %v774 = vadd.f32 %v559, %v773
      %v775 = vpop.f32.mrf.mxu0
      %v776 = vpop.f32.mrf.mxu0
      %v777 = vadd.f32 %v562, %v776
      %v778 = vpop.f32.mrf.mxu0
      %779 = vdwg.mxu0
      %s780 = scalar_lea.vmem %s1, 384
      %v781 = vld [vmem:[%s780] sm:$0xf]
      %v782 = vld [vmem:[%s780 + $0x4] sm:$0xf]
      %v783 = vld [vmem:[%s780 + $0x8] sm:$0xf]
      %v784 = vld [vmem:[%s780 + $0xc] sm:$0xf]
      %v785 = vld [vmem:[%s780 + $0x10] sm:$0xf]
      %v786 = vld [vmem:[%s780 + $0x14] sm:$0xf]
      %v787 = vld [vmem:[%s780 + $0x18] sm:$0xf]
      %v788 = vld [vmem:[%s780 + $0x1c] sm:$0xf]
      %v789 = vld [vmem:[%s780 + $0x20] sm:$0xf]
      %v790 = vld [vmem:[%s780 + $0x24] sm:$0xf]
      %v791 = vld [vmem:[%s780 + $0x28] sm:$0xf]
      %v792 = vld [vmem:[%s780 + $0x2c] sm:$0xf]
      %v793 = vld [vmem:[%s780 + $0x30] sm:$0xf]
      %v794 = vld [vmem:[%s780 + $0x34] sm:$0xf]
      %v795 = vld [vmem:[%s780 + $0x38] sm:$0xf]
      %v796 = vld [vmem:[%s780 + $0x3c] sm:$0xf]
      %v799 = vunpack.c.l.b16 %v224
      %v800 = vunpack.c.l.b16 %v225
      %v801 = vpack.c.b16 %v800, %v799
      %v819 = vunpack.c.l.b16 %v781
      %v820 = vunpack.c.l.b16 %v782
      %v821 = vunpack.c.l.b16 %v783
      %v822 = vunpack.c.l.b16 %v784
      %v823 = vunpack.c.l.b16 %v785
      %v824 = vunpack.c.l.b16 %v786
      %v825 = vunpack.c.l.b16 %v787
      %v826 = vunpack.c.l.b16 %v788
      %v827 = vunpack.c.l.b16 %v789
      %v828 = vunpack.c.l.b16 %v790
      %v829 = vunpack.c.l.b16 %v791
      %v830 = vunpack.c.l.b16 %v792
      %v831 = vunpack.c.l.b16 %v793
      %v832 = vunpack.c.l.b16 %v794
      %v833 = vunpack.c.l.b16 %v795
      %v834 = vunpack.c.l.b16 %v796
      %v835 = vpack.c.b16 %v820, %v819
      %v836 = vpack.c.b16 %v822, %v821
      %v837 = vpack.c.b16 %v824, %v823
      %v838 = vpack.c.b16 %v826, %v825
      %v839 = vpack.c.b16 %v828, %v827
      %v840 = vpack.c.b16 %v830, %v829
      %v841 = vpack.c.b16 %v832, %v831
      %v842 = vpack.c.b16 %v834, %v833
      %851 = vmatprep.subr.bf16.mxu0 0
      %852 = vmatpush1.bf16.msra.mxu0 %v842
      %853 = vmatprep.subr.bf16.mxu0 0
      %854 = vmatpush1.bf16.msra.mxu0 %v841
      %855 = vmatprep.subr.bf16.mxu0 0
      %856 = vmatpush1.bf16.msra.mxu0 %v840
      %857 = vmatprep.subr.bf16.mxu0 0
      %858 = vmatpush1.bf16.msra.mxu0 %v839
      %859 = vmatprep.subr.bf16.mxu0 0
      %860 = vmatpush1.bf16.msra.mxu0 %v838
      %861 = vmatprep.subr.bf16.mxu0 0
      %862 = vmatpush1.bf16.msra.mxu0 %v837
      %863 = vmatprep.subr.bf16.mxu0 0
      %864 = vmatpush1.bf16.msra.mxu0 %v836
      %865 = vmatprep.subr.bf16.mxu0 0
      %866 = vmatpush1.bf16.msra.mxu0 %v835
      %867 = vmatprep.subr.bf16.mxu0 0
      %868 = vmatpush2.bf16.msra.mxu0 0
      %869 = vmatprep.subr.bf16.mxu0 0
      %870 = vmatpush2.bf16.msra.mxu0 0
      %871 = vmatprep.subr.bf16.mxu0 0
      %872 = vmatpush2.bf16.msra.mxu0 0
      %873 = vmatprep.subr.bf16.mxu0 0
      %874 = vmatpush2.bf16.msra.mxu0 0
      %875 = vmatprep.subr.bf16.mxu0 0
      %876 = vmatpush2.bf16.msra.mxu0 0
      %877 = vmatprep.subr.bf16.mxu0 0
      %878 = vmatpush2.bf16.msra.mxu0 0
      %879 = vmatprep.subr.bf16.mxu0 0
      %880 = vmatpush2.bf16.msra.mxu0 0
      %881 = vmatprep.subr.bf16.mxu0 0
      %882 = vmatpush2.bf16.msra.mxu0 0
      %883 = vmatprep.mubr.bf16.mxu0 0
      %884 = vmatmul.mubr.bf16.gmra.mxu0 %v325
      %v885 = vpop.f32.mrf.mxu0
      %v886 = vadd.f32 0.0, %v885
      %v887 = vpop.f32.mrf.mxu0
      %v888 = vpop.f32.mrf.mxu0
      %v889 = vadd.f32 0.0, %v888
      %v890 = vpop.f32.mrf.mxu0
      %891 = vmatprep.mubr.bf16.mxu0 0
      %892 = vmatmul.mubr.bf16.gmra.mxu0 %v326
      %v893 = vpop.f32.mrf.mxu0
      %v894 = vadd.f32 0.0, %v893
      %v895 = vpop.f32.mrf.mxu0
      %v896 = vpop.f32.mrf.mxu0
      %v897 = vadd.f32 0.0, %v896
      %v898 = vpop.f32.mrf.mxu0
      %899 = vmatprep.mubr.bf16.mxu0 0
      %900 = vmatmul.mubr.bf16.gmra.mxu0 %v327
      %v901 = vpop.f32.mrf.mxu0
      %v902 = vadd.f32 0.0, %v901
      %v903 = vpop.f32.mrf.mxu0
      %v904 = vpop.f32.mrf.mxu0
      %v905 = vadd.f32 0.0, %v904
      %v906 = vpop.f32.mrf.mxu0
      %907 = vmatprep.mubr.bf16.mxu0 0
      %908 = vmatmul.mubr.bf16.gmra.mxu0 %v328
      %v909 = vpop.f32.mrf.mxu0
      %v910 = vadd.f32 0.0, %v909
      %v911 = vpop.f32.mrf.mxu0
      %v912 = vpop.f32.mrf.mxu0
      %v913 = vadd.f32 0.0, %v912
      %v914 = vpop.f32.mrf.mxu0
      %915 = vmatprep.mubr.bf16.mxu0 0
      %916 = vmatmul.mubr.bf16.gmra.mxu0 %v329
      %v917 = vpop.f32.mrf.mxu0
      %v918 = vadd.f32 0.0, %v917
      %v919 = vpop.f32.mrf.mxu0
      %v920 = vpop.f32.mrf.mxu0
      %v921 = vadd.f32 0.0, %v920
      %v922 = vpop.f32.mrf.mxu0
      %923 = vmatprep.mubr.bf16.mxu0 0
      %924 = vmatmul.mubr.bf16.gmra.mxu0 %v330
      %v925 = vpop.f32.mrf.mxu0
      %v926 = vadd.f32 0.0, %v925
      %v927 = vpop.f32.mrf.mxu0
      %v928 = vpop.f32.mrf.mxu0
      %v929 = vadd.f32 0.0, %v928
      %v930 = vpop.f32.mrf.mxu0
      %931 = vmatprep.mubr.bf16.mxu0 0
      %932 = vmatmul.mubr.bf16.gmra.mxu0 %v331
      %v933 = vpop.f32.mrf.mxu0
      %v934 = vadd.f32 0.0, %v933
      %v935 = vpop.f32.mrf.mxu0
      %v936 = vpop.f32.mrf.mxu0
      %v937 = vadd.f32 0.0, %v936
      %v938 = vpop.f32.mrf.mxu0
      %939 = vmatprep.mubr.bf16.mxu0 0
      %940 = vmatmul.mubr.bf16.gmra.mxu0 %v332
      %v941 = vpop.f32.mrf.mxu0
      %v942 = vadd.f32 0.0, %v941
      %v943 = vpop.f32.mrf.mxu0
      %v944 = vpop.f32.mrf.mxu0
      %v945 = vadd.f32 0.0, %v944
      %v946 = vpop.f32.mrf.mxu0
      %947 = vmatprep.mubr.bf16.mxu0 0
      %948 = vmatmul.mubr.bf16.gmra.mxu0 %v333
      %v949 = vpop.f32.mrf.mxu0
      %v950 = vadd.f32 0.0, %v949
      %v951 = vpop.f32.mrf.mxu0
      %v952 = vpop.f32.mrf.mxu0
      %v953 = vadd.f32 0.0, %v952
      %v954 = vpop.f32.mrf.mxu0
      %955 = vmatprep.mubr.bf16.mxu0 0
      %956 = vmatmul.mubr.bf16.gmra.mxu0 %v334
      %v957 = vpop.f32.mrf.mxu0
      %v958 = vadd.f32 0.0, %v957
      %v959 = vpop.f32.mrf.mxu0
      %v960 = vpop.f32.mrf.mxu0
      %v961 = vadd.f32 0.0, %v960
      %v962 = vpop.f32.mrf.mxu0
      %963 = vmatprep.mubr.bf16.mxu0 0
      %964 = vmatmul.mubr.bf16.gmra.mxu0 %v335
      %v965 = vpop.f32.mrf.mxu0
      %v966 = vadd.f32 0.0, %v965
      %v967 = vpop.f32.mrf.mxu0
      %v968 = vpop.f32.mrf.mxu0
      %v969 = vadd.f32 0.0, %v968
      %v970 = vpop.f32.mrf.mxu0
      %971 = vmatprep.mubr.bf16.mxu0 0
      %972 = vmatmul.mubr.bf16.gmra.mxu0 %v336
      %v973 = vpop.f32.mrf.mxu0
      %v974 = vadd.f32 0.0, %v973
      %v975 = vpop.f32.mrf.mxu0
      %v976 = vpop.f32.mrf.mxu0
      %v977 = vadd.f32 0.0, %v976
      %v978 = vpop.f32.mrf.mxu0
      %979 = vmatprep.mubr.bf16.mxu0 0
      %980 = vmatmul.mubr.bf16.gmra.mxu0 %v337
      %v981 = vpop.f32.mrf.mxu0
      %v982 = vadd.f32 0.0, %v981
      %v983 = vpop.f32.mrf.mxu0
      %v984 = vpop.f32.mrf.mxu0
      %v985 = vadd.f32 0.0, %v984
      %v986 = vpop.f32.mrf.mxu0
      %987 = vmatprep.mubr.bf16.mxu0 0
      %988 = vmatmul.mubr.bf16.gmra.mxu0 %v338
      %v989 = vpop.f32.mrf.mxu0
      %v990 = vadd.f32 0.0, %v989
      %v991 = vpop.f32.mrf.mxu0
      %v992 = vpop.f32.mrf.mxu0
      %v993 = vadd.f32 0.0, %v992
      %v994 = vpop.f32.mrf.mxu0
      %995 = vmatprep.mubr.bf16.mxu0 0
      %996 = vmatmul.mubr.bf16.gmra.mxu0 %v339
      %v997 = vpop.f32.mrf.mxu0
      %v998 = vadd.f32 0.0, %v997
      %v999 = vpop.f32.mrf.mxu0
      %v1000 = vpop.f32.mrf.mxu0
      %v1001 = vadd.f32 0.0, %v1000
      %v1002 = vpop.f32.mrf.mxu0
      %1003 = vmatprep.mubr.bf16.mxu0 0
      %1004 = vmatmul.mubr.bf16.gmra.mxu0 %v801
      %v1005 = vpop.f32.mrf.mxu0
      %v1006 = vadd.f32 0.0, %v1005
      %v1007 = vpop.f32.mrf.mxu0
      %v1008 = vpop.f32.mrf.mxu0
      %v1009 = vadd.f32 0.0, %v1008
      %v1010 = vpop.f32.mrf.mxu0
      %1011 = vdwg.mxu0
      %v1012 = vadd.f32 %v654, %v886
      %v1013 = vadd.f32 %v657, %v889
      %v1014 = vadd.f32 %v662, %v894
      %v1015 = vadd.f32 %v665, %v897
      %v1016 = vadd.f32 %v670, %v902
      %v1017 = vadd.f32 %v673, %v905
      %v1018 = vadd.f32 %v678, %v910
      %v1019 = vadd.f32 %v681, %v913
      %v1020 = vadd.f32 %v686, %v918
      %v1021 = vadd.f32 %v689, %v921
      %v1022 = vadd.f32 %v694, %v926
      %v1023 = vadd.f32 %v697, %v929
      %v1024 = vadd.f32 %v702, %v934
      %v1025 = vadd.f32 %v705, %v937
      %v1026 = vadd.f32 %v710, %v942
      %v1027 = vadd.f32 %v713, %v945
      %v1028 = vadd.f32 %v718, %v950
      %v1029 = vadd.f32 %v721, %v953
      %v1030 = vadd.f32 %v726, %v958
      %v1031 = vadd.f32 %v729, %v961
      %v1032 = vadd.f32 %v734, %v966
      %v1033 = vadd.f32 %v737, %v969
      %v1034 = vadd.f32 %v742, %v974
      %v1035 = vadd.f32 %v745, %v977
      %v1036 = vadd.f32 %v750, %v982
      %v1037 = vadd.f32 %v753, %v985
      %v1038 = vadd.f32 %v758, %v990
      %v1039 = vadd.f32 %v761, %v993
      %v1040 = vadd.f32 %v766, %v998
      %v1041 = vadd.f32 %v769, %v1001
      %v1042 = vadd.f32 %v774, %v1006
      %v1043 = vadd.f32 %v777, %v1009
      %vm1044 = vsmask.f32 3328
      %vm1045 = vsmask.f32 7440
      %vm1046 = vmor %vm1044, %vm1045
      %v1048 = vshrl.u32 %v173, 16
      %v1050 = vrot.slane %v1048, 4
      %v1051 = vshll.u32 %v173, 16
      %v1053 = vrot.slane %v1051, 5
      %v1054 = vor.u32 %v1050, %v1053
      %v1055 = vrot.slane %v1054, 4
      %v1057 = vshll.u32 %v174, 16
      %v1059 = vrot.slane %v1057, 5
      %v1060 = vsel %vm1046, %v1055, %v1059
      %v1061 = vshrl.u32 %v174, 16
      %v1063 = vrot.slane %v1061, 4
      %v1064 = vor.u32 %v1063, %v1059
      %v1065 = vrot.slane %v1064, 4
      %v1067 = vshll.u32 %v175, 16
      %v1069 = vrot.slane %v1067, 5
      %v1070 = vsel %vm1046, %v1065, %v1069
      %v1072 = vshrl.u32 %v176, 16
      %v1074 = vrot.slane %v1072, 4
      %v1075 = vshll.u32 %v176, 16
      %v1077 = vrot.slane %v1075, 5
      %v1078 = vor.u32 %v1074, %v1077
      %v1079 = vrot.slane %v1078, 4
      %v1081 = vshll.u32 %v177, 16
      %v1083 = vrot.slane %v1081, 5
      %v1084 = vsel %vm1046, %v1079, %v1083
      %v1085 = vshrl.u32 %v177, 16
      %v1087 = vrot.slane %v1085, 4
      %v1088 = vor.u32 %v1087, %v1083
      %v1089 = vrot.slane %v1088, 4
      %v1091 = vshll.u32 %v178, 16
      %v1093 = vrot.slane %v1091, 5
      %v1094 = vsel %vm1046, %v1089, %v1093
      %v1096 = vshrl.u32 %v179, 16
      %v1098 = vrot.slane %v1096, 4
      %v1099 = vshll.u32 %v179, 16
      %v1101 = vrot.slane %v1099, 5
      %v1102 = vor.u32 %v1098, %v1101
      %v1103 = vrot.slane %v1102, 4
      %v1105 = vshll.u32 %v180, 16
      %v1107 = vrot.slane %v1105, 5
      %v1108 = vsel %vm1046, %v1103, %v1107
      %v1109 = vshrl.u32 %v180, 16
      %v1111 = vrot.slane %v1109, 4
      %v1112 = vor.u32 %v1111, %v1107
      %v1113 = vrot.slane %v1112, 4
      %v1115 = vshll.u32 %v181, 16
      %v1117 = vrot.slane %v1115, 5
      %v1118 = vsel %vm1046, %v1113, %v1117
      %v1120 = vshrl.u32 %v182, 16
      %v1122 = vrot.slane %v1120, 4
      %v1123 = vshll.u32 %v182, 16
      %v1125 = vrot.slane %v1123, 5
      %v1126 = vor.u32 %v1122, %v1125
      %v1127 = vrot.slane %v1126, 4
      %v1129 = vshll.u32 %v183, 16
      %v1131 = vrot.slane %v1129, 5
      %v1132 = vsel %vm1046, %v1127, %v1131
      %v1133 = vshrl.u32 %v183, 16
      %v1135 = vrot.slane %v1133, 4
      %v1136 = vor.u32 %v1135, %v1131
      %v1137 = vrot.slane %v1136, 4
      %v1139 = vshll.u32 %v184, 16
      %v1141 = vrot.slane %v1139, 5
      %v1142 = vsel %vm1046, %v1137, %v1141
      %v1144 = vshrl.u32 %v185, 16
      %v1146 = vrot.slane %v1144, 4
      %v1147 = vshll.u32 %v185, 16
      %v1149 = vrot.slane %v1147, 5
      %v1150 = vor.u32 %v1146, %v1149
      %v1151 = vrot.slane %v1150, 4
      %v1153 = vshll.u32 %v186, 16
      %v1155 = vrot.slane %v1153, 5
      %v1156 = vsel %vm1046, %v1151, %v1155
      %v1157 = vshrl.u32 %v186, 16
      %v1159 = vrot.slane %v1157, 4
      %v1160 = vor.u32 %v1159, %v1155
      %v1161 = vrot.slane %v1160, 4
      %v1163 = vshll.u32 %v187, 16
      %v1165 = vrot.slane %v1163, 5
      %v1166 = vsel %vm1046, %v1161, %v1165
      %v1168 = vshrl.u32 %v188, 16
      %v1170 = vrot.slane %v1168, 4
      %v1171 = vshll.u32 %v188, 16
      %v1173 = vrot.slane %v1171, 5
      %v1174 = vor.u32 %v1170, %v1173
      %v1175 = vrot.slane %v1174, 4
      %v1177 = vshll.u32 %v189, 16
      %v1179 = vrot.slane %v1177, 5
      %v1180 = vsel %vm1046, %v1175, %v1179
      %v1181 = vshrl.u32 %v189, 16
      %v1183 = vrot.slane %v1181, 4
      %v1184 = vor.u32 %v1183, %v1179
      %v1185 = vrot.slane %v1184, 4
      %v1187 = vshll.u32 %v190, 16
      %v1189 = vrot.slane %v1187, 5
      %v1190 = vsel %vm1046, %v1185, %v1189
      %v1192 = vshrl.u32 %v191, 16
      %v1194 = vrot.slane %v1192, 4
      %v1195 = vshll.u32 %v191, 16
      %v1197 = vrot.slane %v1195, 5
      %v1198 = vor.u32 %v1194, %v1197
      %v1199 = vrot.slane %v1198, 4
      %v1201 = vshll.u32 %v192, 16
      %v1203 = vrot.slane %v1201, 5
      %v1204 = vsel %vm1046, %v1199, %v1203
      %v1205 = vshrl.u32 %v192, 16
      %v1207 = vrot.slane %v1205, 4
      %v1208 = vor.u32 %v1207, %v1203
      %v1209 = vrot.slane %v1208, 4
      %v1211 = vshll.u32 %v193, 16
      %v1213 = vrot.slane %v1211, 5
      %v1214 = vsel %vm1046, %v1209, %v1213
      %v1216 = vshrl.u32 %v194, 16
      %v1218 = vrot.slane %v1216, 4
      %v1219 = vshll.u32 %v194, 16
      %v1221 = vrot.slane %v1219, 5
      %v1222 = vor.u32 %v1218, %v1221
      %v1223 = vrot.slane %v1222, 4
      %v1225 = vshll.u32 %v195, 16
      %v1227 = vrot.slane %v1225, 5
      %v1228 = vsel %vm1046, %v1223, %v1227
      %v1229 = vshrl.u32 %v195, 16
      %v1231 = vrot.slane %v1229, 4
      %v1232 = vor.u32 %v1231, %v1227
      %v1233 = vrot.slane %v1232, 4
      %v1235 = vshll.u32 %v196, 16
      %v1237 = vrot.slane %v1235, 5
      %v1238 = vsel %vm1046, %v1233, %v1237
      %v1240 = vshrl.u32 %v197, 16
      %v1242 = vrot.slane %v1240, 4
      %v1243 = vshll.u32 %v197, 16
      %v1245 = vrot.slane %v1243, 5
      %v1246 = vor.u32 %v1242, %v1245
      %v1247 = vrot.slane %v1246, 4
      %v1249 = vshll.u32 %v198, 16
      %v1251 = vrot.slane %v1249, 5
      %v1252 = vsel %vm1046, %v1247, %v1251
      %v1253 = vshrl.u32 %v198, 16
      %v1255 = vrot.slane %v1253, 4
      %v1256 = vor.u32 %v1255, %v1251
      %v1257 = vrot.slane %v1256, 4
      %v1259 = vshll.u32 %v199, 16
      %v1261 = vrot.slane %v1259, 5
      %v1262 = vsel %vm1046, %v1257, %v1261
      %v1264 = vshrl.u32 %v200, 16
      %v1266 = vrot.slane %v1264, 4
      %v1267 = vshll.u32 %v200, 16
      %v1269 = vrot.slane %v1267, 5
      %v1270 = vor.u32 %v1266, %v1269
      %v1271 = vrot.slane %v1270, 4
      %v1273 = vshll.u32 %v201, 16
      %v1275 = vrot.slane %v1273, 5
      %v1276 = vsel %vm1046, %v1271, %v1275
      %v1277 = vshrl.u32 %v201, 16
      %v1279 = vrot.slane %v1277, 4
      %v1280 = vor.u32 %v1279, %v1275
      %v1281 = vrot.slane %v1280, 4
      %v1283 = vshll.u32 %v202, 16
      %v1285 = vrot.slane %v1283, 5
      %v1286 = vsel %vm1046, %v1281, %v1285
      %v1288 = vshrl.u32 %v203, 16
      %v1290 = vrot.slane %v1288, 4
      %v1291 = vshll.u32 %v203, 16
      %v1293 = vrot.slane %v1291, 5
      %v1294 = vor.u32 %v1290, %v1293
      %v1295 = vrot.slane %v1294, 4
      %v1297 = vshll.u32 %v204, 16
      %v1299 = vrot.slane %v1297, 5
      %v1300 = vsel %vm1046, %v1295, %v1299
      %v1301 = vshrl.u32 %v204, 16
      %v1303 = vrot.slane %v1301, 4
      %v1304 = vor.u32 %v1303, %v1299
      %v1305 = vrot.slane %v1304, 4
      %v1307 = vshll.u32 %v205, 16
      %v1309 = vrot.slane %v1307, 5
      %v1310 = vsel %vm1046, %v1305, %v1309
      %v1312 = vshrl.u32 %v206, 16
      %v1314 = vrot.slane %v1312, 4
      %v1315 = vshll.u32 %v206, 16
      %v1317 = vrot.slane %v1315, 5
      %v1318 = vor.u32 %v1314, %v1317
      %v1319 = vrot.slane %v1318, 4
      %v1321 = vshll.u32 %v207, 16
      %v1323 = vrot.slane %v1321, 5
      %v1324 = vsel %vm1046, %v1319, %v1323
      %v1325 = vshrl.u32 %v207, 16
      %v1327 = vrot.slane %v1325, 4
      %v1328 = vor.u32 %v1327, %v1323
      %v1329 = vrot.slane %v1328, 4
      %v1331 = vshll.u32 %v208, 16
      %v1333 = vrot.slane %v1331, 5
      %v1334 = vsel %vm1046, %v1329, %v1333
      %v1336 = vshrl.u32 %v209, 16
      %v1338 = vrot.slane %v1336, 4
      %v1339 = vshll.u32 %v209, 16
      %v1341 = vrot.slane %v1339, 5
      %v1342 = vor.u32 %v1338, %v1341
      %v1343 = vrot.slane %v1342, 4
      %v1345 = vshll.u32 %v210, 16
      %v1347 = vrot.slane %v1345, 5
      %v1348 = vsel %vm1046, %v1343, %v1347
      %v1349 = vshrl.u32 %v210, 16
      %v1351 = vrot.slane %v1349, 4
      %v1352 = vor.u32 %v1351, %v1347
      %v1353 = vrot.slane %v1352, 4
      %v1355 = vshll.u32 %v211, 16
      %v1357 = vrot.slane %v1355, 5
      %v1358 = vsel %vm1046, %v1353, %v1357
      %v1360 = vshrl.u32 %v212, 16
      %v1362 = vrot.slane %v1360, 4
      %v1363 = vshll.u32 %v212, 16
      %v1365 = vrot.slane %v1363, 5
      %v1366 = vor.u32 %v1362, %v1365
      %v1367 = vrot.slane %v1366, 4
      %v1369 = vshll.u32 %v213, 16
      %v1371 = vrot.slane %v1369, 5
      %v1372 = vsel %vm1046, %v1367, %v1371
      %v1373 = vshrl.u32 %v213, 16
      %v1375 = vrot.slane %v1373, 4
      %v1376 = vor.u32 %v1375, %v1371
      %v1377 = vrot.slane %v1376, 4
      %v1379 = vshll.u32 %v214, 16
      %v1381 = vrot.slane %v1379, 5
      %v1382 = vsel %vm1046, %v1377, %v1381
      %v1384 = vshrl.u32 %v215, 16
      %v1386 = vrot.slane %v1384, 4
      %v1387 = vshll.u32 %v215, 16
      %v1389 = vrot.slane %v1387, 5
      %v1390 = vor.u32 %v1386, %v1389
      %v1391 = vrot.slane %v1390, 4
      %v1393 = vshll.u32 %v216, 16
      %v1395 = vrot.slane %v1393, 5
      %v1396 = vsel %vm1046, %v1391, %v1395
      %v1397 = vshrl.u32 %v216, 16
      %v1399 = vrot.slane %v1397, 4
      %v1400 = vor.u32 %v1399, %v1395
      %v1401 = vrot.slane %v1400, 4
      %v1403 = vshll.u32 %v217, 16
      %v1405 = vrot.slane %v1403, 5
      %v1406 = vsel %vm1046, %v1401, %v1405
      %v1408 = vshrl.u32 %v218, 16
      %v1410 = vrot.slane %v1408, 4
      %v1411 = vshll.u32 %v218, 16
      %v1413 = vrot.slane %v1411, 5
      %v1414 = vor.u32 %v1410, %v1413
      %v1415 = vrot.slane %v1414, 4
      %v1417 = vshll.u32 %v219, 16
      %v1419 = vrot.slane %v1417, 5
      %v1420 = vsel %vm1046, %v1415, %v1419
      %v1421 = vshrl.u32 %v219, 16
      %v1423 = vrot.slane %v1421, 4
      %v1424 = vor.u32 %v1423, %v1419
      %v1425 = vrot.slane %v1424, 4
      %v1427 = vshll.u32 %v220, 16
      %v1429 = vrot.slane %v1427, 5
      %v1430 = vsel %vm1046, %v1425, %v1429
      %s1431 = scalar_lea.vmem %s1, 64
      %v1432 = vld [vmem:[%s1431] sm:$0xf]
      %v1433 = vld [vmem:[%s1431 + $0x4] sm:$0xf]
      %v1434 = vld [vmem:[%s1431 + $0x8] sm:$0xf]
      %v1435 = vld [vmem:[%s1431 + $0xc] sm:$0xf]
      %v1436 = vld [vmem:[%s1431 + $0x10] sm:$0xf]
      %v1437 = vld [vmem:[%s1431 + $0x14] sm:$0xf]
      %v1438 = vld [vmem:[%s1431 + $0x18] sm:$0xf]
      %v1439 = vld [vmem:[%s1431 + $0x1c] sm:$0xf]
      %v1440 = vld [vmem:[%s1431 + $0x20] sm:$0xf]
      %v1441 = vld [vmem:[%s1431 + $0x24] sm:$0xf]
      %v1442 = vld [vmem:[%s1431 + $0x28] sm:$0xf]
      %v1443 = vld [vmem:[%s1431 + $0x2c] sm:$0xf]
      %v1444 = vld [vmem:[%s1431 + $0x30] sm:$0xf]
      %v1445 = vld [vmem:[%s1431 + $0x34] sm:$0xf]
      %v1446 = vld [vmem:[%s1431 + $0x38] sm:$0xf]
      %v1447 = vld [vmem:[%s1431 + $0x3c] sm:$0xf]
      %v1448 = vunpack.c.l.b16 %v1060
      %v1449 = vunpack.c.l.b16 %v1070
      %v1450 = vunpack.c.l.b16 %v1084
      %v1451 = vunpack.c.l.b16 %v1094
      %v1452 = vunpack.c.l.b16 %v1108
      %v1453 = vunpack.c.l.b16 %v1118
      %v1454 = vunpack.c.l.b16 %v1132
      %v1455 = vunpack.c.l.b16 %v1142
      %v1456 = vunpack.c.l.b16 %v1156
      %v1457 = vunpack.c.l.b16 %v1166
      %v1458 = vunpack.c.l.b16 %v1180
      %v1459 = vunpack.c.l.b16 %v1190
      %v1460 = vunpack.c.l.b16 %v1204
      %v1461 = vunpack.c.l.b16 %v1214
      %v1462 = vunpack.c.l.b16 %v1228
      %v1463 = vunpack.c.l.b16 %v1238
      %v1464 = vunpack.c.l.b16 %v1252
      %v1465 = vunpack.c.l.b16 %v1262
      %v1466 = vunpack.c.l.b16 %v1276
      %v1467 = vunpack.c.l.b16 %v1286
      %v1468 = vunpack.c.l.b16 %v1300
      %v1469 = vunpack.c.l.b16 %v1310
      %v1470 = vunpack.c.l.b16 %v1324
      %v1471 = vunpack.c.l.b16 %v1334
      %v1472 = vunpack.c.l.b16 %v1348
      %v1473 = vunpack.c.l.b16 %v1358
      %v1474 = vunpack.c.l.b16 %v1372
      %v1475 = vunpack.c.l.b16 %v1382
      %v1476 = vunpack.c.l.b16 %v1396
      %v1477 = vunpack.c.l.b16 %v1406
      %v1478 = vunpack.c.l.b16 %v1420
      %v1479 = vunpack.c.l.b16 %v1430
      %v1480 = vpack.c.b16 %v1449, %v1448
      %v1481 = vpack.c.b16 %v1451, %v1450
      %v1482 = vpack.c.b16 %v1453, %v1452
      %v1483 = vpack.c.b16 %v1455, %v1454
      %v1484 = vpack.c.b16 %v1457, %v1456
      %v1485 = vpack.c.b16 %v1459, %v1458
      %v1486 = vpack.c.b16 %v1461, %v1460
      %v1487 = vpack.c.b16 %v1463, %v1462
      %v1488 = vpack.c.b16 %v1465, %v1464
      %v1489 = vpack.c.b16 %v1467, %v1466
      %v1490 = vpack.c.b16 %v1469, %v1468
      %v1491 = vpack.c.b16 %v1471, %v1470
      %v1492 = vpack.c.b16 %v1473, %v1472
      %v1493 = vpack.c.b16 %v1475, %v1474
      %v1494 = vpack.c.b16 %v1477, %v1476
      %v1495 = vpack.c.b16 %v1479, %v1478
      %v1528 = vunpack.c.l.b16 %v1432
      %v1529 = vunpack.c.l.b16 %v1433
      %v1530 = vunpack.c.l.b16 %v1434
      %v1531 = vunpack.c.l.b16 %v1435
      %v1532 = vunpack.c.l.b16 %v1436
      %v1533 = vunpack.c.l.b16 %v1437
      %v1534 = vunpack.c.l.b16 %v1438
      %v1535 = vunpack.c.l.b16 %v1439
      %v1536 = vunpack.c.l.b16 %v1440
      %v1537 = vunpack.c.l.b16 %v1441
      %v1538 = vunpack.c.l.b16 %v1442
      %v1539 = vunpack.c.l.b16 %v1443
      %v1540 = vunpack.c.l.b16 %v1444
      %v1541 = vunpack.c.l.b16 %v1445
      %v1542 = vunpack.c.l.b16 %v1446
      %v1543 = vunpack.c.l.b16 %v1447
      %v1544 = vpack.c.b16 %v1529, %v1528
      %v1545 = vpack.c.b16 %v1531, %v1530
      %v1546 = vpack.c.b16 %v1533, %v1532
      %v1547 = vpack.c.b16 %v1535, %v1534
      %v1548 = vpack.c.b16 %v1537, %v1536
      %v1549 = vpack.c.b16 %v1539, %v1538
      %v1550 = vpack.c.b16 %v1541, %v1540
      %v1551 = vpack.c.b16 %v1543, %v1542
      %1560 = vmatprep.subr.bf16.mxu0 0
      %1561 = vmatpush1.bf16.msra.mxu0 %v1551
      %1562 = vmatprep.subr.bf16.mxu0 0
      %1563 = vmatpush1.bf16.msra.mxu0 %v1550
      %1564 = vmatprep.subr.bf16.mxu0 0
      %1565 = vmatpush1.bf16.msra.mxu0 %v1549
      %1566 = vmatprep.subr.bf16.mxu0 0
      %1567 = vmatpush1.bf16.msra.mxu0 %v1548
      %1568 = vmatprep.subr.bf16.mxu0 0
      %1569 = vmatpush1.bf16.msra.mxu0 %v1547
      %1570 = vmatprep.subr.bf16.mxu0 0
      %1571 = vmatpush1.bf16.msra.mxu0 %v1546
      %1572 = vmatprep.subr.bf16.mxu0 0
      %1573 = vmatpush1.bf16.msra.mxu0 %v1545
      %1574 = vmatprep.subr.bf16.mxu0 0
      %1575 = vmatpush1.bf16.msra.mxu0 %v1544
      %1576 = vmatprep.subr.bf16.mxu0 0
      %1577 = vmatpush2.bf16.msra.mxu0 0
      %1578 = vmatprep.subr.bf16.mxu0 0
      %1579 = vmatpush2.bf16.msra.mxu0 0
      %1580 = vmatprep.subr.bf16.mxu0 0
      %1581 = vmatpush2.bf16.msra.mxu0 0
      %1582 = vmatprep.subr.bf16.mxu0 0
      %1583 = vmatpush2.bf16.msra.mxu0 0
      %1584 = vmatprep.subr.bf16.mxu0 0
      %1585 = vmatpush2.bf16.msra.mxu0 0
      %1586 = vmatprep.subr.bf16.mxu0 0
      %1587 = vmatpush2.bf16.msra.mxu0 0
      %1588 = vmatprep.subr.bf16.mxu0 0
      %1589 = vmatpush2.bf16.msra.mxu0 0
      %1590 = vmatprep.subr.bf16.mxu0 0
      %1591 = vmatpush2.bf16.msra.mxu0 0
      %1592 = vmatprep.mubr.bf16.mxu0 0
      %1593 = vmatmul.mubr.bf16.gmra.mxu0 %v1480
      %v1594 = vpop.f32.mrf.mxu0
      %v1595 = vadd.f32 0.0, %v1594
      %v1596 = vpop.f32.mrf.mxu0
      %v1597 = vpop.f32.mrf.mxu0
      %v1598 = vadd.f32 0.0, %v1597
      %v1599 = vpop.f32.mrf.mxu0
      %1600 = vmatprep.mubr.bf16.mxu0 0
      %1601 = vmatmul.mubr.bf16.gmra.mxu0 %v1481
      %v1602 = vpop.f32.mrf.mxu0
      %v1603 = vadd.f32 0.0, %v1602
      %v1604 = vpop.f32.mrf.mxu0
      %v1605 = vpop.f32.mrf.mxu0
      %v1606 = vadd.f32 0.0, %v1605
      %v1607 = vpop.f32.mrf.mxu0
      %1608 = vmatprep.mubr.bf16.mxu0 0
      %1609 = vmatmul.mubr.bf16.gmra.mxu0 %v1482
      %v1610 = vpop.f32.mrf.mxu0
      %v1611 = vadd.f32 0.0, %v1610
      %v1612 = vpop.f32.mrf.mxu0
      %v1613 = vpop.f32.mrf.mxu0
      %v1614 = vadd.f32 0.0, %v1613
      %v1615 = vpop.f32.mrf.mxu0
      %1616 = vmatprep.mubr.bf16.mxu0 0
      %1617 = vmatmul.mubr.bf16.gmra.mxu0 %v1483
      %v1618 = vpop.f32.mrf.mxu0
      %v1619 = vadd.f32 0.0, %v1618
      %v1620 = vpop.f32.mrf.mxu0
      %v1621 = vpop.f32.mrf.mxu0
      %v1622 = vadd.f32 0.0, %v1621
      %v1623 = vpop.f32.mrf.mxu0
      %1624 = vmatprep.mubr.bf16.mxu0 0
      %1625 = vmatmul.mubr.bf16.gmra.mxu0 %v1484
      %v1626 = vpop.f32.mrf.mxu0
      %v1627 = vadd.f32 0.0, %v1626
      %v1628 = vpop.f32.mrf.mxu0
      %v1629 = vpop.f32.mrf.mxu0
      %v1630 = vadd.f32 0.0, %v1629
      %v1631 = vpop.f32.mrf.mxu0
      %1632 = vmatprep.mubr.bf16.mxu0 0
      %1633 = vmatmul.mubr.bf16.gmra.mxu0 %v1485
      %v1634 = vpop.f32.mrf.mxu0
      %v1635 = vadd.f32 0.0, %v1634
      %v1636 = vpop.f32.mrf.mxu0
      %v1637 = vpop.f32.mrf.mxu0
      %v1638 = vadd.f32 0.0, %v1637
      %v1639 = vpop.f32.mrf.mxu0
      %1640 = vmatprep.mubr.bf16.mxu0 0
      %1641 = vmatmul.mubr.bf16.gmra.mxu0 %v1486
      %v1642 = vpop.f32.mrf.mxu0
      %v1643 = vadd.f32 0.0, %v1642
      %v1644 = vpop.f32.mrf.mxu0
      %v1645 = vpop.f32.mrf.mxu0
      %v1646 = vadd.f32 0.0, %v1645
      %v1647 = vpop.f32.mrf.mxu0
      %1648 = vmatprep.mubr.bf16.mxu0 0
      %1649 = vmatmul.mubr.bf16.gmra.mxu0 %v1487
      %v1650 = vpop.f32.mrf.mxu0
      %v1651 = vadd.f32 0.0, %v1650
      %v1652 = vpop.f32.mrf.mxu0
      %v1653 = vpop.f32.mrf.mxu0
      %v1654 = vadd.f32 0.0, %v1653
      %v1655 = vpop.f32.mrf.mxu0
      %1656 = vmatprep.mubr.bf16.mxu0 0
      %1657 = vmatmul.mubr.bf16.gmra.mxu0 %v1488
      %v1658 = vpop.f32.mrf.mxu0
      %v1659 = vadd.f32 0.0, %v1658
      %v1660 = vpop.f32.mrf.mxu0
      %v1661 = vpop.f32.mrf.mxu0
      %v1662 = vadd.f32 0.0, %v1661
      %v1663 = vpop.f32.mrf.mxu0
      %1664 = vmatprep.mubr.bf16.mxu0 0
      %1665 = vmatmul.mubr.bf16.gmra.mxu0 %v1489
      %v1666 = vpop.f32.mrf.mxu0
      %v1667 = vadd.f32 0.0, %v1666
      %v1668 = vpop.f32.mrf.mxu0
      %v1669 = vpop.f32.mrf.mxu0
      %v1670 = vadd.f32 0.0, %v1669
      %v1671 = vpop.f32.mrf.mxu0
      %1672 = vmatprep.mubr.bf16.mxu0 0
      %1673 = vmatmul.mubr.bf16.gmra.mxu0 %v1490
      %v1674 = vpop.f32.mrf.mxu0
      %v1675 = vadd.f32 0.0, %v1674
      %v1676 = vpop.f32.mrf.mxu0
      %v1677 = vpop.f32.mrf.mxu0
      %v1678 = vadd.f32 0.0, %v1677
      %v1679 = vpop.f32.mrf.mxu0
      %1680 = vmatprep.mubr.bf16.mxu0 0
      %1681 = vmatmul.mubr.bf16.gmra.mxu0 %v1491
      %v1682 = vpop.f32.mrf.mxu0
      %v1683 = vadd.f32 0.0, %v1682
      %v1684 = vpop.f32.mrf.mxu0
      %v1685 = vpop.f32.mrf.mxu0
      %v1686 = vadd.f32 0.0, %v1685
      %v1687 = vpop.f32.mrf.mxu0
      %1688 = vmatprep.mubr.bf16.mxu0 0
      %1689 = vmatmul.mubr.bf16.gmra.mxu0 %v1492
      %v1690 = vpop.f32.mrf.mxu0
      %v1691 = vadd.f32 0.0, %v1690
      %v1692 = vpop.f32.mrf.mxu0
      %v1693 = vpop.f32.mrf.mxu0
      %v1694 = vadd.f32 0.0, %v1693
      %v1695 = vpop.f32.mrf.mxu0
      %1696 = vmatprep.mubr.bf16.mxu0 0
      %1697 = vmatmul.mubr.bf16.gmra.mxu0 %v1493
      %v1698 = vpop.f32.mrf.mxu0
      %v1699 = vadd.f32 0.0, %v1698
      %v1700 = vpop.f32.mrf.mxu0
      %v1701 = vpop.f32.mrf.mxu0
      %v1702 = vadd.f32 0.0, %v1701
      %v1703 = vpop.f32.mrf.mxu0
      %1704 = vmatprep.mubr.bf16.mxu0 0
      %1705 = vmatmul.mubr.bf16.gmra.mxu0 %v1494
      %v1706 = vpop.f32.mrf.mxu0
      %v1707 = vadd.f32 0.0, %v1706
      %v1708 = vpop.f32.mrf.mxu0
      %v1709 = vpop.f32.mrf.mxu0
      %v1710 = vadd.f32 0.0, %v1709
      %v1711 = vpop.f32.mrf.mxu0
      %1712 = vmatprep.mubr.bf16.mxu0 0
      %1713 = vmatmul.mubr.bf16.gmra.mxu0 %v1495
      %v1714 = vpop.f32.mrf.mxu0
      %v1715 = vadd.f32 0.0, %v1714
      %v1716 = vpop.f32.mrf.mxu0
      %v1717 = vpop.f32.mrf.mxu0
      %v1718 = vadd.f32 0.0, %v1717
      %v1719 = vpop.f32.mrf.mxu0
      %1720 = vdwg.mxu0
      %v1721 = vadd.f32 %v1012, %v1595
      %v1722 = vadd.f32 %v1013, %v1598
      %v1723 = vadd.f32 %v1014, %v1603
      %v1724 = vadd.f32 %v1015, %v1606
      %v1725 = vadd.f32 %v1016, %v1611
      %v1726 = vadd.f32 %v1017, %v1614
      %v1727 = vadd.f32 %v1018, %v1619
      %v1728 = vadd.f32 %v1019, %v1622
      %v1729 = vadd.f32 %v1020, %v1627
      %v1730 = vadd.f32 %v1021, %v1630
      %v1731 = vadd.f32 %v1022, %v1635
      %v1732 = vadd.f32 %v1023, %v1638
      %v1733 = vadd.f32 %v1024, %v1643
      %v1734 = vadd.f32 %v1025, %v1646
      %v1735 = vadd.f32 %v1026, %v1651
      %v1736 = vadd.f32 %v1027, %v1654
      %v1737 = vadd.f32 %v1028, %v1659
      %v1738 = vadd.f32 %v1029, %v1662
      %v1739 = vadd.f32 %v1030, %v1667
      %v1740 = vadd.f32 %v1031, %v1670
      %v1741 = vadd.f32 %v1032, %v1675
      %v1742 = vadd.f32 %v1033, %v1678
      %v1743 = vadd.f32 %v1034, %v1683
      %v1744 = vadd.f32 %v1035, %v1686
      %v1745 = vadd.f32 %v1036, %v1691
      %v1746 = vadd.f32 %v1037, %v1694
      %v1747 = vadd.f32 %v1038, %v1699
      %v1748 = vadd.f32 %v1039, %v1702
      %v1749 = vadd.f32 %v1040, %v1707
      %v1750 = vadd.f32 %v1041, %v1710
      %v1751 = vadd.f32 %v1042, %v1715
      %v1752 = vadd.f32 %v1043, %v1718
      %v1754 = vshrl.u32 %v221, 16
      %v1756 = vrot.slane %v1754, 4
      %v1757 = vshll.u32 %v221, 16
      %v1759 = vrot.slane %v1757, 5
      %v1760 = vor.u32 %v1756, %v1759
      %v1761 = vrot.slane %v1760, 4
      %v1763 = vshll.u32 %v222, 16
      %v1765 = vrot.slane %v1763, 5
      %v1766 = vsel %vm1046, %v1761, %v1765
      %v1767 = vshrl.u32 %v222, 16
      %v1769 = vrot.slane %v1767, 4
      %v1770 = vor.u32 %v1769, %v1765
      %v1771 = vrot.slane %v1770, 4
      %v1773 = vshll.u32 %v223, 16
      %v1775 = vrot.slane %v1773, 5
      %v1776 = vsel %vm1046, %v1771, %v1775
      %s1777 = scalar_lea.vmem %s1, 256
      %v1778 = vld [vmem:[%s1777] sm:$0xf]
      %v1779 = vld [vmem:[%s1777 + $0x4] sm:$0xf]
      %v1780 = vld [vmem:[%s1777 + $0x8] sm:$0xf]
      %v1781 = vld [vmem:[%s1777 + $0xc] sm:$0xf]
      %v1782 = vld [vmem:[%s1777 + $0x10] sm:$0xf]
      %v1783 = vld [vmem:[%s1777 + $0x14] sm:$0xf]
      %v1784 = vld [vmem:[%s1777 + $0x18] sm:$0xf]
      %v1785 = vld [vmem:[%s1777 + $0x1c] sm:$0xf]
      %v1786 = vld [vmem:[%s1777 + $0x20] sm:$0xf]
      %v1787 = vld [vmem:[%s1777 + $0x24] sm:$0xf]
      %v1788 = vld [vmem:[%s1777 + $0x28] sm:$0xf]
      %v1789 = vld [vmem:[%s1777 + $0x2c] sm:$0xf]
      %v1790 = vld [vmem:[%s1777 + $0x30] sm:$0xf]
      %v1791 = vld [vmem:[%s1777 + $0x34] sm:$0xf]
      %v1792 = vld [vmem:[%s1777 + $0x38] sm:$0xf]
      %v1793 = vld [vmem:[%s1777 + $0x3c] sm:$0xf]
      %v1794 = vunpack.c.l.b16 %v1766
      %v1795 = vunpack.c.l.b16 %v1776
      %v1796 = vpack.c.b16 %v1795, %v1794
      %v1814 = vunpack.c.l.b16 %v1778
      %v1815 = vunpack.c.l.b16 %v1779
      %v1816 = vunpack.c.l.b16 %v1780
      %v1817 = vunpack.c.l.b16 %v1781
      %v1818 = vunpack.c.l.b16 %v1782
      %v1819 = vunpack.c.l.b16 %v1783
      %v1820 = vunpack.c.l.b16 %v1784
      %v1821 = vunpack.c.l.b16 %v1785
      %v1822 = vunpack.c.l.b16 %v1786
      %v1823 = vunpack.c.l.b16 %v1787
      %v1824 = vunpack.c.l.b16 %v1788
      %v1825 = vunpack.c.l.b16 %v1789
      %v1826 = vunpack.c.l.b16 %v1790
      %v1827 = vunpack.c.l.b16 %v1791
      %v1828 = vunpack.c.l.b16 %v1792
      %v1829 = vunpack.c.l.b16 %v1793
      %v1830 = vpack.c.b16 %v1815, %v1814
      %v1831 = vpack.c.b16 %v1817, %v1816
      %v1832 = vpack.c.b16 %v1819, %v1818
      %v1833 = vpack.c.b16 %v1821, %v1820
      %v1834 = vpack.c.b16 %v1823, %v1822
      %v1835 = vpack.c.b16 %v1825, %v1824
      %v1836 = vpack.c.b16 %v1827, %v1826
      %v1837 = vpack.c.b16 %v1829, %v1828
      %1846 = vmatprep.subr.bf16.mxu0 0
      %1847 = vmatpush1.bf16.msra.mxu0 %v1837
      %1848 = vmatprep.subr.bf16.mxu0 0
      %1849 = vmatpush1.bf16.msra.mxu0 %v1836
      %1850 = vmatprep.subr.bf16.mxu0 0
      %1851 = vmatpush1.bf16.msra.mxu0 %v1835
      %1852 = vmatprep.subr.bf16.mxu0 0
      %1853 = vmatpush1.bf16.msra.mxu0 %v1834
      %1854 = vmatprep.subr.bf16.mxu0 0
      %1855 = vmatpush1.bf16.msra.mxu0 %v1833
      %1856 = vmatprep.subr.bf16.mxu0 0
      %1857 = vmatpush1.bf16.msra.mxu0 %v1832
      %1858 = vmatprep.subr.bf16.mxu0 0
      %1859 = vmatpush1.bf16.msra.mxu0 %v1831
      %1860 = vmatprep.subr.bf16.mxu0 0
      %1861 = vmatpush1.bf16.msra.mxu0 %v1830
      %1862 = vmatprep.subr.bf16.mxu0 0
      %1863 = vmatpush2.bf16.msra.mxu0 0
      %1864 = vmatprep.subr.bf16.mxu0 0
      %1865 = vmatpush2.bf16.msra.mxu0 0
      %1866 = vmatprep.subr.bf16.mxu0 0
      %1867 = vmatpush2.bf16.msra.mxu0 0
      %1868 = vmatprep.subr.bf16.mxu0 0
      %1869 = vmatpush2.bf16.msra.mxu0 0
      %1870 = vmatprep.subr.bf16.mxu0 0
      %1871 = vmatpush2.bf16.msra.mxu0 0
      %1872 = vmatprep.subr.bf16.mxu0 0
      %1873 = vmatpush2.bf16.msra.mxu0 0
      %1874 = vmatprep.subr.bf16.mxu0 0
      %1875 = vmatpush2.bf16.msra.mxu0 0
      %1876 = vmatprep.subr.bf16.mxu0 0
      %1877 = vmatpush2.bf16.msra.mxu0 0
      %1878 = vmatprep.mubr.bf16.mxu0 0
      %1879 = vmatmul.mubr.bf16.gmra.mxu0 %v1481
      %v1880 = vpop.f32.mrf.mxu0
      %v1881 = vadd.f32 0.0, %v1880
      %v1882 = vpop.f32.mrf.mxu0
      %v1883 = vpop.f32.mrf.mxu0
      %v1884 = vadd.f32 0.0, %v1883
      %v1885 = vpop.f32.mrf.mxu0
      %1886 = vmatprep.mubr.bf16.mxu0 0
      %1887 = vmatmul.mubr.bf16.gmra.mxu0 %v1482
      %v1888 = vpop.f32.mrf.mxu0
      %v1889 = vadd.f32 0.0, %v1888
      %v1890 = vpop.f32.mrf.mxu0
      %v1891 = vpop.f32.mrf.mxu0
      %v1892 = vadd.f32 0.0, %v1891
      %v1893 = vpop.f32.mrf.mxu0
      %1894 = vmatprep.mubr.bf16.mxu0 0
      %1895 = vmatmul.mubr.bf16.gmra.mxu0 %v1483
      %v1896 = vpop.f32.mrf.mxu0
      %v1897 = vadd.f32 0.0, %v1896
      %v1898 = vpop.f32.mrf.mxu0
      %v1899 = vpop.f32.mrf.mxu0
      %v1900 = vadd.f32 0.0, %v1899
      %v1901 = vpop.f32.mrf.mxu0
      %1902 = vmatprep.mubr.bf16.mxu0 0
      %1903 = vmatmul.mubr.bf16.gmra.mxu0 %v1484
      %v1904 = vpop.f32.mrf.mxu0
      %v1905 = vadd.f32 0.0, %v1904
      %v1906 = vpop.f32.mrf.mxu0
      %v1907 = vpop.f32.mrf.mxu0
      %v1908 = vadd.f32 0.0, %v1907
      %v1909 = vpop.f32.mrf.mxu0
      %1910 = vmatprep.mubr.bf16.mxu0 0
      %1911 = vmatmul.mubr.bf16.gmra.mxu0 %v1485
      %v1912 = vpop.f32.mrf.mxu0
      %v1913 = vadd.f32 0.0, %v1912
      %v1914 = vpop.f32.mrf.mxu0
      %v1915 = vpop.f32.mrf.mxu0
      %v1916 = vadd.f32 0.0, %v1915
      %v1917 = vpop.f32.mrf.mxu0
      %1918 = vmatprep.mubr.bf16.mxu0 0
      %1919 = vmatmul.mubr.bf16.gmra.mxu0 %v1486
      %v1920 = vpop.f32.mrf.mxu0
      %v1921 = vadd.f32 0.0, %v1920
      %v1922 = vpop.f32.mrf.mxu0
      %v1923 = vpop.f32.mrf.mxu0
      %v1924 = vadd.f32 0.0, %v1923
      %v1925 = vpop.f32.mrf.mxu0
      %1926 = vmatprep.mubr.bf16.mxu0 0
      %1927 = vmatmul.mubr.bf16.gmra.mxu0 %v1487
      %v1928 = vpop.f32.mrf.mxu0
      %v1929 = vadd.f32 0.0, %v1928
      %v1930 = vpop.f32.mrf.mxu0
      %v1931 = vpop.f32.mrf.mxu0
      %v1932 = vadd.f32 0.0, %v1931
      %v1933 = vpop.f32.mrf.mxu0
      %1934 = vmatprep.mubr.bf16.mxu0 0
      %1935 = vmatmul.mubr.bf16.gmra.mxu0 %v1488
      %v1936 = vpop.f32.mrf.mxu0
      %v1937 = vadd.f32 0.0, %v1936
      %v1938 = vpop.f32.mrf.mxu0
      %v1939 = vpop.f32.mrf.mxu0
      %v1940 = vadd.f32 0.0, %v1939
      %v1941 = vpop.f32.mrf.mxu0
      %1942 = vmatprep.mubr.bf16.mxu0 0
      %1943 = vmatmul.mubr.bf16.gmra.mxu0 %v1489
      %v1944 = vpop.f32.mrf.mxu0
      %v1945 = vadd.f32 0.0, %v1944
      %v1946 = vpop.f32.mrf.mxu0
      %v1947 = vpop.f32.mrf.mxu0
      %v1948 = vadd.f32 0.0, %v1947
      %v1949 = vpop.f32.mrf.mxu0
      %1950 = vmatprep.mubr.bf16.mxu0 0
      %1951 = vmatmul.mubr.bf16.gmra.mxu0 %v1490
      %v1952 = vpop.f32.mrf.mxu0
      %v1953 = vadd.f32 0.0, %v1952
      %v1954 = vpop.f32.mrf.mxu0
      %v1955 = vpop.f32.mrf.mxu0
      %v1956 = vadd.f32 0.0, %v1955
      %v1957 = vpop.f32.mrf.mxu0
      %1958 = vmatprep.mubr.bf16.mxu0 0
      %1959 = vmatmul.mubr.bf16.gmra.mxu0 %v1491
      %v1960 = vpop.f32.mrf.mxu0
      %v1961 = vadd.f32 0.0, %v1960
      %v1962 = vpop.f32.mrf.mxu0
      %v1963 = vpop.f32.mrf.mxu0
      %v1964 = vadd.f32 0.0, %v1963
      %v1965 = vpop.f32.mrf.mxu0
      %1966 = vmatprep.mubr.bf16.mxu0 0
      %1967 = vmatmul.mubr.bf16.gmra.mxu0 %v1492
      %v1968 = vpop.f32.mrf.mxu0
      %v1969 = vadd.f32 0.0, %v1968
      %v1970 = vpop.f32.mrf.mxu0
      %v1971 = vpop.f32.mrf.mxu0
      %v1972 = vadd.f32 0.0, %v1971
      %v1973 = vpop.f32.mrf.mxu0
      %1974 = vmatprep.mubr.bf16.mxu0 0
      %1975 = vmatmul.mubr.bf16.gmra.mxu0 %v1493
      %v1976 = vpop.f32.mrf.mxu0
      %v1977 = vadd.f32 0.0, %v1976
      %v1978 = vpop.f32.mrf.mxu0
      %v1979 = vpop.f32.mrf.mxu0
      %v1980 = vadd.f32 0.0, %v1979
      %v1981 = vpop.f32.mrf.mxu0
      %1982 = vmatprep.mubr.bf16.mxu0 0
      %1983 = vmatmul.mubr.bf16.gmra.mxu0 %v1494
      %v1984 = vpop.f32.mrf.mxu0
      %v1985 = vadd.f32 0.0, %v1984
      %v1986 = vpop.f32.mrf.mxu0
      %v1987 = vpop.f32.mrf.mxu0
      %v1988 = vadd.f32 0.0, %v1987
      %v1989 = vpop.f32.mrf.mxu0
      %1990 = vmatprep.mubr.bf16.mxu0 0
      %1991 = vmatmul.mubr.bf16.gmra.mxu0 %v1495
      %v1992 = vpop.f32.mrf.mxu0
      %v1993 = vadd.f32 0.0, %v1992
      %v1994 = vpop.f32.mrf.mxu0
      %v1995 = vpop.f32.mrf.mxu0
      %v1996 = vadd.f32 0.0, %v1995
      %v1997 = vpop.f32.mrf.mxu0
      %1998 = vmatprep.mubr.bf16.mxu0 0
      %1999 = vmatmul.mubr.bf16.gmra.mxu0 %v1796
      %v2000 = vpop.f32.mrf.mxu0
      %v2001 = vadd.f32 0.0, %v2000
      %v2002 = vpop.f32.mrf.mxu0
      %v2003 = vpop.f32.mrf.mxu0
      %v2004 = vadd.f32 0.0, %v2003
      %v2005 = vpop.f32.mrf.mxu0
      %2006 = vdwg.mxu0
      %v2007 = vadd.f32 %v1721, %v1881
      %v2008 = vadd.f32 %v1722, %v1884
      %v2009 = vadd.f32 %v1723, %v1889
      %v2010 = vadd.f32 %v1724, %v1892
      %v2011 = vadd.f32 %v1725, %v1897
      %v2012 = vadd.f32 %v1726, %v1900
      %v2013 = vadd.f32 %v1727, %v1905
      %v2014 = vadd.f32 %v1728, %v1908
      %v2015 = vadd.f32 %v1729, %v1913
      %v2016 = vadd.f32 %v1730, %v1916
      %v2017 = vadd.f32 %v1731, %v1921
      %v2018 = vadd.f32 %v1732, %v1924
      %v2019 = vadd.f32 %v1733, %v1929
      %v2020 = vadd.f32 %v1734, %v1932
      %v2021 = vadd.f32 %v1735, %v1937
      %v2022 = vadd.f32 %v1736, %v1940
      %v2023 = vadd.f32 %v1737, %v1945
      %v2024 = vadd.f32 %v1738, %v1948
      %v2025 = vadd.f32 %v1739, %v1953
      %v2026 = vadd.f32 %v1740, %v1956
      %v2027 = vadd.f32 %v1741, %v1961
      %v2028 = vadd.f32 %v1742, %v1964
      %v2029 = vadd.f32 %v1743, %v1969
      %v2030 = vadd.f32 %v1744, %v1972
      %v2031 = vadd.f32 %v1745, %v1977
      %v2032 = vadd.f32 %v1746, %v1980
      %v2033 = vadd.f32 %v1747, %v1985
      %v2034 = vadd.f32 %v1748, %v1988
      %v2035 = vadd.f32 %v1749, %v1993
      %v2036 = vadd.f32 %v1750, %v1996
      %v2037 = vadd.f32 %v1751, %v2001
      %v2038 = vadd.f32 %v1752, %v2004
      %v2040 = vshrl.u32 %v224, 16
      %v2042 = vrot.slane %v2040, 4
      %v2043 = vshll.u32 %v224, 16
      %v2045 = vrot.slane %v2043, 5
      %v2046 = vor.u32 %v2042, %v2045
      %v2047 = vrot.slane %v2046, 4
      %v2049 = vshll.u32 %v225, 16
      %v2051 = vrot.slane %v2049, 5
      %v2052 = vsel %vm1046, %v2047, %v2051
      %v2053 = vshrl.u32 %v225, 16
      %v2055 = vrot.slane %v2053, 4
      %v2056 = vor.u32 %v2055, %v2051
      %v2057 = vrot.slane %v2056, 4
      %v2059 = vshll.u32 %v226, 16
      %v2061 = vrot.slane %v2059, 5
      %v2062 = vsel %vm1046, %v2057, %v2061
      %s2063 = scalar_lea.vmem %s1, 448
      %v2064 = vld [vmem:[%s2063] sm:$0xf]
      %v2065 = vld [vmem:[%s2063 + $0x4] sm:$0xf]
      %v2066 = vld [vmem:[%s2063 + $0x8] sm:$0xf]
      %v2067 = vld [vmem:[%s2063 + $0xc] sm:$0xf]
      %v2068 = vld [vmem:[%s2063 + $0x10] sm:$0xf]
      %v2069 = vld [vmem:[%s2063 + $0x14] sm:$0xf]
      %v2070 = vld [vmem:[%s2063 + $0x18] sm:$0xf]
      %v2071 = vld [vmem:[%s2063 + $0x1c] sm:$0xf]
      %v2072 = vld [vmem:[%s2063 + $0x20] sm:$0xf]
      %v2073 = vld [vmem:[%s2063 + $0x24] sm:$0xf]
      %v2074 = vld [vmem:[%s2063 + $0x28] sm:$0xf]
      %v2075 = vld [vmem:[%s2063 + $0x2c] sm:$0xf]
      %v2076 = vld [vmem:[%s2063 + $0x30] sm:$0xf]
      %v2077 = vld [vmem:[%s2063 + $0x34] sm:$0xf]
      %v2078 = vld [vmem:[%s2063 + $0x38] sm:$0xf]
      %v2079 = vld [vmem:[%s2063 + $0x3c] sm:$0xf]
      %v2080 = vunpack.c.l.b16 %v2052
      %v2081 = vunpack.c.l.b16 %v2062
      %v2082 = vpack.c.b16 %v2081, %v2080
      %v2100 = vunpack.c.l.b16 %v2064
      %v2101 = vunpack.c.l.b16 %v2065
      %v2102 = vunpack.c.l.b16 %v2066
      %v2103 = vunpack.c.l.b16 %v2067
      %v2104 = vunpack.c.l.b16 %v2068
      %v2105 = vunpack.c.l.b16 %v2069
      %v2106 = vunpack.c.l.b16 %v2070
      %v2107 = vunpack.c.l.b16 %v2071
      %v2108 = vunpack.c.l.b16 %v2072
      %v2109 = vunpack.c.l.b16 %v2073
      %v2110 = vunpack.c.l.b16 %v2074
      %v2111 = vunpack.c.l.b16 %v2075
      %v2112 = vunpack.c.l.b16 %v2076
      %v2113 = vunpack.c.l.b16 %v2077
      %v2114 = vunpack.c.l.b16 %v2078
      %v2115 = vunpack.c.l.b16 %v2079
      %v2116 = vpack.c.b16 %v2101, %v2100
      %v2117 = vpack.c.b16 %v2103, %v2102
      %v2118 = vpack.c.b16 %v2105, %v2104
      %v2119 = vpack.c.b16 %v2107, %v2106
      %v2120 = vpack.c.b16 %v2109, %v2108
      %v2121 = vpack.c.b16 %v2111, %v2110
      %v2122 = vpack.c.b16 %v2113, %v2112
      %v2123 = vpack.c.b16 %v2115, %v2114
      %2132 = vmatprep.subr.bf16.mxu0 0
      %2133 = vmatpush1.bf16.msra.mxu0 %v2123
      %2134 = vmatprep.subr.bf16.mxu0 0
      %2135 = vmatpush1.bf16.msra.mxu0 %v2122
      %2136 = vmatprep.subr.bf16.mxu0 0
      %2137 = vmatpush1.bf16.msra.mxu0 %v2121
      %2138 = vmatprep.subr.bf16.mxu0 0
      %2139 = vmatpush1.bf16.msra.mxu0 %v2120
      %2140 = vmatprep.subr.bf16.mxu0 0
      %2141 = vmatpush1.bf16.msra.mxu0 %v2119
      %2142 = vmatprep.subr.bf16.mxu0 0
      %2143 = vmatpush1.bf16.msra.mxu0 %v2118
      %2144 = vmatprep.subr.bf16.mxu0 0
      %2145 = vmatpush1.bf16.msra.mxu0 %v2117
      %2146 = vmatprep.subr.bf16.mxu0 0
      %2147 = vmatpush1.bf16.msra.mxu0 %v2116
      %2148 = vmatprep.subr.bf16.mxu0 0
      %2149 = vmatpush2.bf16.msra.mxu0 0
      %2150 = vmatprep.subr.bf16.mxu0 0
      %2151 = vmatpush2.bf16.msra.mxu0 0
      %2152 = vmatprep.subr.bf16.mxu0 0
      %2153 = vmatpush2.bf16.msra.mxu0 0
      %2154 = vmatprep.subr.bf16.mxu0 0
      %2155 = vmatpush2.bf16.msra.mxu0 0
      %2156 = vmatprep.subr.bf16.mxu0 0
      %2157 = vmatpush2.bf16.msra.mxu0 0
      %2158 = vmatprep.subr.bf16.mxu0 0
      %2159 = vmatpush2.bf16.msra.mxu0 0
      %2160 = vmatprep.subr.bf16.mxu0 0
      %2161 = vmatpush2.bf16.msra.mxu0 0
      %2162 = vmatprep.subr.bf16.mxu0 0
      %2163 = vmatpush2.bf16.msra.mxu0 0
      %2164 = vmatprep.mubr.bf16.mxu0 0
      %2165 = vmatmul.mubr.bf16.gmra.mxu0 %v1482
      %v2166 = vpop.f32.mrf.mxu0
      %v2167 = vadd.f32 0.0, %v2166
      %v2168 = vpop.f32.mrf.mxu0
      %v2169 = vpop.f32.mrf.mxu0
      %v2170 = vadd.f32 0.0, %v2169
      %v2171 = vpop.f32.mrf.mxu0
      %2172 = vmatprep.mubr.bf16.mxu0 0
      %2173 = vmatmul.mubr.bf16.gmra.mxu0 %v1483
      %v2174 = vpop.f32.mrf.mxu0
      %v2175 = vadd.f32 0.0, %v2174
      %v2176 = vpop.f32.mrf.mxu0
      %v2177 = vpop.f32.mrf.mxu0
      %v2178 = vadd.f32 0.0, %v2177
      %v2179 = vpop.f32.mrf.mxu0
      %2180 = vmatprep.mubr.bf16.mxu0 0
      %2181 = vmatmul.mubr.bf16.gmra.mxu0 %v1484
      %v2182 = vpop.f32.mrf.mxu0
      %v2183 = vadd.f32 0.0, %v2182
      %v2184 = vpop.f32.mrf.mxu0
      %v2185 = vpop.f32.mrf.mxu0
      %v2186 = vadd.f32 0.0, %v2185
      %v2187 = vpop.f32.mrf.mxu0
      %2188 = vmatprep.mubr.bf16.mxu0 0
      %2189 = vmatmul.mubr.bf16.gmra.mxu0 %v1485
      %v2190 = vpop.f32.mrf.mxu0
      %v2191 = vadd.f32 0.0, %v2190
      %v2192 = vpop.f32.mrf.mxu0
      %v2193 = vpop.f32.mrf.mxu0
      %v2194 = vadd.f32 0.0, %v2193
      %v2195 = vpop.f32.mrf.mxu0
      %2196 = vmatprep.mubr.bf16.mxu0 0
      %2197 = vmatmul.mubr.bf16.gmra.mxu0 %v1486
      %v2198 = vpop.f32.mrf.mxu0
      %v2199 = vadd.f32 0.0, %v2198
      %v2200 = vpop.f32.mrf.mxu0
      %v2201 = vpop.f32.mrf.mxu0
      %v2202 = vadd.f32 0.0, %v2201
      %v2203 = vpop.f32.mrf.mxu0
      %2204 = vmatprep.mubr.bf16.mxu0 0
      %2205 = vmatmul.mubr.bf16.gmra.mxu0 %v1487
      %v2206 = vpop.f32.mrf.mxu0
      %v2207 = vadd.f32 0.0, %v2206
      %v2208 = vpop.f32.mrf.mxu0
      %v2209 = vpop.f32.mrf.mxu0
      %v2210 = vadd.f32 0.0, %v2209
      %v2211 = vpop.f32.mrf.mxu0
      %2212 = vmatprep.mubr.bf16.mxu0 0
      %2213 = vmatmul.mubr.bf16.gmra.mxu0 %v1488
      %v2214 = vpop.f32.mrf.mxu0
      %v2215 = vadd.f32 0.0, %v2214
      %v2216 = vpop.f32.mrf.mxu0
      %v2217 = vpop.f32.mrf.mxu0
      %v2218 = vadd.f32 0.0, %v2217
      %v2219 = vpop.f32.mrf.mxu0
      %2220 = vmatprep.mubr.bf16.mxu0 0
      %2221 = vmatmul.mubr.bf16.gmra.mxu0 %v1489
      %v2222 = vpop.f32.mrf.mxu0
      %v2223 = vadd.f32 0.0, %v2222
      %v2224 = vpop.f32.mrf.mxu0
      %v2225 = vpop.f32.mrf.mxu0
      %v2226 = vadd.f32 0.0, %v2225
      %v2227 = vpop.f32.mrf.mxu0
      %2228 = vmatprep.mubr.bf16.mxu0 0
      %2229 = vmatmul.mubr.bf16.gmra.mxu0 %v1490
      %v2230 = vpop.f32.mrf.mxu0
      %v2231 = vadd.f32 0.0, %v2230
      %v2232 = vpop.f32.mrf.mxu0
      %v2233 = vpop.f32.mrf.mxu0
      %v2234 = vadd.f32 0.0, %v2233
      %v2235 = vpop.f32.mrf.mxu0
      %2236 = vmatprep.mubr.bf16.mxu0 0
      %2237 = vmatmul.mubr.bf16.gmra.mxu0 %v1491
      %v2238 = vpop.f32.mrf.mxu0
      %v2239 = vadd.f32 0.0, %v2238
      %v2240 = vpop.f32.mrf.mxu0
      %v2241 = vpop.f32.mrf.mxu0
      %v2242 = vadd.f32 0.0, %v2241
      %v2243 = vpop.f32.mrf.mxu0
      %2244 = vmatprep.mubr.bf16.mxu0 0
      %2245 = vmatmul.mubr.bf16.gmra.mxu0 %v1492
      %v2246 = vpop.f32.mrf.mxu0
      %v2247 = vadd.f32 0.0, %v2246
      %v2248 = vpop.f32.mrf.mxu0
      %v2249 = vpop.f32.mrf.mxu0
      %v2250 = vadd.f32 0.0, %v2249
      %v2251 = vpop.f32.mrf.mxu0
      %2252 = vmatprep.mubr.bf16.mxu0 0
      %2253 = vmatmul.mubr.bf16.gmra.mxu0 %v1493
      %v2254 = vpop.f32.mrf.mxu0
      %v2255 = vadd.f32 0.0, %v2254
      %v2256 = vpop.f32.mrf.mxu0
      %v2257 = vpop.f32.mrf.mxu0
      %v2258 = vadd.f32 0.0, %v2257
      %v2259 = vpop.f32.mrf.mxu0
      %2260 = vmatprep.mubr.bf16.mxu0 0
      %2261 = vmatmul.mubr.bf16.gmra.mxu0 %v1494
      %v2262 = vpop.f32.mrf.mxu0
      %v2263 = vadd.f32 0.0, %v2262
      %v2264 = vpop.f32.mrf.mxu0
      %v2265 = vpop.f32.mrf.mxu0
      %v2266 = vadd.f32 0.0, %v2265
      %v2267 = vpop.f32.mrf.mxu0
      %2268 = vmatprep.mubr.bf16.mxu0 0
      %2269 = vmatmul.mubr.bf16.gmra.mxu0 %v1495
      %v2270 = vpop.f32.mrf.mxu0
      %v2271 = vadd.f32 0.0, %v2270
      %v2272 = vpop.f32.mrf.mxu0
      %v2273 = vpop.f32.mrf.mxu0
      %v2274 = vadd.f32 0.0, %v2273
      %v2275 = vpop.f32.mrf.mxu0
      %2276 = vmatprep.mubr.bf16.mxu0 0
      %2277 = vmatmul.mubr.bf16.gmra.mxu0 %v1796
      %v2278 = vpop.f32.mrf.mxu0
      %v2279 = vadd.f32 0.0, %v2278
      %v2280 = vpop.f32.mrf.mxu0
      %v2281 = vpop.f32.mrf.mxu0
      %v2282 = vadd.f32 0.0, %v2281
      %v2283 = vpop.f32.mrf.mxu0
      %2284 = vmatprep.mubr.bf16.mxu0 0
      %2285 = vmatmul.mubr.bf16.gmra.mxu0 %v2082
      %v2286 = vpop.f32.mrf.mxu0
      %v2287 = vadd.f32 0.0, %v2286
      %v2288 = vpop.f32.mrf.mxu0
      %v2289 = vpop.f32.mrf.mxu0
      %v2290 = vadd.f32 0.0, %v2289
      %v2291 = vpop.f32.mrf.mxu0
      %2292 = vdwg.mxu0
      %v2293 = vadd.f32 %v2007, %v2167
      %v2294 = vadd.f32 %v2008, %v2170
      %v2295 = vadd.f32 %v2009, %v2175
      %v2296 = vadd.f32 %v2010, %v2178
      %v2297 = vadd.f32 %v2011, %v2183
      %v2298 = vadd.f32 %v2012, %v2186
      %v2299 = vadd.f32 %v2013, %v2191
      %v2300 = vadd.f32 %v2014, %v2194
      %v2301 = vadd.f32 %v2015, %v2199
      %v2302 = vadd.f32 %v2016, %v2202
      %v2303 = vadd.f32 %v2017, %v2207
      %v2304 = vadd.f32 %v2018, %v2210
      %v2305 = vadd.f32 %v2019, %v2215
      %v2306 = vadd.f32 %v2020, %v2218
      %v2307 = vadd.f32 %v2021, %v2223
      %v2308 = vadd.f32 %v2022, %v2226
      %v2309 = vadd.f32 %v2023, %v2231
      %v2310 = vadd.f32 %v2024, %v2234
      %v2311 = vadd.f32 %v2025, %v2239
      %v2312 = vadd.f32 %v2026, %v2242
      %v2313 = vadd.f32 %v2027, %v2247
      %v2314 = vadd.f32 %v2028, %v2250
      %v2315 = vadd.f32 %v2029, %v2255
      %v2316 = vadd.f32 %v2030, %v2258
      %v2317 = vadd.f32 %v2031, %v2263
      %v2318 = vadd.f32 %v2032, %v2266
      %v2319 = vadd.f32 %v2033, %v2271
      %v2320 = vadd.f32 %v2034, %v2274
      %v2321 = vadd.f32 %v2035, %v2279
      %v2322 = vadd.f32 %v2036, %v2282
      %v2323 = vadd.f32 %v2037, %v2287
      %v2324 = vadd.f32 %v2038, %v2290
      %vm2341 = vcmask 1042432
      %vm2342 = vcmask 1046532
      %vm2343 = vmor %vm2341, %vm2342
      %v2344 = vrot.slane %v173, 5
      %v2345 = vrot.slane %v2344, 4
      %v2346 = vrot.slane %v174, 5
      %v2347 = vsel %vm2343, %v2345, %v2346
      %v2348 = vrot.slane %v2346, 4
      %v2349 = vrot.slane %v175, 5
      %v2350 = vsel %vm2343, %v2348, %v2349
      %v2351 = vrot.slane %v176, 5
      %v2352 = vrot.slane %v2351, 4
      %v2353 = vrot.slane %v177, 5
      %v2354 = vsel %vm2343, %v2352, %v2353
      %v2355 = vrot.slane %v2353, 4
      %v2356 = vrot.slane %v178, 5
      %v2357 = vsel %vm2343, %v2355, %v2356
      %v2358 = vrot.slane %v179, 5
      %v2359 = vrot.slane %v2358, 4
      %v2360 = vrot.slane %v180, 5
      %v2361 = vsel %vm2343, %v2359, %v2360
      %v2362 = vrot.slane %v2360, 4
      %v2363 = vrot.slane %v181, 5
      %v2364 = vsel %vm2343, %v2362, %v2363
      %v2365 = vrot.slane %v182, 5
      %v2366 = vrot.slane %v2365, 4
      %v2367 = vrot.slane %v183, 5
      %v2368 = vsel %vm2343, %v2366, %v2367
      %v2369 = vrot.slane %v2367, 4
      %v2370 = vrot.slane %v184, 5
      %v2371 = vsel %vm2343, %v2369, %v2370
      %v2372 = vrot.slane %v185, 5
      %v2373 = vrot.slane %v2372, 4
      %v2374 = vrot.slane %v186, 5
      %v2375 = vsel %vm2343, %v2373, %v2374
      %v2376 = vrot.slane %v2374, 4
      %v2377 = vrot.slane %v187, 5
      %v2378 = vsel %vm2343, %v2376, %v2377
      %v2379 = vrot.slane %v188, 5
      %v2380 = vrot.slane %v2379, 4
      %v2381 = vrot.slane %v189, 5
      %v2382 = vsel %vm2343, %v2380, %v2381
      %v2383 = vrot.slane %v2381, 4
      %v2384 = vrot.slane %v190, 5
      %v2385 = vsel %vm2343, %v2383, %v2384
      %v2386 = vrot.slane %v191, 5
      %v2387 = vrot.slane %v2386, 4
      %v2388 = vrot.slane %v192, 5
      %v2389 = vsel %vm2343, %v2387, %v2388
      %v2390 = vrot.slane %v2388, 4
      %v2391 = vrot.slane %v193, 5
      %v2392 = vsel %vm2343, %v2390, %v2391
      %v2393 = vrot.slane %v194, 5
      %v2394 = vrot.slane %v2393, 4
      %v2395 = vrot.slane %v195, 5
      %v2396 = vsel %vm2343, %v2394, %v2395
      %v2397 = vrot.slane %v2395, 4
      %v2398 = vrot.slane %v196, 5
      %v2399 = vsel %vm2343, %v2397, %v2398
      %v2400 = vrot.slane %v197, 5
      %v2401 = vrot.slane %v2400, 4
      %v2402 = vrot.slane %v198, 5
      %v2403 = vsel %vm2343, %v2401, %v2402
      %v2404 = vrot.slane %v2402, 4
      %v2405 = vrot.slane %v199, 5
      %v2406 = vsel %vm2343, %v2404, %v2405
      %v2407 = vrot.slane %v200, 5
      %v2408 = vrot.slane %v2407, 4
      %v2409 = vrot.slane %v201, 5
      %v2410 = vsel %vm2343, %v2408, %v2409
      %v2411 = vrot.slane %v2409, 4
      %v2412 = vrot.slane %v202, 5
      %v2413 = vsel %vm2343, %v2411, %v2412
      %v2414 = vrot.slane %v203, 5
      %v2415 = vrot.slane %v2414, 4
      %v2416 = vrot.slane %v204, 5
      %v2417 = vsel %vm2343, %v2415, %v2416
      %v2418 = vrot.slane %v2416, 4
      %v2419 = vrot.slane %v205, 5
      %v2420 = vsel %vm2343, %v2418, %v2419
      %v2421 = vrot.slane %v206, 5
      %v2422 = vrot.slane %v2421, 4
      %v2423 = vrot.slane %v207, 5
      %v2424 = vsel %vm2343, %v2422, %v2423
      %v2425 = vrot.slane %v2423, 4
      %v2426 = vrot.slane %v208, 5
      %v2427 = vsel %vm2343, %v2425, %v2426
      %v2428 = vrot.slane %v209, 5
      %v2429 = vrot.slane %v2428, 4
      %v2430 = vrot.slane %v210, 5
      %v2431 = vsel %vm2343, %v2429, %v2430
      %v2432 = vrot.slane %v2430, 4
      %v2433 = vrot.slane %v211, 5
      %v2434 = vsel %vm2343, %v2432, %v2433
      %v2435 = vrot.slane %v212, 5
      %v2436 = vrot.slane %v2435, 4
      %v2437 = vrot.slane %v213, 5
      %v2438 = vsel %vm2343, %v2436, %v2437
      %v2439 = vrot.slane %v2437, 4
      %v2440 = vrot.slane %v214, 5
      %v2441 = vsel %vm2343, %v2439, %v2440
      %v2442 = vrot.slane %v215, 5
      %v2443 = vrot.slane %v2442, 4
      %v2444 = vrot.slane %v216, 5
      %v2445 = vsel %vm2343, %v2443, %v2444
      %v2446 = vrot.slane %v2444, 4
      %v2447 = vrot.slane %v217, 5
      %v2448 = vsel %vm2343, %v2446, %v2447
      %v2449 = vrot.slane %v218, 5
      %v2450 = vrot.slane %v2449, 4
      %v2451 = vrot.slane %v219, 5
      %v2452 = vsel %vm2343, %v2450, %v2451
      %v2453 = vrot.slane %v2451, 4
      %v2454 = vrot.slane %v220, 5
      %v2455 = vsel %vm2343, %v2453, %v2454
      %s2456 = scalar_lea.vmem %s1, 128
      %v2457 = vld [vmem:[%s2456] sm:$0xf]
      %v2458 = vld [vmem:[%s2456 + $0x4] sm:$0xf]
      %v2459 = vld [vmem:[%s2456 + $0x8] sm:$0xf]
      %v2460 = vld [vmem:[%s2456 + $0xc] sm:$0xf]
      %v2461 = vld [vmem:[%s2456 + $0x10] sm:$0xf]
      %v2462 = vld [vmem:[%s2456 + $0x14] sm:$0xf]
      %v2463 = vld [vmem:[%s2456 + $0x18] sm:$0xf]
      %v2464 = vld [vmem:[%s2456 + $0x1c] sm:$0xf]
      %v2465 = vld [vmem:[%s2456 + $0x20] sm:$0xf]
      %v2466 = vld [vmem:[%s2456 + $0x24] sm:$0xf]
      %v2467 = vld [vmem:[%s2456 + $0x28] sm:$0xf]
      %v2468 = vld [vmem:[%s2456 + $0x2c] sm:$0xf]
      %v2469 = vld [vmem:[%s2456 + $0x30] sm:$0xf]
      %v2470 = vld [vmem:[%s2456 + $0x34] sm:$0xf]
      %v2471 = vld [vmem:[%s2456 + $0x38] sm:$0xf]
      %v2472 = vld [vmem:[%s2456 + $0x3c] sm:$0xf]
      %v2473 = vunpack.c.l.b16 %v2347
      %v2474 = vunpack.c.l.b16 %v2350
      %v2475 = vunpack.c.l.b16 %v2354
      %v2476 = vunpack.c.l.b16 %v2357
      %v2477 = vunpack.c.l.b16 %v2361
      %v2478 = vunpack.c.l.b16 %v2364
      %v2479 = vunpack.c.l.b16 %v2368
      %v2480 = vunpack.c.l.b16 %v2371
      %v2481 = vunpack.c.l.b16 %v2375
      %v2482 = vunpack.c.l.b16 %v2378
      %v2483 = vunpack.c.l.b16 %v2382
      %v2484 = vunpack.c.l.b16 %v2385
      %v2485 = vunpack.c.l.b16 %v2389
      %v2486 = vunpack.c.l.b16 %v2392
      %v2487 = vunpack.c.l.b16 %v2396
      %v2488 = vunpack.c.l.b16 %v2399
      %v2489 = vunpack.c.l.b16 %v2403
      %v2490 = vunpack.c.l.b16 %v2406
      %v2491 = vunpack.c.l.b16 %v2410
      %v2492 = vunpack.c.l.b16 %v2413
      %v2493 = vunpack.c.l.b16 %v2417
      %v2494 = vunpack.c.l.b16 %v2420
      %v2495 = vunpack.c.l.b16 %v2424
      %v2496 = vunpack.c.l.b16 %v2427
      %v2497 = vunpack.c.l.b16 %v2431
      %v2498 = vunpack.c.l.b16 %v2434
      %v2499 = vunpack.c.l.b16 %v2438
      %v2500 = vunpack.c.l.b16 %v2441
      %v2501 = vunpack.c.l.b16 %v2445
      %v2502 = vunpack.c.l.b16 %v2448
      %v2503 = vunpack.c.l.b16 %v2452
      %v2504 = vunpack.c.l.b16 %v2455
      %v2505 = vpack.c.b16 %v2474, %v2473
      %v2506 = vpack.c.b16 %v2476, %v2475
      %v2507 = vpack.c.b16 %v2478, %v2477
      %v2508 = vpack.c.b16 %v2480, %v2479
      %v2509 = vpack.c.b16 %v2482, %v2481
      %v2510 = vpack.c.b16 %v2484, %v2483
      %v2511 = vpack.c.b16 %v2486, %v2485
      %v2512 = vpack.c.b16 %v2488, %v2487
      %v2513 = vpack.c.b16 %v2490, %v2489
      %v2514 = vpack.c.b16 %v2492, %v2491
      %v2515 = vpack.c.b16 %v2494, %v2493
      %v2516 = vpack.c.b16 %v2496, %v2495
      %v2517 = vpack.c.b16 %v2498, %v2497
      %v2518 = vpack.c.b16 %v2500, %v2499
      %v2519 = vpack.c.b16 %v2502, %v2501
      %v2520 = vpack.c.b16 %v2504, %v2503
      %v2553 = vunpack.c.l.b16 %v2457
      %v2554 = vunpack.c.l.b16 %v2458
      %v2555 = vunpack.c.l.b16 %v2459
      %v2556 = vunpack.c.l.b16 %v2460
      %v2557 = vunpack.c.l.b16 %v2461
      %v2558 = vunpack.c.l.b16 %v2462
      %v2559 = vunpack.c.l.b16 %v2463
      %v2560 = vunpack.c.l.b16 %v2464
      %v2561 = vunpack.c.l.b16 %v2465
      %v2562 = vunpack.c.l.b16 %v2466
      %v2563 = vunpack.c.l.b16 %v2467
      %v2564 = vunpack.c.l.b16 %v2468
      %v2565 = vunpack.c.l.b16 %v2469
      %v2566 = vunpack.c.l.b16 %v2470
      %v2567 = vunpack.c.l.b16 %v2471
      %v2568 = vunpack.c.l.b16 %v2472
      %v2569 = vpack.c.b16 %v2554, %v2553
      %v2570 = vpack.c.b16 %v2556, %v2555
      %v2571 = vpack.c.b16 %v2558, %v2557
      %v2572 = vpack.c.b16 %v2560, %v2559
      %v2573 = vpack.c.b16 %v2562, %v2561
      %v2574 = vpack.c.b16 %v2564, %v2563
      %v2575 = vpack.c.b16 %v2566, %v2565
      %v2576 = vpack.c.b16 %v2568, %v2567
      %2585 = vmatprep.subr.bf16.mxu0 0
      %2586 = vmatpush1.bf16.msra.mxu0 %v2576
      %2587 = vmatprep.subr.bf16.mxu0 0
      %2588 = vmatpush1.bf16.msra.mxu0 %v2575
      %2589 = vmatprep.subr.bf16.mxu0 0
      %2590 = vmatpush1.bf16.msra.mxu0 %v2574
      %2591 = vmatprep.subr.bf16.mxu0 0
      %2592 = vmatpush1.bf16.msra.mxu0 %v2573
      %2593 = vmatprep.subr.bf16.mxu0 0
      %2594 = vmatpush1.bf16.msra.mxu0 %v2572
      %2595 = vmatprep.subr.bf16.mxu0 0
      %2596 = vmatpush1.bf16.msra.mxu0 %v2571
      %2597 = vmatprep.subr.bf16.mxu0 0
      %2598 = vmatpush1.bf16.msra.mxu0 %v2570
      %2599 = vmatprep.subr.bf16.mxu0 0
      %2600 = vmatpush1.bf16.msra.mxu0 %v2569
      %2601 = vmatprep.subr.bf16.mxu0 0
      %2602 = vmatpush2.bf16.msra.mxu0 0
      %2603 = vmatprep.subr.bf16.mxu0 0
      %2604 = vmatpush2.bf16.msra.mxu0 0
      %2605 = vmatprep.subr.bf16.mxu0 0
      %2606 = vmatpush2.bf16.msra.mxu0 0
      %2607 = vmatprep.subr.bf16.mxu0 0
      %2608 = vmatpush2.bf16.msra.mxu0 0
      %2609 = vmatprep.subr.bf16.mxu0 0
      %2610 = vmatpush2.bf16.msra.mxu0 0
      %2611 = vmatprep.subr.bf16.mxu0 0
      %2612 = vmatpush2.bf16.msra.mxu0 0
      %2613 = vmatprep.subr.bf16.mxu0 0
      %2614 = vmatpush2.bf16.msra.mxu0 0
      %2615 = vmatprep.subr.bf16.mxu0 0
      %2616 = vmatpush2.bf16.msra.mxu0 0
      %2617 = vmatprep.mubr.bf16.mxu0 0
      %2618 = vmatmul.mubr.bf16.gmra.mxu0 %v2505
      %v2619 = vpop.f32.mrf.mxu0
      %v2620 = vadd.f32 0.0, %v2619
      %v2621 = vpop.f32.mrf.mxu0
      %v2622 = vpop.f32.mrf.mxu0
      %v2623 = vadd.f32 0.0, %v2622
      %v2624 = vpop.f32.mrf.mxu0
      %2625 = vmatprep.mubr.bf16.mxu0 0
      %2626 = vmatmul.mubr.bf16.gmra.mxu0 %v2506
      %v2627 = vpop.f32.mrf.mxu0
      %v2628 = vadd.f32 0.0, %v2627
      %v2629 = vpop.f32.mrf.mxu0
      %v2630 = vpop.f32.mrf.mxu0
      %v2631 = vadd.f32 0.0, %v2630
      %v2632 = vpop.f32.mrf.mxu0
      %2633 = vmatprep.mubr.bf16.mxu0 0
      %2634 = vmatmul.mubr.bf16.gmra.mxu0 %v2507
      %v2635 = vpop.f32.mrf.mxu0
      %v2636 = vadd.f32 0.0, %v2635
      %v2637 = vpop.f32.mrf.mxu0
      %v2638 = vpop.f32.mrf.mxu0
      %v2639 = vadd.f32 0.0, %v2638
      %v2640 = vpop.f32.mrf.mxu0
      %2641 = vmatprep.mubr.bf16.mxu0 0
      %2642 = vmatmul.mubr.bf16.gmra.mxu0 %v2508
      %v2643 = vpop.f32.mrf.mxu0
      %v2644 = vadd.f32 0.0, %v2643
      %v2645 = vpop.f32.mrf.mxu0
      %v2646 = vpop.f32.mrf.mxu0
      %v2647 = vadd.f32 0.0, %v2646
      %v2648 = vpop.f32.mrf.mxu0
      %2649 = vmatprep.mubr.bf16.mxu0 0
      %2650 = vmatmul.mubr.bf16.gmra.mxu0 %v2509
      %v2651 = vpop.f32.mrf.mxu0
      %v2652 = vadd.f32 0.0, %v2651
      %v2653 = vpop.f32.mrf.mxu0
      %v2654 = vpop.f32.mrf.mxu0
      %v2655 = vadd.f32 0.0, %v2654
      %v2656 = vpop.f32.mrf.mxu0
      %2657 = vmatprep.mubr.bf16.mxu0 0
      %2658 = vmatmul.mubr.bf16.gmra.mxu0 %v2510
      %v2659 = vpop.f32.mrf.mxu0
      %v2660 = vadd.f32 0.0, %v2659
      %v2661 = vpop.f32.mrf.mxu0
      %v2662 = vpop.f32.mrf.mxu0
      %v2663 = vadd.f32 0.0, %v2662
      %v2664 = vpop.f32.mrf.mxu0
      %2665 = vmatprep.mubr.bf16.mxu0 0
      %2666 = vmatmul.mubr.bf16.gmra.mxu0 %v2511
      %v2667 = vpop.f32.mrf.mxu0
      %v2668 = vadd.f32 0.0, %v2667
      %v2669 = vpop.f32.mrf.mxu0
      %v2670 = vpop.f32.mrf.mxu0
      %v2671 = vadd.f32 0.0, %v2670
      %v2672 = vpop.f32.mrf.mxu0
      %2673 = vmatprep.mubr.bf16.mxu0 0
      %2674 = vmatmul.mubr.bf16.gmra.mxu0 %v2512
      %v2675 = vpop.f32.mrf.mxu0
      %v2676 = vadd.f32 0.0, %v2675
      %v2677 = vpop.f32.mrf.mxu0
      %v2678 = vpop.f32.mrf.mxu0
      %v2679 = vadd.f32 0.0, %v2678
      %v2680 = vpop.f32.mrf.mxu0
      %2681 = vmatprep.mubr.bf16.mxu0 0
      %2682 = vmatmul.mubr.bf16.gmra.mxu0 %v2513
      %v2683 = vpop.f32.mrf.mxu0
      %v2684 = vadd.f32 0.0, %v2683
      %v2685 = vpop.f32.mrf.mxu0
      %v2686 = vpop.f32.mrf.mxu0
      %v2687 = vadd.f32 0.0, %v2686
      %v2688 = vpop.f32.mrf.mxu0
      %2689 = vmatprep.mubr.bf16.mxu0 0
      %2690 = vmatmul.mubr.bf16.gmra.mxu0 %v2514
      %v2691 = vpop.f32.mrf.mxu0
      %v2692 = vadd.f32 0.0, %v2691
      %v2693 = vpop.f32.mrf.mxu0
      %v2694 = vpop.f32.mrf.mxu0
      %v2695 = vadd.f32 0.0, %v2694
      %v2696 = vpop.f32.mrf.mxu0
      %2697 = vmatprep.mubr.bf16.mxu0 0
      %2698 = vmatmul.mubr.bf16.gmra.mxu0 %v2515
      %v2699 = vpop.f32.mrf.mxu0
      %v2700 = vadd.f32 0.0, %v2699
      %v2701 = vpop.f32.mrf.mxu0
      %v2702 = vpop.f32.mrf.mxu0
      %v2703 = vadd.f32 0.0, %v2702
      %v2704 = vpop.f32.mrf.mxu0
      %2705 = vmatprep.mubr.bf16.mxu0 0
      %2706 = vmatmul.mubr.bf16.gmra.mxu0 %v2516
      %v2707 = vpop.f32.mrf.mxu0
      %v2708 = vadd.f32 0.0, %v2707
      %v2709 = vpop.f32.mrf.mxu0
      %v2710 = vpop.f32.mrf.mxu0
      %v2711 = vadd.f32 0.0, %v2710
      %v2712 = vpop.f32.mrf.mxu0
      %2713 = vmatprep.mubr.bf16.mxu0 0
      %2714 = vmatmul.mubr.bf16.gmra.mxu0 %v2517
      %v2715 = vpop.f32.mrf.mxu0
      %v2716 = vadd.f32 0.0, %v2715
      %v2717 = vpop.f32.mrf.mxu0
      %v2718 = vpop.f32.mrf.mxu0
      %v2719 = vadd.f32 0.0, %v2718
      %v2720 = vpop.f32.mrf.mxu0
      %2721 = vmatprep.mubr.bf16.mxu0 0
      %2722 = vmatmul.mubr.bf16.gmra.mxu0 %v2518
      %v2723 = vpop.f32.mrf.mxu0
      %v2724 = vadd.f32 0.0, %v2723
      %v2725 = vpop.f32.mrf.mxu0
      %v2726 = vpop.f32.mrf.mxu0
      %v2727 = vadd.f32 0.0, %v2726
      %v2728 = vpop.f32.mrf.mxu0
      %2729 = vmatprep.mubr.bf16.mxu0 0
      %2730 = vmatmul.mubr.bf16.gmra.mxu0 %v2519
      %v2731 = vpop.f32.mrf.mxu0
      %v2732 = vadd.f32 0.0, %v2731
      %v2733 = vpop.f32.mrf.mxu0
      %v2734 = vpop.f32.mrf.mxu0
      %v2735 = vadd.f32 0.0, %v2734
      %v2736 = vpop.f32.mrf.mxu0
      %2737 = vmatprep.mubr.bf16.mxu0 0
      %2738 = vmatmul.mubr.bf16.gmra.mxu0 %v2520
      %v2739 = vpop.f32.mrf.mxu0
      %v2740 = vadd.f32 0.0, %v2739
      %v2741 = vpop.f32.mrf.mxu0
      %v2742 = vpop.f32.mrf.mxu0
      %v2743 = vadd.f32 0.0, %v2742
      %v2744 = vpop.f32.mrf.mxu0
      %2745 = vdwg.mxu0
      %v2746 = vadd.f32 %v2293, %v2620
      %v2747 = vadd.f32 %v2294, %v2623
      %v2748 = vadd.f32 %v2295, %v2628
      %v2749 = vadd.f32 %v2296, %v2631
      %v2750 = vadd.f32 %v2297, %v2636
      %v2751 = vadd.f32 %v2298, %v2639
      %v2752 = vadd.f32 %v2299, %v2644
      %v2753 = vadd.f32 %v2300, %v2647
      %v2754 = vadd.f32 %v2301, %v2652
      %v2755 = vadd.f32 %v2302, %v2655
      %v2756 = vadd.f32 %v2303, %v2660
      %v2757 = vadd.f32 %v2304, %v2663
      %v2758 = vadd.f32 %v2305, %v2668
      %v2759 = vadd.f32 %v2306, %v2671
      %v2760 = vadd.f32 %v2307, %v2676
      %v2761 = vadd.f32 %v2308, %v2679
      %v2762 = vadd.f32 %v2309, %v2684
      %v2763 = vadd.f32 %v2310, %v2687
      %v2764 = vadd.f32 %v2311, %v2692
      %v2765 = vadd.f32 %v2312, %v2695
      %v2766 = vadd.f32 %v2313, %v2700
      %v2767 = vadd.f32 %v2314, %v2703
      %v2768 = vadd.f32 %v2315, %v2708
      %v2769 = vadd.f32 %v2316, %v2711
      %v2770 = vadd.f32 %v2317, %v2716
      %v2771 = vadd.f32 %v2318, %v2719
      %v2772 = vadd.f32 %v2319, %v2724
      %v2773 = vadd.f32 %v2320, %v2727
      %v2774 = vadd.f32 %v2321, %v2732
      %v2775 = vadd.f32 %v2322, %v2735
      %v2776 = vadd.f32 %v2323, %v2740
      %v2777 = vadd.f32 %v2324, %v2743
      %v2779 = vrot.slane %v221, 5
      %v2780 = vrot.slane %v2779, 4
      %v2781 = vrot.slane %v222, 5
      %v2782 = vsel %vm2343, %v2780, %v2781
      %v2783 = vrot.slane %v2781, 4
      %v2784 = vrot.slane %v223, 5
      %v2785 = vsel %vm2343, %v2783, %v2784
      %s2786 = scalar_lea.vmem %s1, 320
      %v2787 = vld [vmem:[%s2786] sm:$0xf]
      %v2788 = vld [vmem:[%s2786 + $0x4] sm:$0xf]
      %v2789 = vld [vmem:[%s2786 + $0x8] sm:$0xf]
      %v2790 = vld [vmem:[%s2786 + $0xc] sm:$0xf]
      %v2791 = vld [vmem:[%s2786 + $0x10] sm:$0xf]
      %v2792 = vld [vmem:[%s2786 + $0x14] sm:$0xf]
      %v2793 = vld [vmem:[%s2786 + $0x18] sm:$0xf]
      %v2794 = vld [vmem:[%s2786 + $0x1c] sm:$0xf]
      %v2795 = vld [vmem:[%s2786 + $0x20] sm:$0xf]
      %v2796 = vld [vmem:[%s2786 + $0x24] sm:$0xf]
      %v2797 = vld [vmem:[%s2786 + $0x28] sm:$0xf]
      %v2798 = vld [vmem:[%s2786 + $0x2c] sm:$0xf]
      %v2799 = vld [vmem:[%s2786 + $0x30] sm:$0xf]
      %v2800 = vld [vmem:[%s2786 + $0x34] sm:$0xf]
      %v2801 = vld [vmem:[%s2786 + $0x38] sm:$0xf]
      %v2802 = vld [vmem:[%s2786 + $0x3c] sm:$0xf]
      %v2803 = vunpack.c.l.b16 %v2782
      %v2804 = vunpack.c.l.b16 %v2785
      %v2805 = vpack.c.b16 %v2804, %v2803
      %v2823 = vunpack.c.l.b16 %v2787
      %v2824 = vunpack.c.l.b16 %v2788
      %v2825 = vunpack.c.l.b16 %v2789
      %v2826 = vunpack.c.l.b16 %v2790
      %v2827 = vunpack.c.l.b16 %v2791
      %v2828 = vunpack.c.l.b16 %v2792
      %v2829 = vunpack.c.l.b16 %v2793
      %v2830 = vunpack.c.l.b16 %v2794
      %v2831 = vunpack.c.l.b16 %v2795
      %v2832 = vunpack.c.l.b16 %v2796
      %v2833 = vunpack.c.l.b16 %v2797
      %v2834 = vunpack.c.l.b16 %v2798
      %v2835 = vunpack.c.l.b16 %v2799
      %v2836 = vunpack.c.l.b16 %v2800
      %v2837 = vunpack.c.l.b16 %v2801
      %v2838 = vunpack.c.l.b16 %v2802
      %v2839 = vpack.c.b16 %v2824, %v2823
      %v2840 = vpack.c.b16 %v2826, %v2825
      %v2841 = vpack.c.b16 %v2828, %v2827
      %v2842 = vpack.c.b16 %v2830, %v2829
      %v2843 = vpack.c.b16 %v2832, %v2831
      %v2844 = vpack.c.b16 %v2834, %v2833
      %v2845 = vpack.c.b16 %v2836, %v2835
      %v2846 = vpack.c.b16 %v2838, %v2837
      %2855 = vmatprep.subr.bf16.mxu0 0
      %2856 = vmatpush1.bf16.msra.mxu0 %v2846
      %2857 = vmatprep.subr.bf16.mxu0 0
      %2858 = vmatpush1.bf16.msra.mxu0 %v2845
      %2859 = vmatprep.subr.bf16.mxu0 0
      %2860 = vmatpush1.bf16.msra.mxu0 %v2844
      %2861 = vmatprep.subr.bf16.mxu0 0
      %2862 = vmatpush1.bf16.msra.mxu0 %v2843
      %2863 = vmatprep.subr.bf16.mxu0 0
      %2864 = vmatpush1.bf16.msra.mxu0 %v2842
      %2865 = vmatprep.subr.bf16.mxu0 0
      %2866 = vmatpush1.bf16.msra.mxu0 %v2841
      %2867 = vmatprep.subr.bf16.mxu0 0
      %2868 = vmatpush1.bf16.msra.mxu0 %v2840
      %2869 = vmatprep.subr.bf16.mxu0 0
      %2870 = vmatpush1.bf16.msra.mxu0 %v2839
      %2871 = vmatprep.subr.bf16.mxu0 0
      %2872 = vmatpush2.bf16.msra.mxu0 0
      %2873 = vmatprep.subr.bf16.mxu0 0
      %2874 = vmatpush2.bf16.msra.mxu0 0
      %2875 = vmatprep.subr.bf16.mxu0 0
      %2876 = vmatpush2.bf16.msra.mxu0 0
      %2877 = vmatprep.subr.bf16.mxu0 0
      %2878 = vmatpush2.bf16.msra.mxu0 0
      %2879 = vmatprep.subr.bf16.mxu0 0
      %2880 = vmatpush2.bf16.msra.mxu0 0
      %2881 = vmatprep.subr.bf16.mxu0 0
      %2882 = vmatpush2.bf16.msra.mxu0 0
      %2883 = vmatprep.subr.bf16.mxu0 0
      %2884 = vmatpush2.bf16.msra.mxu0 0
      %2885 = vmatprep.subr.bf16.mxu0 0
      %2886 = vmatpush2.bf16.msra.mxu0 0
      %2887 = vmatprep.mubr.bf16.mxu0 0
      %2888 = vmatmul.mubr.bf16.gmra.mxu0 %v2506
      %v2889 = vpop.f32.mrf.mxu0
      %v2890 = vadd.f32 0.0, %v2889
      %v2891 = vpop.f32.mrf.mxu0
      %v2892 = vpop.f32.mrf.mxu0
      %v2893 = vadd.f32 0.0, %v2892
      %v2894 = vpop.f32.mrf.mxu0
      %2895 = vmatprep.mubr.bf16.mxu0 0
      %2896 = vmatmul.mubr.bf16.gmra.mxu0 %v2507
      %v2897 = vpop.f32.mrf.mxu0
      %v2898 = vadd.f32 0.0, %v2897
      %v2899 = vpop.f32.mrf.mxu0
      %v2900 = vpop.f32.mrf.mxu0
      %v2901 = vadd.f32 0.0, %v2900
      %v2902 = vpop.f32.mrf.mxu0
      %2903 = vmatprep.mubr.bf16.mxu0 0
      %2904 = vmatmul.mubr.bf16.gmra.mxu0 %v2508
      %v2905 = vpop.f32.mrf.mxu0
      %v2906 = vadd.f32 0.0, %v2905
      %v2907 = vpop.f32.mrf.mxu0
      %v2908 = vpop.f32.mrf.mxu0
      %v2909 = vadd.f32 0.0, %v2908
      %v2910 = vpop.f32.mrf.mxu0
      %2911 = vmatprep.mubr.bf16.mxu0 0
      %2912 = vmatmul.mubr.bf16.gmra.mxu0 %v2509
      %v2913 = vpop.f32.mrf.mxu0
      %v2914 = vadd.f32 0.0, %v2913
      %v2915 = vpop.f32.mrf.mxu0
      %v2916 = vpop.f32.mrf.mxu0
      %v2917 = vadd.f32 0.0, %v2916
      %v2918 = vpop.f32.mrf.mxu0
      %2919 = vmatprep.mubr.bf16.mxu0 0
      %2920 = vmatmul.mubr.bf16.gmra.mxu0 %v2510
      %v2921 = vpop.f32.mrf.mxu0
      %v2922 = vadd.f32 0.0, %v2921
      %v2923 = vpop.f32.mrf.mxu0
      %v2924 = vpop.f32.mrf.mxu0
      %v2925 = vadd.f32 0.0, %v2924
      %v2926 = vpop.f32.mrf.mxu0
      %2927 = vmatprep.mubr.bf16.mxu0 0
      %2928 = vmatmul.mubr.bf16.gmra.mxu0 %v2511
      %v2929 = vpop.f32.mrf.mxu0
      %v2930 = vadd.f32 0.0, %v2929
      %v2931 = vpop.f32.mrf.mxu0
      %v2932 = vpop.f32.mrf.mxu0
      %v2933 = vadd.f32 0.0, %v2932
      %v2934 = vpop.f32.mrf.mxu0
      %2935 = vmatprep.mubr.bf16.mxu0 0
      %2936 = vmatmul.mubr.bf16.gmra.mxu0 %v2512
      %v2937 = vpop.f32.mrf.mxu0
      %v2938 = vadd.f32 0.0, %v2937
      %v2939 = vpop.f32.mrf.mxu0
      %v2940 = vpop.f32.mrf.mxu0
      %v2941 = vadd.f32 0.0, %v2940
      %v2942 = vpop.f32.mrf.mxu0
      %2943 = vmatprep.mubr.bf16.mxu0 0
      %2944 = vmatmul.mubr.bf16.gmra.mxu0 %v2513
      %v2945 = vpop.f32.mrf.mxu0
      %v2946 = vadd.f32 0.0, %v2945
      %v2947 = vpop.f32.mrf.mxu0
      %v2948 = vpop.f32.mrf.mxu0
      %v2949 = vadd.f32 0.0, %v2948
      %v2950 = vpop.f32.mrf.mxu0
      %2951 = vmatprep.mubr.bf16.mxu0 0
      %2952 = vmatmul.mubr.bf16.gmra.mxu0 %v2514
      %v2953 = vpop.f32.mrf.mxu0
      %v2954 = vadd.f32 0.0, %v2953
      %v2955 = vpop.f32.mrf.mxu0
      %v2956 = vpop.f32.mrf.mxu0
      %v2957 = vadd.f32 0.0, %v2956
      %v2958 = vpop.f32.mrf.mxu0
      %2959 = vmatprep.mubr.bf16.mxu0 0
      %2960 = vmatmul.mubr.bf16.gmra.mxu0 %v2515
      %v2961 = vpop.f32.mrf.mxu0
      %v2962 = vadd.f32 0.0, %v2961
      %v2963 = vpop.f32.mrf.mxu0
      %v2964 = vpop.f32.mrf.mxu0
      %v2965 = vadd.f32 0.0, %v2964
      %v2966 = vpop.f32.mrf.mxu0
      %2967 = vmatprep.mubr.bf16.mxu0 0
      %2968 = vmatmul.mubr.bf16.gmra.mxu0 %v2516
      %v2969 = vpop.f32.mrf.mxu0
      %v2970 = vadd.f32 0.0, %v2969
      %v2971 = vpop.f32.mrf.mxu0
      %v2972 = vpop.f32.mrf.mxu0
      %v2973 = vadd.f32 0.0, %v2972
      %v2974 = vpop.f32.mrf.mxu0
      %2975 = vmatprep.mubr.bf16.mxu0 0
      %2976 = vmatmul.mubr.bf16.gmra.mxu0 %v2517
      %v2977 = vpop.f32.mrf.mxu0
      %v2978 = vadd.f32 0.0, %v2977
      %v2979 = vpop.f32.mrf.mxu0
      %v2980 = vpop.f32.mrf.mxu0
      %v2981 = vadd.f32 0.0, %v2980
      %v2982 = vpop.f32.mrf.mxu0
      %2983 = vmatprep.mubr.bf16.mxu0 0
      %2984 = vmatmul.mubr.bf16.gmra.mxu0 %v2518
      %v2985 = vpop.f32.mrf.mxu0
      %v2986 = vadd.f32 0.0, %v2985
      %v2987 = vpop.f32.mrf.mxu0
      %v2988 = vpop.f32.mrf.mxu0
      %v2989 = vadd.f32 0.0, %v2988
      %v2990 = vpop.f32.mrf.mxu0
      %2991 = vmatprep.mubr.bf16.mxu0 0
      %2992 = vmatmul.mubr.bf16.gmra.mxu0 %v2519
      %v2993 = vpop.f32.mrf.mxu0
      %v2994 = vadd.f32 0.0, %v2993
      %v2995 = vpop.f32.mrf.mxu0
      %v2996 = vpop.f32.mrf.mxu0
      %v2997 = vadd.f32 0.0, %v2996
      %v2998 = vpop.f32.mrf.mxu0
      %2999 = vmatprep.mubr.bf16.mxu0 0
      %3000 = vmatmul.mubr.bf16.gmra.mxu0 %v2520
      %v3001 = vpop.f32.mrf.mxu0
      %v3002 = vadd.f32 0.0, %v3001
      %v3003 = vpop.f32.mrf.mxu0
      %v3004 = vpop.f32.mrf.mxu0
      %v3005 = vadd.f32 0.0, %v3004
      %v3006 = vpop.f32.mrf.mxu0
      %3007 = vmatprep.mubr.bf16.mxu0 0
      %3008 = vmatmul.mubr.bf16.gmra.mxu0 %v2805
      %v3009 = vpop.f32.mrf.mxu0
      %v3010 = vadd.f32 0.0, %v3009
      %v3011 = vpop.f32.mrf.mxu0
      %v3012 = vpop.f32.mrf.mxu0
      %v3013 = vadd.f32 0.0, %v3012
      %v3014 = vpop.f32.mrf.mxu0
      %3015 = vdwg.mxu0
      %v3016 = vadd.f32 %v2746, %v2890
      %v3017 = vadd.f32 %v2747, %v2893
      %v3018 = vadd.f32 %v2748, %v2898
      %v3019 = vadd.f32 %v2749, %v2901
      %v3020 = vadd.f32 %v2750, %v2906
      %v3021 = vadd.f32 %v2751, %v2909
      %v3022 = vadd.f32 %v2752, %v2914
      %v3023 = vadd.f32 %v2753, %v2917
      %v3024 = vadd.f32 %v2754, %v2922
      %v3025 = vadd.f32 %v2755, %v2925
      %v3026 = vadd.f32 %v2756, %v2930
      %v3027 = vadd.f32 %v2757, %v2933
      %v3028 = vadd.f32 %v2758, %v2938
      %v3029 = vadd.f32 %v2759, %v2941
      %v3030 = vadd.f32 %v2760, %v2946
      %v3031 = vadd.f32 %v2761, %v2949
      %v3032 = vadd.f32 %v2762, %v2954
      %v3033 = vadd.f32 %v2763, %v2957
      %v3034 = vadd.f32 %v2764, %v2962
      %v3035 = vadd.f32 %v2765, %v2965
      %v3036 = vadd.f32 %v2766, %v2970
      %v3037 = vadd.f32 %v2767, %v2973
      %v3038 = vadd.f32 %v2768, %v2978
      %v3039 = vadd.f32 %v2769, %v2981
      %v3040 = vadd.f32 %v2770, %v2986
      %v3041 = vadd.f32 %v2771, %v2989
      %v3042 = vadd.f32 %v2772, %v2994
      %v3043 = vadd.f32 %v2773, %v2997
      %v3044 = vadd.f32 %v2774, %v3002
      %v3045 = vadd.f32 %v2775, %v3005
      %v3046 = vadd.f32 %v2776, %v3010
      %v3047 = vadd.f32 %v2777, %v3013
      %v3049 = vrot.slane %v224, 5
      %v3050 = vrot.slane %v3049, 4
      %v3051 = vrot.slane %v225, 5
      %v3052 = vsel %vm2343, %v3050, %v3051
      %v3053 = vrot.slane %v3051, 4
      %v3054 = vrot.slane %v226, 5
      %v3055 = vsel %vm2343, %v3053, %v3054
      %s3056 = scalar_lea.vmem %s1, 512
      %v3057 = vld [vmem:[%s3056] sm:$0xf]
      %v3058 = vld [vmem:[%s3056 + $0x4] sm:$0xf]
      %v3059 = vld [vmem:[%s3056 + $0x8] sm:$0xf]
      %v3060 = vld [vmem:[%s3056 + $0xc] sm:$0xf]
      %v3061 = vld [vmem:[%s3056 + $0x10] sm:$0xf]
      %v3062 = vld [vmem:[%s3056 + $0x14] sm:$0xf]
      %v3063 = vld [vmem:[%s3056 + $0x18] sm:$0xf]
      %v3064 = vld [vmem:[%s3056 + $0x1c] sm:$0xf]
      %v3065 = vld [vmem:[%s3056 + $0x20] sm:$0xf]
      %v3066 = vld [vmem:[%s3056 + $0x24] sm:$0xf]
      %v3067 = vld [vmem:[%s3056 + $0x28] sm:$0xf]
      %v3068 = vld [vmem:[%s3056 + $0x2c] sm:$0xf]
      %v3069 = vld [vmem:[%s3056 + $0x30] sm:$0xf]
      %v3070 = vld [vmem:[%s3056 + $0x34] sm:$0xf]
      %v3071 = vld [vmem:[%s3056 + $0x38] sm:$0xf]
      %v3072 = vld [vmem:[%s3056 + $0x3c] sm:$0xf]
      %v3073 = vunpack.c.l.b16 %v3052
      %v3074 = vunpack.c.l.b16 %v3055
      %v3075 = vpack.c.b16 %v3074, %v3073
      %v3093 = vunpack.c.l.b16 %v3057
      %v3094 = vunpack.c.l.b16 %v3058
      %v3095 = vunpack.c.l.b16 %v3059
      %v3096 = vunpack.c.l.b16 %v3060
      %v3097 = vunpack.c.l.b16 %v3061
      %v3098 = vunpack.c.l.b16 %v3062
      %v3099 = vunpack.c.l.b16 %v3063
      %v3100 = vunpack.c.l.b16 %v3064
      %v3101 = vunpack.c.l.b16 %v3065
      %v3102 = vunpack.c.l.b16 %v3066
      %v3103 = vunpack.c.l.b16 %v3067
      %v3104 = vunpack.c.l.b16 %v3068
      %v3105 = vunpack.c.l.b16 %v3069
      %v3106 = vunpack.c.l.b16 %v3070
      %v3107 = vunpack.c.l.b16 %v3071
      %v3108 = vunpack.c.l.b16 %v3072
      %v3109 = vpack.c.b16 %v3094, %v3093
      %v3110 = vpack.c.b16 %v3096, %v3095
      %v3111 = vpack.c.b16 %v3098, %v3097
      %v3112 = vpack.c.b16 %v3100, %v3099
      %v3113 = vpack.c.b16 %v3102, %v3101
      %v3114 = vpack.c.b16 %v3104, %v3103
      %v3115 = vpack.c.b16 %v3106, %v3105
      %v3116 = vpack.c.b16 %v3108, %v3107
      %3125 = vmatprep.subr.bf16.mxu0 0
      %3126 = vmatpush1.bf16.msra.mxu0 %v3116
      %3127 = vmatprep.subr.bf16.mxu0 0
      %3128 = vmatpush1.bf16.msra.mxu0 %v3115
      %3129 = vmatprep.subr.bf16.mxu0 0
      %3130 = vmatpush1.bf16.msra.mxu0 %v3114
      %3131 = vmatprep.subr.bf16.mxu0 0
      %3132 = vmatpush1.bf16.msra.mxu0 %v3113
      %3133 = vmatprep.subr.bf16.mxu0 0
      %3134 = vmatpush1.bf16.msra.mxu0 %v3112
      %3135 = vmatprep.subr.bf16.mxu0 0
      %3136 = vmatpush1.bf16.msra.mxu0 %v3111
      %3137 = vmatprep.subr.bf16.mxu0 0
      %3138 = vmatpush1.bf16.msra.mxu0 %v3110
      %3139 = vmatprep.subr.bf16.mxu0 0
      %3140 = vmatpush1.bf16.msra.mxu0 %v3109
      %3141 = vmatprep.subr.bf16.mxu0 0
      %3142 = vmatpush2.bf16.msra.mxu0 0
      %3143 = vmatprep.subr.bf16.mxu0 0
      %3144 = vmatpush2.bf16.msra.mxu0 0
      %3145 = vmatprep.subr.bf16.mxu0 0
      %3146 = vmatpush2.bf16.msra.mxu0 0
      %3147 = vmatprep.subr.bf16.mxu0 0
      %3148 = vmatpush2.bf16.msra.mxu0 0
      %3149 = vmatprep.subr.bf16.mxu0 0
      %3150 = vmatpush2.bf16.msra.mxu0 0
      %3151 = vmatprep.subr.bf16.mxu0 0
      %3152 = vmatpush2.bf16.msra.mxu0 0
      %3153 = vmatprep.subr.bf16.mxu0 0
      %3154 = vmatpush2.bf16.msra.mxu0 0
      %3155 = vmatprep.subr.bf16.mxu0 0
      %3156 = vmatpush2.bf16.msra.mxu0 0
      %3157 = vmatprep.mubr.bf16.mxu0 0
      %3158 = vmatmul.mubr.bf16.gmra.mxu0 %v2507
      %v3159 = vpop.f32.mrf.mxu0
      %v3160 = vadd.f32 0.0, %v3159
      %v3161 = vpop.f32.mrf.mxu0
      %v3162 = vpop.f32.mrf.mxu0
      %v3163 = vadd.f32 0.0, %v3162
      %v3164 = vpop.f32.mrf.mxu0
      %3165 = vmatprep.mubr.bf16.mxu0 0
      %3166 = vmatmul.mubr.bf16.gmra.mxu0 %v2508
      %v3167 = vpop.f32.mrf.mxu0
      %v3168 = vadd.f32 0.0, %v3167
      %v3169 = vpop.f32.mrf.mxu0
      %v3170 = vpop.f32.mrf.mxu0
      %v3171 = vadd.f32 0.0, %v3170
      %v3172 = vpop.f32.mrf.mxu0
      %3173 = vmatprep.mubr.bf16.mxu0 0
      %3174 = vmatmul.mubr.bf16.gmra.mxu0 %v2509
      %v3175 = vpop.f32.mrf.mxu0
      %v3176 = vadd.f32 0.0, %v3175
      %v3177 = vpop.f32.mrf.mxu0
      %v3178 = vpop.f32.mrf.mxu0
      %v3179 = vadd.f32 0.0, %v3178
      %v3180 = vpop.f32.mrf.mxu0
      %3181 = vmatprep.mubr.bf16.mxu0 0
      %3182 = vmatmul.mubr.bf16.gmra.mxu0 %v2510
      %v3183 = vpop.f32.mrf.mxu0
      %v3184 = vadd.f32 0.0, %v3183
      %v3185 = vpop.f32.mrf.mxu0
      %v3186 = vpop.f32.mrf.mxu0
      %v3187 = vadd.f32 0.0, %v3186
      %v3188 = vpop.f32.mrf.mxu0
      %3189 = vmatprep.mubr.bf16.mxu0 0
      %3190 = vmatmul.mubr.bf16.gmra.mxu0 %v2511
      %v3191 = vpop.f32.mrf.mxu0
      %v3192 = vadd.f32 0.0, %v3191
      %v3193 = vpop.f32.mrf.mxu0
      %v3194 = vpop.f32.mrf.mxu0
      %v3195 = vadd.f32 0.0, %v3194
      %v3196 = vpop.f32.mrf.mxu0
      %3197 = vmatprep.mubr.bf16.mxu0 0
      %3198 = vmatmul.mubr.bf16.gmra.mxu0 %v2512
      %v3199 = vpop.f32.mrf.mxu0
      %v3200 = vadd.f32 0.0, %v3199
      %v3201 = vpop.f32.mrf.mxu0
      %v3202 = vpop.f32.mrf.mxu0
      %v3203 = vadd.f32 0.0, %v3202
      %v3204 = vpop.f32.mrf.mxu0
      %3205 = vmatprep.mubr.bf16.mxu0 0
      %3206 = vmatmul.mubr.bf16.gmra.mxu0 %v2513
      %v3207 = vpop.f32.mrf.mxu0
      %v3208 = vadd.f32 0.0, %v3207
      %v3209 = vpop.f32.mrf.mxu0
      %v3210 = vpop.f32.mrf.mxu0
      %v3211 = vadd.f32 0.0, %v3210
      %v3212 = vpop.f32.mrf.mxu0
      %3213 = vmatprep.mubr.bf16.mxu0 0
      %3214 = vmatmul.mubr.bf16.gmra.mxu0 %v2514
      %v3215 = vpop.f32.mrf.mxu0
      %v3216 = vadd.f32 0.0, %v3215
      %v3217 = vpop.f32.mrf.mxu0
      %v3218 = vpop.f32.mrf.mxu0
      %v3219 = vadd.f32 0.0, %v3218
      %v3220 = vpop.f32.mrf.mxu0
      %3221 = vmatprep.mubr.bf16.mxu0 0
      %3222 = vmatmul.mubr.bf16.gmra.mxu0 %v2515
      %v3223 = vpop.f32.mrf.mxu0
      %v3224 = vadd.f32 0.0, %v3223
      %v3225 = vpop.f32.mrf.mxu0
      %v3226 = vpop.f32.mrf.mxu0
      %v3227 = vadd.f32 0.0, %v3226
      %v3228 = vpop.f32.mrf.mxu0
      %3229 = vmatprep.mubr.bf16.mxu0 0
      %3230 = vmatmul.mubr.bf16.gmra.mxu0 %v2516
      %v3231 = vpop.f32.mrf.mxu0
      %v3232 = vadd.f32 0.0, %v3231
      %v3233 = vpop.f32.mrf.mxu0
      %v3234 = vpop.f32.mrf.mxu0
      %v3235 = vadd.f32 0.0, %v3234
      %v3236 = vpop.f32.mrf.mxu0
      %3237 = vmatprep.mubr.bf16.mxu0 0
      %3238 = vmatmul.mubr.bf16.gmra.mxu0 %v2517
      %v3239 = vpop.f32.mrf.mxu0
      %v3240 = vadd.f32 0.0, %v3239
      %v3241 = vpop.f32.mrf.mxu0
      %v3242 = vpop.f32.mrf.mxu0
      %v3243 = vadd.f32 0.0, %v3242
      %v3244 = vpop.f32.mrf.mxu0
      %3245 = vmatprep.mubr.bf16.mxu0 0
      %3246 = vmatmul.mubr.bf16.gmra.mxu0 %v2518
      %v3247 = vpop.f32.mrf.mxu0
      %v3248 = vadd.f32 0.0, %v3247
      %v3249 = vpop.f32.mrf.mxu0
      %v3250 = vpop.f32.mrf.mxu0
      %v3251 = vadd.f32 0.0, %v3250
      %v3252 = vpop.f32.mrf.mxu0
      %3253 = vmatprep.mubr.bf16.mxu0 0
      %3254 = vmatmul.mubr.bf16.gmra.mxu0 %v2519
      %v3255 = vpop.f32.mrf.mxu0
      %v3256 = vadd.f32 0.0, %v3255
      %v3257 = vpop.f32.mrf.mxu0
      %v3258 = vpop.f32.mrf.mxu0
      %v3259 = vadd.f32 0.0, %v3258
      %v3260 = vpop.f32.mrf.mxu0
      %3261 = vmatprep.mubr.bf16.mxu0 0
      %3262 = vmatmul.mubr.bf16.gmra.mxu0 %v2520
      %v3263 = vpop.f32.mrf.mxu0
      %v3264 = vadd.f32 0.0, %v3263
      %v3265 = vpop.f32.mrf.mxu0
      %v3266 = vpop.f32.mrf.mxu0
      %v3267 = vadd.f32 0.0, %v3266
      %v3268 = vpop.f32.mrf.mxu0
      %3269 = vmatprep.mubr.bf16.mxu0 0
      %3270 = vmatmul.mubr.bf16.gmra.mxu0 %v2805
      %v3271 = vpop.f32.mrf.mxu0
      %v3272 = vadd.f32 0.0, %v3271
      %v3273 = vpop.f32.mrf.mxu0
      %v3274 = vpop.f32.mrf.mxu0
      %v3275 = vadd.f32 0.0, %v3274
      %v3276 = vpop.f32.mrf.mxu0
      %3277 = vmatprep.mubr.bf16.mxu0 0
      %3278 = vmatmul.mubr.bf16.gmra.mxu0 %v3075
      %v3279 = vpop.f32.mrf.mxu0
      %v3280 = vadd.f32 0.0, %v3279
      %v3281 = vpop.f32.mrf.mxu0
      %v3282 = vpop.f32.mrf.mxu0
      %v3283 = vadd.f32 0.0, %v3282
      %v3284 = vpop.f32.mrf.mxu0
      %3285 = vdwg.mxu0
      %v3286 = vadd.f32 %v3016, %v3160
      %v3287 = vadd.f32 %v3017, %v3163
      %v3288 = vadd.f32 %v3018, %v3168
      %v3289 = vadd.f32 %v3019, %v3171
      %v3290 = vadd.f32 %v3020, %v3176
      %v3291 = vadd.f32 %v3021, %v3179
      %v3292 = vadd.f32 %v3022, %v3184
      %v3293 = vadd.f32 %v3023, %v3187
      %v3294 = vadd.f32 %v3024, %v3192
      %v3295 = vadd.f32 %v3025, %v3195
      %v3296 = vadd.f32 %v3026, %v3200
      %v3297 = vadd.f32 %v3027, %v3203
      %v3298 = vadd.f32 %v3028, %v3208
      %v3299 = vadd.f32 %v3029, %v3211
      %v3300 = vadd.f32 %v3030, %v3216
      %v3301 = vadd.f32 %v3031, %v3219
      %v3302 = vadd.f32 %v3032, %v3224
      %v3303 = vadd.f32 %v3033, %v3227
      %v3304 = vadd.f32 %v3034, %v3232
      %v3305 = vadd.f32 %v3035, %v3235
      %v3306 = vadd.f32 %v3036, %v3240
      %v3307 = vadd.f32 %v3037, %v3243
      %v3308 = vadd.f32 %v3038, %v3248
      %v3309 = vadd.f32 %v3039, %v3251
      %v3310 = vadd.f32 %v3040, %v3256
      %v3311 = vadd.f32 %v3041, %v3259
      %v3312 = vadd.f32 %v3042, %v3264
      %v3313 = vadd.f32 %v3043, %v3267
      %v3314 = vadd.f32 %v3044, %v3272
      %v3315 = vadd.f32 %v3045, %v3275
      %v3316 = vadd.f32 %v3046, %v3280
      %v3317 = vadd.f32 %v3047, %v3283
      %v3318 = vld [vmem:[%s2] sm:$0x1]
      %v3320 = vlaneseq
      %v3321 = vshrl.u32 %v3320, 7
      %v3322 = vsub.s32 0, %v3321
      %v3323 = vrot.slane %v3318, %v3322
      %v3325 = vadd.f32 %v3286, %v3323
      %v3326 = vadd.f32 %v3287, %v3323
      %v3327 = vadd.f32 %v3288, %v3323
      %v3328 = vadd.f32 %v3289, %v3323
      %v3329 = vadd.f32 %v3290, %v3323
      %v3330 = vadd.f32 %v3291, %v3323
      %v3331 = vadd.f32 %v3292, %v3323
      %v3332 = vadd.f32 %v3293, %v3323
      %v3333 = vadd.f32 %v3294, %v3323
      %v3334 = vadd.f32 %v3295, %v3323
      %v3335 = vadd.f32 %v3296, %v3323
      %v3336 = vadd.f32 %v3297, %v3323
      %v3337 = vadd.f32 %v3298, %v3323
      %v3338 = vadd.f32 %v3299, %v3323
      %v3339 = vadd.f32 %v3300, %v3323
      %v3340 = vadd.f32 %v3301, %v3323
      %v3341 = vadd.f32 %v3302, %v3323
      %v3342 = vadd.f32 %v3303, %v3323
      %v3343 = vadd.f32 %v3304, %v3323
      %v3344 = vadd.f32 %v3305, %v3323
      %v3345 = vadd.f32 %v3306, %v3323
      %v3346 = vadd.f32 %v3307, %v3323
      %v3347 = vadd.f32 %v3308, %v3323
      %v3348 = vadd.f32 %v3309, %v3323
      %v3349 = vadd.f32 %v3310, %v3323
      %v3350 = vadd.f32 %v3311, %v3323
      %v3351 = vadd.f32 %v3312, %v3323
      %v3352 = vadd.f32 %v3313, %v3323
      %v3353 = vadd.f32 %v3314, %v3323
      %v3354 = vadd.f32 %v3315, %v3323
      %v3355 = vadd.f32 %v3316, %v3323
      %v3356 = vadd.f32 %v3317, %v3323
      %v3357 = vmax.f32 %v3325, 0.0
      %v3358 = vmax.f32 %v3326, 0.0
      %v3359 = vmax.f32 %v3327, 0.0
      %v3360 = vmax.f32 %v3328, 0.0
      %v3361 = vmax.f32 %v3329, 0.0
      %v3362 = vmax.f32 %v3330, 0.0
      %v3363 = vmax.f32 %v3331, 0.0
      %v3364 = vmax.f32 %v3332, 0.0
      %v3365 = vmax.f32 %v3333, 0.0
      %v3366 = vmax.f32 %v3334, 0.0
      %v3367 = vmax.f32 %v3335, 0.0
      %v3368 = vmax.f32 %v3336, 0.0
      %v3369 = vmax.f32 %v3337, 0.0
      %v3370 = vmax.f32 %v3338, 0.0
      %v3371 = vmax.f32 %v3339, 0.0
      %v3372 = vmax.f32 %v3340, 0.0
      %v3373 = vmax.f32 %v3341, 0.0
      %v3374 = vmax.f32 %v3342, 0.0
      %v3375 = vmax.f32 %v3343, 0.0
      %v3376 = vmax.f32 %v3344, 0.0
      %v3377 = vmax.f32 %v3345, 0.0
      %v3378 = vmax.f32 %v3346, 0.0
      %v3379 = vmax.f32 %v3347, 0.0
      %v3380 = vmax.f32 %v3348, 0.0
      %v3381 = vmax.f32 %v3349, 0.0
      %v3382 = vmax.f32 %v3350, 0.0
      %v3383 = vmax.f32 %v3351, 0.0
      %v3384 = vmax.f32 %v3352, 0.0
      %v3385 = vmax.f32 %v3353, 0.0
      %v3386 = vmax.f32 %v3354, 0.0
      %v3387 = vmax.f32 %v3355, 0.0
      %v3388 = vmax.f32 %v3356, 0.0
      %v3389 = vpack.c.bf16 %v3358, %v3357
      %v3390 = vpack.c.bf16 %v3360, %v3359
      %v3391 = vpack.c.bf16 %v3362, %v3361
      %v3392 = vpack.c.bf16 %v3364, %v3363
      %v3393 = vpack.c.bf16 %v3366, %v3365
      %v3394 = vpack.c.bf16 %v3368, %v3367
      %v3395 = vpack.c.bf16 %v3370, %v3369
      %v3396 = vpack.c.bf16 %v3372, %v3371
      %v3397 = vpack.c.bf16 %v3374, %v3373
      %v3398 = vpack.c.bf16 %v3376, %v3375
      %v3399 = vpack.c.bf16 %v3378, %v3377
      %v3400 = vpack.c.bf16 %v3380, %v3379
      %v3401 = vpack.c.bf16 %v3382, %v3381
      %v3402 = vpack.c.bf16 %v3384, %v3383
      %v3403 = vpack.c.bf16 %v3386, %v3385
      %v3404 = vpack.c.bf16 %v3388, %v3387
      %v3421 = vunpack.c.l.b16 %v3389
      %v3422 = vunpack.c.h.b16 %v3389
      %v3423 = vunpack.c.l.b16 %v3390
      %v3424 = vunpack.c.h.b16 %v3390
      %v3425 = vunpack.c.l.b16 %v3391
      %v3426 = vunpack.c.h.b16 %v3391
      %v3427 = vunpack.c.l.b16 %v3392
      %v3428 = vunpack.c.h.b16 %v3392
      %v3429 = vunpack.c.l.b16 %v3393
      %v3430 = vunpack.c.h.b16 %v3393
      %v3431 = vunpack.c.l.b16 %v3394
      %v3432 = vunpack.c.h.b16 %v3394
      %v3433 = vunpack.c.l.b16 %v3395
      %v3434 = vunpack.c.h.b16 %v3395
      %v3435 = vunpack.c.l.b16 %v3396
      %v3436 = vunpack.c.h.b16 %v3396
      %v3437 = vunpack.c.l.b16 %v3397
      %v3438 = vunpack.c.h.b16 %v3397
      %v3439 = vunpack.c.l.b16 %v3398
      %v3440 = vunpack.c.h.b16 %v3398
      %v3441 = vunpack.c.l.b16 %v3399
      %v3442 = vunpack.c.h.b16 %v3399
      %v3443 = vunpack.c.l.b16 %v3400
      %v3444 = vunpack.c.h.b16 %v3400
      %v3445 = vunpack.c.l.b16 %v3401
      %v3446 = vunpack.c.h.b16 %v3401
      %v3447 = vunpack.c.l.b16 %v3402
      %v3448 = vunpack.c.h.b16 %v3402
      %v3449 = vunpack.c.l.b16 %v3403
      %v3450 = vunpack.c.h.b16 %v3403
      %v3451 = vunpack.c.l.b16 %v3404
      %v3452 = vunpack.c.h.b16 %v3404
      %v3453 = vpack.c.b16 %v3421, %v3421
      %v3454 = vpack.c.b16 %v3422, %v3422
      %v3455 = vpack.c.b16 %v3423, %v3423
      %v3456 = vpack.c.b16 %v3424, %v3424
      %v3457 = vpack.c.b16 %v3425, %v3425
      %v3458 = vpack.c.b16 %v3426, %v3426
      %v3459 = vpack.c.b16 %v3427, %v3427
      %v3460 = vpack.c.b16 %v3428, %v3428
      %v3461 = vpack.c.b16 %v3429, %v3429
      %v3462 = vpack.c.b16 %v3430, %v3430
      %v3463 = vpack.c.b16 %v3431, %v3431
      %v3464 = vpack.c.b16 %v3432, %v3432
      %v3465 = vpack.c.b16 %v3433, %v3433
      %v3466 = vpack.c.b16 %v3434, %v3434
      %v3467 = vpack.c.b16 %v3435, %v3435
      %v3468 = vpack.c.b16 %v3436, %v3436
      %v3469 = vpack.c.b16 %v3437, %v3437
      %v3470 = vpack.c.b16 %v3438, %v3438
      %v3471 = vpack.c.b16 %v3439, %v3439
      %v3472 = vpack.c.b16 %v3440, %v3440
      %v3473 = vpack.c.b16 %v3441, %v3441
      %v3474 = vpack.c.b16 %v3442, %v3442
      %v3475 = vpack.c.b16 %v3443, %v3443
      %v3476 = vpack.c.b16 %v3444, %v3444
      %v3477 = vpack.c.b16 %v3445, %v3445
      %v3478 = vpack.c.b16 %v3446, %v3446
      %v3479 = vpack.c.b16 %v3447, %v3447
      %v3480 = vpack.c.b16 %v3448, %v3448
      %v3481 = vpack.c.b16 %v3449, %v3449
      %v3482 = vpack.c.b16 %v3450, %v3450
      %v3483 = vpack.c.b16 %v3451, %v3451
      %v3484 = vpack.c.b16 %v3452, %v3452
      %3517 = vst [vmem:[%s170] sm:$0xf] %v3453
      %3518 = vst [vmem:[%s170 + $0x4] sm:$0xf] %v3454
      %3519 = vst [vmem:[%s170 + $0x8] sm:$0xf] %v3455
      %3520 = vst [vmem:[%s170 + $0xc] sm:$0xf] %v3456
      %3521 = vst [vmem:[%s170 + $0x10] sm:$0xf] %v3457
      %3522 = vst [vmem:[%s170 + $0x14] sm:$0xf] %v3458
      %3523 = vst [vmem:[%s170 + $0x18] sm:$0xf] %v3459
      %3524 = vst [vmem:[%s170 + $0x1c] sm:$0xf] %v3460
      %3525 = vst [vmem:[%s170 + $0x20] sm:$0xf] %v3461
      %3526 = vst [vmem:[%s170 + $0x24] sm:$0xf] %v3462
      %3527 = vst [vmem:[%s170 + $0x28] sm:$0xf] %v3463
      %3528 = vst [vmem:[%s170 + $0x2c] sm:$0xf] %v3464
      %3529 = vst [vmem:[%s170 + $0x30] sm:$0xf] %v3465
      %3530 = vst [vmem:[%s170 + $0x34] sm:$0xf] %v3466
      %3531 = vst [vmem:[%s170 + $0x38] sm:$0xf] %v3467
      %3532 = vst [vmem:[%s170 + $0x3c] sm:$0xf] %v3468
      %3533 = vst [vmem:[%s170 + $0x40] sm:$0xf] %v3469
      %3534 = vst [vmem:[%s170 + $0x44] sm:$0xf] %v3470
      %3535 = vst [vmem:[%s170 + $0x48] sm:$0xf] %v3471
      %3536 = vst [vmem:[%s170 + $0x4c] sm:$0xf] %v3472
      %3537 = vst [vmem:[%s170 + $0x50] sm:$0xf] %v3473
      %3538 = vst [vmem:[%s170 + $0x54] sm:$0xf] %v3474
      %3539 = vst [vmem:[%s170 + $0x58] sm:$0xf] %v3475
      %3540 = vst [vmem:[%s170 + $0x5c] sm:$0xf] %v3476
      %3541 = vst [vmem:[%s170 + $0x60] sm:$0xf] %v3477
      %3542 = vst [vmem:[%s170 + $0x64] sm:$0xf] %v3478
      %3543 = vst [vmem:[%s170 + $0x68] sm:$0xf] %v3479
      %3544 = vst [vmem:[%s170 + $0x6c] sm:$0xf] %v3480
      %3545 = vst [vmem:[%s170 + $0x70] sm:$0xf] %v3481
      %3546 = vst [vmem:[%s170 + $0x74] sm:$0xf] %v3482
      %3547 = vst [vmem:[%s170 + $0x78] sm:$0xf] %v3483
      %3548 = vst [vmem:[%s170 + $0x7c] sm:$0xf] %v3484
      %s3549 = smul.u32 32, %s14
      %p3550 = scmp.lt.s32.totalorder %s3549, 63
      %s3551 = scalar_select %p3550, %s3549, 63
      %s3552 = smul.addr %s3551, 4
      %s3553 = scalar_lea.vmem %s3, %s3552
      // Predicated region
      $region33: #{_lambda_.4} parent=31 // pred_check
        %p3554 = pneg %p100
      $region34: #{_lambda_.4} parent=31 // pred_check_branch
        %3556 = sbr.rel (%p3554) target = $region36
      $region35: #{_lambda_.4} parent=31 // pred_region
        %s3557 = smul.u32 32, %s14
      $region36: #{_lambda_.4} parent=31 // pred_fallthru
        _
    $region32: #{_lambda_.4} parent=5 // pred_fallthru
      _
    %p3558 = scmp.le.s32.totalorder 2, %s9
    // Predicated region
    $region37: #{_lambda_.4} parent=5 // pred_check
      %p3559 = pneg %p3558
    $region38: #{_lambda_.4} parent=5 // pred_check_branch
      %3561 = sbr.rel (%p3559) target = $region40
    $region39: #{_lambda_.4} parent=5 // pred_region
      %s3562 = ssub.s32 %s9, 2
      // Predicated region
      $region41: #{_lambda_.4} parent=39 // pred_check
        %p3563 = pneg %p106
      $region42: #{_lambda_.4} parent=39 // pred_check_branch
        %3565 = sbr.rel (%p3563) target = $region44
      $region43: #{_lambda_.4} parent=39 // pred_region
        %s3566 = smul.u32 32, %s15
        %p3567 = scmp.lt.s32.totalorder %s3566, 63
        %s3568 = scalar_select %p3567, %s3566, 63
        %s3569 = smul.addr %s3568, 4
        %s3570 = scalar_lea.vmem %s3, %s3569
      $region44: #{_lambda_.4} parent=39 // pred_fallthru
        _
    $region40: #{_lambda_.4} parent=5 // pred_fallthru
      _
  $region6: #{_lambda_.4} parent=0 // loop_footer
    %s13 = sadd.s32 1, %s9
  $region7: #{_lambda_.4} parent=0 // loop_footer_branch
    %8 = sbr.rel target = $region3
  $region8: #{_lambda_.4} parent=0 // loop_exit
    _

</llo_original>
